<compile_context>
chip_gen: v7x
topology: tpu7x:2x2x1
jax: 0.10.0
libtpu: 0.0.40
codegen_flags: <defaults>
</compile_context>

<pallas_src>
import jax
import jax.numpy as jnp
from jax import lax
from jax.experimental import pallas as pl
from jax.experimental.pallas import tpu as pltpu

D = 15          # feature dim `d`
HDIM = 200      # MLP hidden dim (logical)
FPAD = 256      # lane padding for all MLP activations / weights (2 x 128 lanes)
INTERN = 20     # intern_dim == LSTM hidden size (logical)
HP = 32         # padded LSTM hidden (per-gate lane stride; 4*HP = 128 lanes)
NLAYERS = 12    # LSTM num_layers
NEMB = 30 * 2   # emb_query_level rows
NMLP = 5        # layers per make_mlp block


def _cdiv(a, b):
    return -(-a // b)


# ----------------------------- fused Pallas kernel ---------------------------

def _fused_kernel(x_ref, el_ref, ew_ref, eb_ref, lw_ref, lb_ref,
                  pw_ref, pb_ref, o_ref):
    """One grid step == one batch tile of BB elements (time-major rows t*BB+b).

    x_ref : (1, T*BB, FPAD) f32   raw input, feature-padded, time-major
    el_ref: (1, BB, HP)     f32   emb_query_level(l) rows for this tile
    ew/eb : (5, FPAD, FPAD) bf16 / (5, 1, FPAD) f32  emb_input MLP (stacked)
    lw    : (12, 2*HP, 4*HP) bf16  [W_ih.T ; W_hh.T] per layer, gate-block padded
    lb    : (12, 1, 4*HP)    f32   b_ih + b_hh, gate-block padded
    pw/pb : proj MLP (stacked), final layer padded to FPAD lanes
    o_ref : (1, S1*BB, FPAD) f32   lane-dense output slab, valid cols [0:D)
    """
    TB = x_ref.shape[1]                 # T * BB
    BB = el_ref.shape[1]
    S1 = TB // BB + 1                   # n + 1
    M = S1 * BB

    def mlp(h, w_ref, b_ref):
        # make_mlp: (Linear + ReLU) x 4 then Linear.  bf16 matmuls, f32 accum.
        for i in range(NMLP):
            h = jnp.dot(h.astype(jnp.bfloat16), w_ref[i],
                        preferred_element_type=jnp.float32) + b_ref[i]
            if i < NMLP - 1:
                h = jnp.maximum(h, 0.0)
        return h

    # ---- emb_input MLP over all (time x batch-tile) rows in one matmul chain.
    ex = mlp(x_ref[0], ew_ref, eb_ref)[:, :HP]            # (T*BB, HP)

    # ---- default-mask combine (m=None, T == n):
    #      mpx[t] = emb_input(x)[t] for t < n,   mpx[n] = emb_query_level(l).
    seq = jnp.concatenate([ex, el_ref[0]], axis=0)        # (S1*BB, HP), f32

    # Lane scale so ONE tanh computes all 4 gates: sigmoid(x) = 0.5*(1+tanh(x/2))
    lanes = lax.broadcasted_iota(jnp.int32, (1, 4 * HP), 1)
    gate_scale = jnp.where((lanes >= 2 * HP) & (lanes < 3 * HP), 1.0, 0.5)

    def layer_body(layer, seq):
        w = lw_ref[layer]                                  # (2*HP, 4*HP) bf16
        w_ih, w_hh = w[0:HP], w[HP:2 * HP]
        bias = lb_ref[layer]                               # (1, 4*HP) f32
        # Hoisted input projection for ALL timesteps (one MXU pass, M = S1*BB).
        g_in = jnp.dot(seq.astype(jnp.bfloat16), w_ih,
                       preferred_element_type=jnp.float32) + bias
        h = jnp.zeros((BB, HP), jnp.float32)
        c = jnp.zeros((BB, HP), jnp.float32)
        hs = []
        for t in range(S1):                 # short recurrence, fully unrolled
            g = g_in[t * BB:(t + 1) * BB] + jnp.dot(
                h.astype(jnp.bfloat16), w_hh,
                preferred_element_type=jnp.float32)        # (BB, 4*HP)
            tg = jnp.tanh(g * gate_scale)   # single EUP pass for i/f/g/o
            i_g = 0.5 * (tg[:, 0 * HP:1 * HP] + 1.0)
            f_g = 0.5 * (tg[:, 1 * HP:2 * HP] + 1.0)
            c_g = tg[:, 2 * HP:3 * HP]
            o_g = 0.5 * (tg[:, 3 * HP:4 * HP] + 1.0)
            c = f_g * c + i_g * c_g
            h = o_g * jnp.tanh(c)
            hs.append(h)
        return jnp.concatenate(hs, axis=0)                 # (S1*BB, HP)

    # 12 stacked LSTM layers; fori_loop bounds vreg live ranges / compile time.
    seq = lax.fori_loop(0, NLAYERS, layer_body, seq)

    # ---- proj MLP; output stays FPAD-wide (lane-dense store, sliced in wrapper)
    o_ref[0] = mlp(jnp.pad(seq, ((0, 0), (0, FPAD - HP))), pw_ref, pb_ref)


# ----------------------------- wrapper ----------------------------------------

def _const_spec(a):
    nd = a.ndim
    return pl.BlockSpec(a.shape, lambda i, nd=nd: (0,) * nd)


def nklstm_forward(x, l, params, n, block_batch=None):
    """Matches NKLSTM.forward with m=None (requires x.shape[1] == n).

    block_batch (BB) = batch elements per grid step.  Default splits the batch
    into 2 "parallel" tiles (keeps both v7x TensorCores busy); on v5e/v6e use a
    larger BB (target BB*n ~ 128-256) so the MXU rows fill.
    """
    emb_w, emb_b, lstm_w, lstm_b, emb_tbl, proj_w, proj_b = params
    B, T, d = x.shape
    assert T == n, "default-mask (m=None) path requires x.shape[1] == n"
    S1 = n + 1

    BB = block_batch if block_batch is not None else max(1, _cdiv(B, 2))
    G = _cdiv(B, BB)
    B_pad = G * BB

    # Embedding gather (data-dependent row select) stays in plain JAX.
    el = emb_tbl[l].astype(jnp.float32)                        # (B, INTERN)
    el = jnp.pad(el, ((0, B_pad - B), (0, HP - INTERN)))
    el = el.reshape(G, BB, HP)

    # x -> feature-padded, time-major, batch-tiled: rows (t*BB + b) per tile.
    xp = jnp.pad(x.astype(jnp.float32),
                 ((0, B_pad - B), (0, 0), (0, FPAD - d)))      # (B_pad, T, FPAD)
    xp = xp.transpose(1, 0, 2).reshape(T, G, BB, FPAD)
    xp = xp.transpose(1, 0, 2, 3).reshape(G, T * BB, FPAD)

    out = pl.pallas_call(
        _fused_kernel,
        out_shape=jax.ShapeDtypeStruct((G, S1 * BB, FPAD), jnp.float32),
        grid_spec=pltpu.PrefetchScalarGridSpec(
            num_scalar_prefetch=0,
            grid=(G,),
            in_specs=[
                pl.BlockSpec((1, T * BB, FPAD), lambda i: (i, 0, 0)),   # x tile
                pl.BlockSpec((1, BB, HP), lambda i: (i, 0, 0)),         # emb_l
                _const_spec(emb_w), _const_spec(emb_b),
                _const_spec(lstm_w), _const_spec(lstm_b),
                _const_spec(proj_w), _const_spec(proj_b),
            ],
            out_specs=pl.BlockSpec((1, S1 * BB, FPAD), lambda i: (i, 0, 0)),
        ),
        compiler_params=pltpu.CompilerParams(
            dimension_semantics=("parallel",)),
    )(xp, el, emb_w, emb_b, lstm_w, lstm_b, proj_w, proj_b)

    # (G, S1*BB, FPAD) time-major -> (B, S1, d)
    out = out.reshape(G, S1, BB, FPAD).transpose(0, 2, 1, 3)
    out = out.reshape(B_pad, S1, FPAD)
    return out[:B, :, :d]


# ----------------------------- deterministic init (zero-padded, stacked) ------

def _uniform(key, shape, lim):
    return jax.random.uniform(key, shape, jnp.float32, -lim, lim)


def init_mlp(key, dims):
    """make_mlp: (Linear+ReLU) x 4 then Linear.  Returns stacked zero-padded
    (L, FPAD, FPAD) bf16 weights (stored as (in, out)) and (L, 1, FPAD) f32 bias."""
    L = len(dims) - 1
    w = jnp.zeros((L, FPAD, FPAD), jnp.float32)
    b = jnp.zeros((L, 1, FPAD), jnp.float32)
    for i, k in enumerate(jax.random.split(key, L)):
        kw, kb = jax.random.split(k)
        lim = 1.0 / float(dims[i]) ** 0.5
        w = w.at[i, :dims[i], :dims[i + 1]].set(
            _uniform(kw, (dims[i], dims[i + 1]), lim))
        b = b.at[i, 0, :dims[i + 1]].set(_uniform(kb, (dims[i + 1],), lim))
    return w.astype(jnp.bfloat16), b


def init_lstm(key, layers):
    """nn.LSTM(intern, intern, num_layers): per layer [W_ih.T ; W_hh.T] stacked
    into (layers, 2*HP, 4*HP) bf16 (gate blocks i,f,g,o each padded to HP lanes)
    and b_ih + b_hh into (layers, 1, 4*HP) f32.  Pad entries are exactly zero so
    pad lanes of h/c stay zero through every layer."""
    lim = 1.0 / float(INTERN) ** 0.5
    w = jnp.zeros((layers, 2 * HP, 4 * HP), jnp.float32)
    b = jnp.zeros((layers, 1, 4 * HP), jnp.float32)
    for i, k in enumerate(jax.random.split(key, layers)):
        k1, k2, k3, k4 = jax.random.split(k, 4)
        wi = _uniform(k1, (INTERN, 4 * INTERN), lim)   # torch weight_ih_l{k}.T
        wh = _uniform(k2, (INTERN, 4 * INTERN), lim)   # torch weight_hh_l{k}.T
        bb = (_uniform(k3, (4 * INTERN,), lim) + _uniform(k4, (4 * INTERN,), lim))
        for g in range(4):
            w = w.at[i, :INTERN, g * HP:g * HP + INTERN].set(
                wi[:, g * INTERN:(g + 1) * INTERN])
            w = w.at[i, HP:HP + INTERN, g * HP:g * HP + INTERN].set(
                wh[:, g * INTERN:(g + 1) * INTERN])
            b = b.at[i, 0, g * HP:g * HP + INTERN].set(
                bb[g * INTERN:(g + 1) * INTERN])
    return w.astype(jnp.bfloat16), b


# ----------------------------- pure-JAX reference -----------------------------

def _nklstm_reference(x, l, params, n):
    """Straightforward f32 reference of the same forward (for validation)."""
    emb_w, emb_b, lstm_w, lstm_b, emb_tbl, proj_w, proj_b = params
    ew, pw, lw = (a.astype(jnp.float32) for a in (emb_w, proj_w, lstm_w))
    dims_e = (D, HDIM, HDIM, HDIM, HDIM, INTERN)
    dims_p = (INTERN, HDIM, HDIM, HDIM, HDIM, D)

    def mlp(h, w, b, dims):
        for i in range(len(dims) - 1):
            h = h @ w[i, :dims[i], :dims[i + 1]] + b[i, 0, :dims[i + 1]]
            if i < len(dims) - 2:
                h = jnp.maximum(h, 0.0)
        return h

    B, T, d = x.shape
    ex = mlp(x.reshape(B * T, d), ew, emb_b, dims_e).reshape(B, T, INTERN)
    seq = jnp.concatenate([ex, emb_tbl[l][:, None, :]], axis=1)   # (B, n+1, I)

    for layer in range(NLAYERS):
        wi = [lw[layer, :INTERN, g * HP:g * HP + INTERN] for g in range(4)]
        wh = [lw[layer, HP:HP + INTERN, g * HP:g * HP + INTERN] for g in range(4)]
        bb = [lstm_b[layer, 0, g * HP:g * HP + INTERN] for g in range(4)]
        h = jnp.zeros((B, INTERN), jnp.float32)
        c = jnp.zeros((B, INTERN), jnp.float32)
        outs = []
        for t in range(n + 1):
            xt = seq[:, t, :]
            i_g = jax.nn.sigmoid(xt @ wi[0] + h @ wh[0] + bb[0])
            f_g = jax.nn.sigmoid(xt @ wi[1] + h @ wh[1] + bb[1])
            g_g = jnp.tanh(xt @ wi[2] + h @ wh[2] + bb[2])
            o_g = jax.nn.sigmoid(xt @ wi[3] + h @ wh[3] + bb[3])
            c = f_g * c + i_g * g_g
            h = o_g * jnp.tanh(c)
            outs.append(h)
        seq = jnp.stack(outs, axis=1)
    y = mlp(seq.reshape(B * (n + 1), INTERN), pw, proj_b, dims_p)
    return y.reshape(B, n + 1, D)


# ----------------------------- main --------------------------------------------

if __name__ == "__main__":
    key = jax.random.PRNGKey(0)
    B = 8
    N_SMALL = 8   # small `n`; default-mask (m=None) path requires x.shape[1] == n

    k1, k2, k3, k4, k5 = jax.random.split(key, 5)
    x = jax.random.normal(k1, (B, N_SMALL, D), jnp.float32)
    l = jax.random.randint(k2, (B,), 0, NEMB)

    emb_w, emb_b = init_mlp(k3, (D, HDIM, HDIM, HDIM, HDIM, INTERN))
    proj_w, proj_b = init_mlp(k4, (INTERN, HDIM, HDIM, HDIM, HDIM, D))
    lstm_w, lstm_b = init_lstm(k5, NLAYERS)
    emb_tbl = jnp.full((NEMB, INTERN), -1.0, jnp.float32)   # Embedding.fill_(-1.0)

    params = (emb_w, emb_b, lstm_w, lstm_b, emb_tbl, proj_w, proj_b)

    out = nklstm_forward(x, l, params, N_SMALL)   # default BB -> grid=(2,)
    jax.block_until_ready(out)
    assert out.shape == (B, N_SMALL + 1, D)

    ref = _nklstm_reference(x, l, params, N_SMALL)
    err = float(jnp.max(jnp.abs(out - ref)))
    assert err < 1e-1, f"kernel/reference mismatch: max abs err {err}"
    print("KERNEL_OK")
</pallas_src>

<mosaic_0001>
module attributes {stable_mosaic.version = 11 : i64} {
  func.func @_fused_kernel(%arg0: i32, %arg1: memref<1x32x256xf32, #tpu.memory_space<vmem>>, %arg2: memref<1x4x32xf32, #tpu.memory_space<vmem>>, %arg3: memref<5x256x256xbf16, #tpu.memory_space<vmem>>, %arg4: memref<5x1x256xf32, #tpu.memory_space<vmem>>, %arg5: memref<12x64x128xbf16, #tpu.memory_space<vmem>>, %arg6: memref<12x1x128xf32, #tpu.memory_space<vmem>>, %arg7: memref<5x256x256xbf16, #tpu.memory_space<vmem>>, %arg8: memref<5x1x256xf32, #tpu.memory_space<vmem>>, %arg9: memref<1x36x256xf32, #tpu.memory_space<vmem>>) attributes {dimension_semantics = [#tpu.dimension_semantics<parallel>], iteration_bounds = array<i64: 2>, scalar_prefetch = 0 : i64, scratch_operands = 0 : i64, tpu.core_type = #tpu.core_type<tc>, window_params = [{transform_indices = @transform_0, window_bounds = array<i64: 1, 32, 256>}, {transform_indices = @transform_1, window_bounds = array<i64: 1, 4, 32>}, {pipeline_mode = #tpu.pipeline_mode<synchronous>, transform_indices = @transform_2, window_bounds = array<i64: 5, 256, 256>}, {pipeline_mode = #tpu.pipeline_mode<synchronous>, transform_indices = @transform_3, window_bounds = array<i64: 5, 1, 256>}, {pipeline_mode = #tpu.pipeline_mode<synchronous>, transform_indices = @transform_4, window_bounds = array<i64: 12, 64, 128>}, {pipeline_mode = #tpu.pipeline_mode<synchronous>, transform_indices = @transform_5, window_bounds = array<i64: 12, 1, 128>}, {pipeline_mode = #tpu.pipeline_mode<synchronous>, transform_indices = @transform_6, window_bounds = array<i64: 5, 256, 256>}, {pipeline_mode = #tpu.pipeline_mode<synchronous>, transform_indices = @transform_7, window_bounds = array<i64: 5, 1, 256>}, {transform_indices = @transform_8, window_bounds = array<i64: 1, 36, 256>}]} {
    %c0 = arith.constant 0 : index
    %c0_0 = arith.constant 0 : index
    %c0_1 = arith.constant 0 : index
    %0 = vector.load %arg1[%c0, %c0_0, %c0_1] : memref<1x32x256xf32, #tpu.memory_space<vmem>>, vector<1x32x256xf32>
    %1 = vector.shape_cast %0 : vector<1x32x256xf32> to vector<32x256xf32>
    %2 = arith.truncf %1 : vector<32x256xf32> to vector<32x256xbf16>
    %c0_2 = arith.constant 0 : index
    %c0_3 = arith.constant 0 : index
    %c0_4 = arith.constant 0 : index
    %3 = vector.load %arg3[%c0_2, %c0_3, %c0_4] : memref<5x256x256xbf16, #tpu.memory_space<vmem>>, vector<1x256x256xbf16>
    %4 = vector.shape_cast %3 : vector<1x256x256xbf16> to vector<256x256xbf16>
    %cst = arith.constant dense<0.000000e+00> : vector<32x256xf32>
    %5 = tpu.matmul %2, %4, %cst {dimension_numbers = #tpu.dot_dimension_numbers<[1], [0], [0], [1], [0, 0, 1, 1], [], []>} : vector<32x256xbf16>, vector<256x256xbf16>, vector<32x256xf32> -> vector<32x256xf32>
    %c0_5 = arith.constant 0 : index
    %c0_6 = arith.constant 0 : index
    %c0_7 = arith.constant 0 : index
    %6 = vector.load %arg4[%c0_5, %c0_6, %c0_7] : memref<5x1x256xf32, #tpu.memory_space<vmem>>, vector<1x1x256xf32>
    %7 = vector.shape_cast %6 : vector<1x1x256xf32> to vector<1x256xf32>
    %8 = vector.broadcast %7 : vector<1x256xf32> to vector<32x256xf32>
    %9 = arith.addf %5, %8 : vector<32x256xf32>
    %cst_8 = arith.constant 0.000000e+00 : f32
    %10 = vector.broadcast %cst_8 : f32 to vector<32x256xf32>
    %11 = arith.maximumf %9, %10 : vector<32x256xf32>
    %12 = arith.truncf %11 : vector<32x256xf32> to vector<32x256xbf16>
    %c1 = arith.constant 1 : index
    %c0_9 = arith.constant 0 : index
    %c0_10 = arith.constant 0 : index
    %13 = vector.load %arg3[%c1, %c0_9, %c0_10] : memref<5x256x256xbf16, #tpu.memory_space<vmem>>, vector<1x256x256xbf16>
    %14 = vector.shape_cast %13 : vector<1x256x256xbf16> to vector<256x256xbf16>
    %cst_11 = arith.constant dense<0.000000e+00> : vector<32x256xf32>
    %15 = tpu.matmul %12, %14, %cst_11 {dimension_numbers = #tpu.dot_dimension_numbers<[1], [0], [0], [1], [0, 0, 1, 1], [], []>} : vector<32x256xbf16>, vector<256x256xbf16>, vector<32x256xf32> -> vector<32x256xf32>
    %c1_12 = arith.constant 1 : index
    %c0_13 = arith.constant 0 : index
    %c0_14 = arith.constant 0 : index
    %16 = vector.load %arg4[%c1_12, %c0_13, %c0_14] : memref<5x1x256xf32, #tpu.memory_space<vmem>>, vector<1x1x256xf32>
    %17 = vector.shape_cast %16 : vector<1x1x256xf32> to vector<1x256xf32>
    %18 = vector.broadcast %17 : vector<1x256xf32> to vector<32x256xf32>
    %19 = arith.addf %15, %18 : vector<32x256xf32>
    %cst_15 = arith.constant 0.000000e+00 : f32
    %20 = vector.broadcast %cst_15 : f32 to vector<32x256xf32>
    %21 = arith.maximumf %19, %20 : vector<32x256xf32>
    %22 = arith.truncf %21 : vector<32x256xf32> to vector<32x256xbf16>
    %c2 = arith.constant 2 : index
    %c0_16 = arith.constant 0 : index
    %c0_17 = arith.constant 0 : index
    %23 = vector.load %arg3[%c2, %c0_16, %c0_17] : memref<5x256x256xbf16, #tpu.memory_space<vmem>>, vector<1x256x256xbf16>
    %24 = vector.shape_cast %23 : vector<1x256x256xbf16> to vector<256x256xbf16>
    %cst_18 = arith.constant dense<0.000000e+00> : vector<32x256xf32>
    %25 = tpu.matmul %22, %24, %cst_18 {dimension_numbers = #tpu.dot_dimension_numbers<[1], [0], [0], [1], [0, 0, 1, 1], [], []>} : vector<32x256xbf16>, vector<256x256xbf16>, vector<32x256xf32> -> vector<32x256xf32>
    %c2_19 = arith.constant 2 : index
    %c0_20 = arith.constant 0 : index
    %c0_21 = arith.constant 0 : index
    %26 = vector.load %arg4[%c2_19, %c0_20, %c0_21] : memref<5x1x256xf32, #tpu.memory_space<vmem>>, vector<1x1x256xf32>
    %27 = vector.shape_cast %26 : vector<1x1x256xf32> to vector<1x256xf32>
    %28 = vector.broadcast %27 : vector<1x256xf32> to vector<32x256xf32>
    %29 = arith.addf %25, %28 : vector<32x256xf32>
    %cst_22 = arith.constant 0.000000e+00 : f32
    %30 = vector.broadcast %cst_22 : f32 to vector<32x256xf32>
    %31 = arith.maximumf %29, %30 : vector<32x256xf32>
    %32 = arith.truncf %31 : vector<32x256xf32> to vector<32x256xbf16>
    %c3 = arith.constant 3 : index
    %c0_23 = arith.constant 0 : index
    %c0_24 = arith.constant 0 : index
    %33 = vector.load %arg3[%c3, %c0_23, %c0_24] : memref<5x256x256xbf16, #tpu.memory_space<vmem>>, vector<1x256x256xbf16>
    %34 = vector.shape_cast %33 : vector<1x256x256xbf16> to vector<256x256xbf16>
    %cst_25 = arith.constant dense<0.000000e+00> : vector<32x256xf32>
    %35 = tpu.matmul %32, %34, %cst_25 {dimension_numbers = #tpu.dot_dimension_numbers<[1], [0], [0], [1], [0, 0, 1, 1], [], []>} : vector<32x256xbf16>, vector<256x256xbf16>, vector<32x256xf32> -> vector<32x256xf32>
    %c3_26 = arith.constant 3 : index
    %c0_27 = arith.constant 0 : index
    %c0_28 = arith.constant 0 : index
    %36 = vector.load %arg4[%c3_26, %c0_27, %c0_28] : memref<5x1x256xf32, #tpu.memory_space<vmem>>, vector<1x1x256xf32>
    %37 = vector.shape_cast %36 : vector<1x1x256xf32> to vector<1x256xf32>
    %38 = vector.broadcast %37 : vector<1x256xf32> to vector<32x256xf32>
    %39 = arith.addf %35, %38 : vector<32x256xf32>
    %cst_29 = arith.constant 0.000000e+00 : f32
    %40 = vector.broadcast %cst_29 : f32 to vector<32x256xf32>
    %41 = arith.maximumf %39, %40 : vector<32x256xf32>
    %42 = arith.truncf %41 : vector<32x256xf32> to vector<32x256xbf16>
    %c4 = arith.constant 4 : index
    %c0_30 = arith.constant 0 : index
    %c0_31 = arith.constant 0 : index
    %43 = vector.load %arg3[%c4, %c0_30, %c0_31] : memref<5x256x256xbf16, #tpu.memory_space<vmem>>, vector<1x256x256xbf16>
    %44 = vector.shape_cast %43 : vector<1x256x256xbf16> to vector<256x256xbf16>
    %cst_32 = arith.constant dense<0.000000e+00> : vector<32x256xf32>
    %45 = tpu.matmul %42, %44, %cst_32 {dimension_numbers = #tpu.dot_dimension_numbers<[1], [0], [0], [1], [0, 0, 1, 1], [], []>} : vector<32x256xbf16>, vector<256x256xbf16>, vector<32x256xf32> -> vector<32x256xf32>
    %c4_33 = arith.constant 4 : index
    %c0_34 = arith.constant 0 : index
    %c0_35 = arith.constant 0 : index
    %46 = vector.load %arg4[%c4_33, %c0_34, %c0_35] : memref<5x1x256xf32, #tpu.memory_space<vmem>>, vector<1x1x256xf32>
    %47 = vector.shape_cast %46 : vector<1x1x256xf32> to vector<1x256xf32>
    %48 = vector.broadcast %47 : vector<1x256xf32> to vector<32x256xf32>
    %49 = arith.addf %45, %48 : vector<32x256xf32>
    %50 = vector.extract_strided_slice %49 {offsets = [0, 0], sizes = [32, 32], strides = [1, 1]} : vector<32x256xf32> to vector<32x32xf32>
    %c0_36 = arith.constant 0 : index
    %c0_37 = arith.constant 0 : index
    %c0_38 = arith.constant 0 : index
    %51 = vector.load %arg2[%c0_36, %c0_37, %c0_38] : memref<1x4x32xf32, #tpu.memory_space<vmem>>, vector<1x4x32xf32>
    %52 = vector.shape_cast %51 : vector<1x4x32xf32> to vector<4x32xf32>
    %53 = tpu.concatenate %50, %52 in 0 : vector<32x32xf32>, vector<4x32xf32> -> vector<36x32xf32>
    %54 = tpu.iota {dimensions = array<i32: 1>} : vector<1x128xi32>
    %c64_i32 = arith.constant 64 : i32
    %55 = vector.broadcast %c64_i32 : i32 to vector<1x128xi32>
    %56 = arith.cmpi sge, %54, %55 : vector<1x128xi32>
    %c96_i32 = arith.constant 96 : i32
    %57 = vector.broadcast %c96_i32 : i32 to vector<1x128xi32>
    %58 = arith.cmpi slt, %54, %57 : vector<1x128xi32>
    %59 = arith.andi %56, %58 : vector<1x128xi1>
    %cst_39 = arith.constant 1.000000e+00 : f32
    %cst_40 = arith.constant 5.000000e-01 : f32
    %60 = vector.broadcast %cst_39 : f32 to vector<1x128xf32>
    %61 = vector.broadcast %cst_40 : f32 to vector<1x128xf32>
    %62 = arith.select %59, %60, %61 : vector<1x128xi1>, vector<1x128xf32>
    %c0_i32 = arith.constant 0 : i32
    %c12_i32 = arith.constant 12 : i32
    %63 = arith.addi %c0_i32, %c12_i32 : i32
    %c1_i32 = arith.constant 1 : i32
    %64 = scf.for %arg10 = %c0_i32 to %63 step %c1_i32 iter_args(%arg11 = %53) -> (vector<36x32xf32>)  : i32 {
      %119 = arith.index_cast %arg10 : i32 to index
      %c0_85 = arith.constant 0 : index
      %c0_86 = arith.constant 0 : index
      %120 = vector.load %arg5[%119, %c0_85, %c0_86] : memref<12x64x128xbf16, #tpu.memory_space<vmem>>, vector<1x64x128xbf16>
      %121 = vector.shape_cast %120 : vector<1x64x128xbf16> to vector<64x128xbf16>
      %122 = vector.extract_strided_slice %121 {offsets = [0, 0], sizes = [32, 128], strides = [1, 1]} : vector<64x128xbf16> to vector<32x128xbf16>
      %123 = vector.extract_strided_slice %121 {offsets = [32, 0], sizes = [32, 128], strides = [1, 1]} : vector<64x128xbf16> to vector<32x128xbf16>
      %124 = arith.index_cast %arg10 : i32 to index
      %c0_87 = arith.constant 0 : index
      %c0_88 = arith.constant 0 : index
      %125 = vector.load %arg6[%124, %c0_87, %c0_88] : memref<12x1x128xf32, #tpu.memory_space<vmem>>, vector<1x1x128xf32>
      %126 = vector.shape_cast %125 : vector<1x1x128xf32> to vector<1x128xf32>
      %127 = arith.truncf %arg11 : vector<36x32xf32> to vector<36x32xbf16>
      %cst_89 = arith.constant dense<0.000000e+00> : vector<36x128xf32>
      %128 = tpu.matmul %127, %122, %cst_89 {dimension_numbers = #tpu.dot_dimension_numbers<[1], [0], [0], [1], [0, 0, 1, 1], [], []>} : vector<36x32xbf16>, vector<32x128xbf16>, vector<36x128xf32> -> vector<36x128xf32>
      %129 = vector.broadcast %126 : vector<1x128xf32> to vector<36x128xf32>
      %130 = arith.addf %128, %129 : vector<36x128xf32>
      %cst_90 = arith.constant 0.000000e+00 : f32
      %131 = vector.broadcast %cst_90 : f32 to vector<4x32xf32>
      %cst_91 = arith.constant 0.000000e+00 : f32
      %132 = vector.broadcast %cst_91 : f32 to vector<4x32xf32>
      %133 = vector.extract_strided_slice %130 {offsets = [0, 0], sizes = [4, 128], strides = [1, 1]} : vector<36x128xf32> to vector<4x128xf32>
      %134 = arith.truncf %131 : vector<4x32xf32> to vector<4x32xbf16>
      %cst_92 = arith.constant dense<0.000000e+00> : vector<4x128xf32>
      %135 = tpu.matmul %134, %123, %cst_92 {dimension_numbers = #tpu.dot_dimension_numbers<[1], [0], [0], [1], [0, 0, 1, 1], [], []>} : vector<4x32xbf16>, vector<32x128xbf16>, vector<4x128xf32> -> vector<4x128xf32>
      %136 = arith.addf %133, %135 : vector<4x128xf32>
      %137 = vector.broadcast %62 : vector<1x128xf32> to vector<4x128xf32>
      %138 = arith.mulf %136, %137 : vector<4x128xf32>
      %139 = math.tanh %138 : vector<4x128xf32>
      %140 = vector.extract_strided_slice %139 {offsets = [0, 0], sizes = [4, 32], strides = [1, 1]} : vector<4x128xf32> to vector<4x32xf32>
      %cst_93 = arith.constant 1.000000e+00 : f32
      %141 = vector.broadcast %cst_93 : f32 to vector<4x32xf32>
      %142 = arith.addf %140, %141 : vector<4x32xf32>
      %cst_94 = arith.constant 5.000000e-01 : f32
      %143 = vector.broadcast %cst_94 : f32 to vector<4x32xf32>
      %144 = arith.mulf %143, %142 : vector<4x32xf32>
      %145 = vector.extract_strided_slice %139 {offsets = [0, 32], sizes = [4, 32], strides = [1, 1]} : vector<4x128xf32> to vector<4x32xf32>
      %cst_95 = arith.constant 1.000000e+00 : f32
      %146 = vector.broadcast %cst_95 : f32 to vector<4x32xf32>
      %147 = arith.addf %145, %146 : vector<4x32xf32>
      %cst_96 = arith.constant 5.000000e-01 : f32
      %148 = vector.broadcast %cst_96 : f32 to vector<4x32xf32>
      %149 = arith.mulf %148, %147 : vector<4x32xf32>
      %150 = vector.extract_strided_slice %139 {offsets = [0, 64], sizes = [4, 32], strides = [1, 1]} : vector<4x128xf32> to vector<4x32xf32>
      %151 = vector.extract_strided_slice %139 {offsets = [0, 96], sizes = [4, 32], strides = [1, 1]} : vector<4x128xf32> to vector<4x32xf32>
      %cst_97 = arith.constant 1.000000e+00 : f32
      %152 = vector.broadcast %cst_97 : f32 to vector<4x32xf32>
      %153 = arith.addf %151, %152 : vector<4x32xf32>
      %cst_98 = arith.constant 5.000000e-01 : f32
      %154 = vector.broadcast %cst_98 : f32 to vector<4x32xf32>
      %155 = arith.mulf %154, %153 : vector<4x32xf32>
      %156 = arith.mulf %149, %132 : vector<4x32xf32>
      %157 = arith.mulf %144, %150 : vector<4x32xf32>
      %158 = arith.addf %156, %157 : vector<4x32xf32>
      %159 = math.tanh %158 : vector<4x32xf32>
      %160 = arith.mulf %155, %159 : vector<4x32xf32>
      %161 = vector.extract_strided_slice %130 {offsets = [4, 0], sizes = [4, 128], strides = [1, 1]} : vector<36x128xf32> to vector<4x128xf32>
      %162 = arith.truncf %160 : vector<4x32xf32> to vector<4x32xbf16>
      %cst_99 = arith.constant dense<0.000000e+00> : vector<4x128xf32>
      %163 = tpu.matmul %162, %123, %cst_99 {dimension_numbers = #tpu.dot_dimension_numbers<[1], [0], [0], [1], [0, 0, 1, 1], [], []>} : vector<4x32xbf16>, vector<32x128xbf16>, vector<4x128xf32> -> vector<4x128xf32>
      %164 = arith.addf %161, %163 : vector<4x128xf32>
      %165 = vector.broadcast %62 : vector<1x128xf32> to vector<4x128xf32>
      %166 = arith.mulf %164, %165 : vector<4x128xf32>
      %167 = math.tanh %166 : vector<4x128xf32>
      %168 = vector.extract_strided_slice %167 {offsets = [0, 0], sizes = [4, 32], strides = [1, 1]} : vector<4x128xf32> to vector<4x32xf32>
      %cst_100 = arith.constant 1.000000e+00 : f32
      %169 = vector.broadcast %cst_100 : f32 to vector<4x32xf32>
      %170 = arith.addf %168, %169 : vector<4x32xf32>
      %cst_101 = arith.constant 5.000000e-01 : f32
      %171 = vector.broadcast %cst_101 : f32 to vector<4x32xf32>
      %172 = arith.mulf %171, %170 : vector<4x32xf32>
      %173 = vector.extract_strided_slice %167 {offsets = [0, 32], sizes = [4, 32], strides = [1, 1]} : vector<4x128xf32> to vector<4x32xf32>
      %cst_102 = arith.constant 1.000000e+00 : f32
      %174 = vector.broadcast %cst_102 : f32 to vector<4x32xf32>
      %175 = arith.addf %173, %174 : vector<4x32xf32>
      %cst_103 = arith.constant 5.000000e-01 : f32
      %176 = vector.broadcast %cst_103 : f32 to vector<4x32xf32>
      %177 = arith.mulf %176, %175 : vector<4x32xf32>
      %178 = vector.extract_strided_slice %167 {offsets = [0, 64], sizes = [4, 32], strides = [1, 1]} : vector<4x128xf32> to vector<4x32xf32>
      %179 = vector.extract_strided_slice %167 {offsets = [0, 96], sizes = [4, 32], strides = [1, 1]} : vector<4x128xf32> to vector<4x32xf32>
      %cst_104 = arith.constant 1.000000e+00 : f32
      %180 = vector.broadcast %cst_104 : f32 to vector<4x32xf32>
      %181 = arith.addf %179, %180 : vector<4x32xf32>
      %cst_105 = arith.constant 5.000000e-01 : f32
      %182 = vector.broadcast %cst_105 : f32 to vector<4x32xf32>
      %183 = arith.mulf %182, %181 : vector<4x32xf32>
      %184 = arith.mulf %177, %158 : vector<4x32xf32>
      %185 = arith.mulf %172, %178 : vector<4x32xf32>
      %186 = arith.addf %184, %185 : vector<4x32xf32>
      %187 = math.tanh %186 : vector<4x32xf32>
      %188 = arith.mulf %183, %187 : vector<4x32xf32>
      %189 = vector.extract_strided_slice %130 {offsets = [8, 0], sizes = [4, 128], strides = [1, 1]} : vector<36x128xf32> to vector<4x128xf32>
      %190 = arith.truncf %188 : vector<4x32xf32> to vector<4x32xbf16>
      %cst_106 = arith.constant dense<0.000000e+00> : vector<4x128xf32>
      %191 = tpu.matmul %190, %123, %cst_106 {dimension_numbers = #tpu.dot_dimension_numbers<[1], [0], [0], [1], [0, 0, 1, 1], [], []>} : vector<4x32xbf16>, vector<32x128xbf16>, vector<4x128xf32> -> vector<4x128xf32>
      %192 = arith.addf %189, %191 : vector<4x128xf32>
      %193 = vector.broadcast %62 : vector<1x128xf32> to vector<4x128xf32>
      %194 = arith.mulf %192, %193 : vector<4x128xf32>
      %195 = math.tanh %194 : vector<4x128xf32>
      %196 = vector.extract_strided_slice %195 {offsets = [0, 0], sizes = [4, 32], strides = [1, 1]} : vector<4x128xf32> to vector<4x32xf32>
      %cst_107 = arith.constant 1.000000e+00 : f32
      %197 = vector.broadcast %cst_107 : f32 to vector<4x32xf32>
      %198 = arith.addf %196, %197 : vector<4x32xf32>
      %cst_108 = arith.constant 5.000000e-01 : f32
      %199 = vector.broadcast %cst_108 : f32 to vector<4x32xf32>
      %200 = arith.mulf %199, %198 : vector<4x32xf32>
      %201 = vector.extract_strided_slice %195 {offsets = [0, 32], sizes = [4, 32], strides = [1, 1]} : vector<4x128xf32> to vector<4x32xf32>
      %cst_109 = arith.constant 1.000000e+00 : f32
      %202 = vector.broadcast %cst_109 : f32 to vector<4x32xf32>
      %203 = arith.addf %201, %202 : vector<4x32xf32>
      %cst_110 = arith.constant 5.000000e-01 : f32
      %204 = vector.broadcast %cst_110 : f32 to vector<4x32xf32>
      %205 = arith.mulf %204, %203 : vector<4x32xf32>
      %206 = vector.extract_strided_slice %195 {offsets = [0, 64], sizes = [4, 32], strides = [1, 1]} : vector<4x128xf32> to vector<4x32xf32>
      %207 = vector.extract_strided_slice %195 {offsets = [0, 96], sizes = [4, 32], strides = [1, 1]} : vector<4x128xf32> to vector<4x32xf32>
      %cst_111 = arith.constant 1.000000e+00 : f32
      %208 = vector.broadcast %cst_111 : f32 to vector<4x32xf32>
      %209 = arith.addf %207, %208 : vector<4x32xf32>
      %cst_112 = arith.constant 5.000000e-01 : f32
      %210 = vector.broadcast %cst_112 : f32 to vector<4x32xf32>
      %211 = arith.mulf %210, %209 : vector<4x32xf32>
      %212 = arith.mulf %205, %186 : vector<4x32xf32>
      %213 = arith.mulf %200, %206 : vector<4x32xf32>
      %214 = arith.addf %212, %213 : vector<4x32xf32>
      %215 = math.tanh %214 : vector<4x32xf32>
      %216 = arith.mulf %211, %215 : vector<4x32xf32>
      %217 = vector.extract_strided_slice %130 {offsets = [12, 0], sizes = [4, 128], strides = [1, 1]} : vector<36x128xf32> to vector<4x128xf32>
      %218 = arith.truncf %216 : vector<4x32xf32> to vector<4x32xbf16>
      %cst_113 = arith.constant dense<0.000000e+00> : vector<4x128xf32>
      %219 = tpu.matmul %218, %123, %cst_113 {dimension_numbers = #tpu.dot_dimension_numbers<[1], [0], [0], [1], [0, 0, 1, 1], [], []>} : vector<4x32xbf16>, vector<32x128xbf16>, vector<4x128xf32> -> vector<4x128xf32>
      %220 = arith.addf %217, %219 : vector<4x128xf32>
      %221 = vector.broadcast %62 : vector<1x128xf32> to vector<4x128xf32>
      %222 = arith.mulf %220, %221 : vector<4x128xf32>
      %223 = math.tanh %222 : vector<4x128xf32>
      %224 = vector.extract_strided_slice %223 {offsets = [0, 0], sizes = [4, 32], strides = [1, 1]} : vector<4x128xf32> to vector<4x32xf32>
      %cst_114 = arith.constant 1.000000e+00 : f32
      %225 = vector.broadcast %cst_114 : f32 to vector<4x32xf32>
      %226 = arith.addf %224, %225 : vector<4x32xf32>
      %cst_115 = arith.constant 5.000000e-01 : f32
      %227 = vector.broadcast %cst_115 : f32 to vector<4x32xf32>
      %228 = arith.mulf %227, %226 : vector<4x32xf32>
      %229 = vector.extract_strided_slice %223 {offsets = [0, 32], sizes = [4, 32], strides = [1, 1]} : vector<4x128xf32> to vector<4x32xf32>
      %cst_116 = arith.constant 1.000000e+00 : f32
      %230 = vector.broadcast %cst_116 : f32 to vector<4x32xf32>
      %231 = arith.addf %229, %230 : vector<4x32xf32>
      %cst_117 = arith.constant 5.000000e-01 : f32
      %232 = vector.broadcast %cst_117 : f32 to vector<4x32xf32>
      %233 = arith.mulf %232, %231 : vector<4x32xf32>
      %234 = vector.extract_strided_slice %223 {offsets = [0, 64], sizes = [4, 32], strides = [1, 1]} : vector<4x128xf32> to vector<4x32xf32>
      %235 = vector.extract_strided_slice %223 {offsets = [0, 96], sizes = [4, 32], strides = [1, 1]} : vector<4x128xf32> to vector<4x32xf32>
      %cst_118 = arith.constant 1.000000e+00 : f32
      %236 = vector.broadcast %cst_118 : f32 to vector<4x32xf32>
      %237 = arith.addf %235, %236 : vector<4x32xf32>
      %cst_119 = arith.constant 5.000000e-01 : f32
      %238 = vector.broadcast %cst_119 : f32 to vector<4x32xf32>
      %239 = arith.mulf %238, %237 : vector<4x32xf32>
      %240 = arith.mulf %233, %214 : vector<4x32xf32>
      %241 = arith.mulf %228, %234 : vector<4x32xf32>
      %242 = arith.addf %240, %241 : vector<4x32xf32>
      %243 = math.tanh %242 : vector<4x32xf32>
      %244 = arith.mulf %239, %243 : vector<4x32xf32>
      %245 = vector.extract_strided_slice %130 {offsets = [16, 0], sizes = [4, 128], strides = [1, 1]} : vector<36x128xf32> to vector<4x128xf32>
      %246 = arith.truncf %244 : vector<4x32xf32> to vector<4x32xbf16>
      %cst_120 = arith.constant dense<0.000000e+00> : vector<4x128xf32>
      %247 = tpu.matmul %246, %123, %cst_120 {dimension_numbers = #tpu.dot_dimension_numbers<[1], [0], [0], [1], [0, 0, 1, 1], [], []>} : vector<4x32xbf16>, vector<32x128xbf16>, vector<4x128xf32> -> vector<4x128xf32>
      %248 = arith.addf %245, %247 : vector<4x128xf32>
      %249 = vector.broadcast %62 : vector<1x128xf32> to vector<4x128xf32>
      %250 = arith.mulf %248, %249 : vector<4x128xf32>
      %251 = math.tanh %250 : vector<4x128xf32>
      %252 = vector.extract_strided_slice %251 {offsets = [0, 0], sizes = [4, 32], strides = [1, 1]} : vector<4x128xf32> to vector<4x32xf32>
      %cst_121 = arith.constant 1.000000e+00 : f32
      %253 = vector.broadcast %cst_121 : f32 to vector<4x32xf32>
      %254 = arith.addf %252, %253 : vector<4x32xf32>
      %cst_122 = arith.constant 5.000000e-01 : f32
      %255 = vector.broadcast %cst_122 : f32 to vector<4x32xf32>
      %256 = arith.mulf %255, %254 : vector<4x32xf32>
      %257 = vector.extract_strided_slice %251 {offsets = [0, 32], sizes = [4, 32], strides = [1, 1]} : vector<4x128xf32> to vector<4x32xf32>
      %cst_123 = arith.constant 1.000000e+00 : f32
      %258 = vector.broadcast %cst_123 : f32 to vector<4x32xf32>
      %259 = arith.addf %257, %258 : vector<4x32xf32>
      %cst_124 = arith.constant 5.000000e-01 : f32
      %260 = vector.broadcast %cst_124 : f32 to vector<4x32xf32>
      %261 = arith.mulf %260, %259 : vector<4x32xf32>
      %262 = vector.extract_strided_slice %251 {offsets = [0, 64], sizes = [4, 32], strides = [1, 1]} : vector<4x128xf32> to vector<4x32xf32>
      %263 = vector.extract_strided_slice %251 {offsets = [0, 96], sizes = [4, 32], strides = [1, 1]} : vector<4x128xf32> to vector<4x32xf32>
      %cst_125 = arith.constant 1.000000e+00 : f32
      %264 = vector.broadcast %cst_125 : f32 to vector<4x32xf32>
      %265 = arith.addf %263, %264 : vector<4x32xf32>
      %cst_126 = arith.constant 5.000000e-01 : f32
      %266 = vector.broadcast %cst_126 : f32 to vector<4x32xf32>
      %267 = arith.mulf %266, %265 : vector<4x32xf32>
      %268 = arith.mulf %261, %242 : vector<4x32xf32>
      %269 = arith.mulf %256, %262 : vector<4x32xf32>
      %270 = arith.addf %268, %269 : vector<4x32xf32>
      %271 = math.tanh %270 : vector<4x32xf32>
      %272 = arith.mulf %267, %271 : vector<4x32xf32>
      %273 = vector.extract_strided_slice %130 {offsets = [20, 0], sizes = [4, 128], strides = [1, 1]} : vector<36x128xf32> to vector<4x128xf32>
      %274 = arith.truncf %272 : vector<4x32xf32> to vector<4x32xbf16>
      %cst_127 = arith.constant dense<0.000000e+00> : vector<4x128xf32>
      %275 = tpu.matmul %274, %123, %cst_127 {dimension_numbers = #tpu.dot_dimension_numbers<[1], [0], [0], [1], [0, 0, 1, 1], [], []>} : vector<4x32xbf16>, vector<32x128xbf16>, vector<4x128xf32> -> vector<4x128xf32>
      %276 = arith.addf %273, %275 : vector<4x128xf32>
      %277 = vector.broadcast %62 : vector<1x128xf32> to vector<4x128xf32>
      %278 = arith.mulf %276, %277 : vector<4x128xf32>
      %279 = math.tanh %278 : vector<4x128xf32>
      %280 = vector.extract_strided_slice %279 {offsets = [0, 0], sizes = [4, 32], strides = [1, 1]} : vector<4x128xf32> to vector<4x32xf32>
      %cst_128 = arith.constant 1.000000e+00 : f32
      %281 = vector.broadcast %cst_128 : f32 to vector<4x32xf32>
      %282 = arith.addf %280, %281 : vector<4x32xf32>
      %cst_129 = arith.constant 5.000000e-01 : f32
      %283 = vector.broadcast %cst_129 : f32 to vector<4x32xf32>
      %284 = arith.mulf %283, %282 : vector<4x32xf32>
      %285 = vector.extract_strided_slice %279 {offsets = [0, 32], sizes = [4, 32], strides = [1, 1]} : vector<4x128xf32> to vector<4x32xf32>
      %cst_130 = arith.constant 1.000000e+00 : f32
      %286 = vector.broadcast %cst_130 : f32 to vector<4x32xf32>
      %287 = arith.addf %285, %286 : vector<4x32xf32>
      %cst_131 = arith.constant 5.000000e-01 : f32
      %288 = vector.broadcast %cst_131 : f32 to vector<4x32xf32>
      %289 = arith.mulf %288, %287 : vector<4x32xf32>
      %290 = vector.extract_strided_slice %279 {offsets = [0, 64], sizes = [4, 32], strides = [1, 1]} : vector<4x128xf32> to vector<4x32xf32>
      %291 = vector.extract_strided_slice %279 {offsets = [0, 96], sizes = [4, 32], strides = [1, 1]} : vector<4x128xf32> to vector<4x32xf32>
      %cst_132 = arith.constant 1.000000e+00 : f32
      %292 = vector.broadcast %cst_132 : f32 to vector<4x32xf32>
      %293 = arith.addf %291, %292 : vector<4x32xf32>
      %cst_133 = arith.constant 5.000000e-01 : f32
      %294 = vector.broadcast %cst_133 : f32 to vector<4x32xf32>
      %295 = arith.mulf %294, %293 : vector<4x32xf32>
      %296 = arith.mulf %289, %270 : vector<4x32xf32>
      %297 = arith.mulf %284, %290 : vector<4x32xf32>
      %298 = arith.addf %296, %297 : vector<4x32xf32>
      %299 = math.tanh %298 : vector<4x32xf32>
      %300 = arith.mulf %295, %299 : vector<4x32xf32>
      %301 = vector.extract_strided_slice %130 {offsets = [24, 0], sizes = [4, 128], strides = [1, 1]} : vector<36x128xf32> to vector<4x128xf32>
      %302 = arith.truncf %300 : vector<4x32xf32> to vector<4x32xbf16>
      %cst_134 = arith.constant dense<0.000000e+00> : vector<4x128xf32>
      %303 = tpu.matmul %302, %123, %cst_134 {dimension_numbers = #tpu.dot_dimension_numbers<[1], [0], [0], [1], [0, 0, 1, 1], [], []>} : vector<4x32xbf16>, vector<32x128xbf16>, vector<4x128xf32> -> vector<4x128xf32>
      %304 = arith.addf %301, %303 : vector<4x128xf32>
      %305 = vector.broadcast %62 : vector<1x128xf32> to vector<4x128xf32>
      %306 = arith.mulf %304, %305 : vector<4x128xf32>
      %307 = math.tanh %306 : vector<4x128xf32>
      %308 = vector.extract_strided_slice %307 {offsets = [0, 0], sizes = [4, 32], strides = [1, 1]} : vector<4x128xf32> to vector<4x32xf32>
      %cst_135 = arith.constant 1.000000e+00 : f32
      %309 = vector.broadcast %cst_135 : f32 to vector<4x32xf32>
      %310 = arith.addf %308, %309 : vector<4x32xf32>
      %cst_136 = arith.constant 5.000000e-01 : f32
      %311 = vector.broadcast %cst_136 : f32 to vector<4x32xf32>
      %312 = arith.mulf %311, %310 : vector<4x32xf32>
      %313 = vector.extract_strided_slice %307 {offsets = [0, 32], sizes = [4, 32], strides = [1, 1]} : vector<4x128xf32> to vector<4x32xf32>
      %cst_137 = arith.constant 1.000000e+00 : f32
      %314 = vector.broadcast %cst_137 : f32 to vector<4x32xf32>
      %315 = arith.addf %313, %314 : vector<4x32xf32>
      %cst_138 = arith.constant 5.000000e-01 : f32
      %316 = vector.broadcast %cst_138 : f32 to vector<4x32xf32>
      %317 = arith.mulf %316, %315 : vector<4x32xf32>
      %318 = vector.extract_strided_slice %307 {offsets = [0, 64], sizes = [4, 32], strides = [1, 1]} : vector<4x128xf32> to vector<4x32xf32>
      %319 = vector.extract_strided_slice %307 {offsets = [0, 96], sizes = [4, 32], strides = [1, 1]} : vector<4x128xf32> to vector<4x32xf32>
      %cst_139 = arith.constant 1.000000e+00 : f32
      %320 = vector.broadcast %cst_139 : f32 to vector<4x32xf32>
      %321 = arith.addf %319, %320 : vector<4x32xf32>
      %cst_140 = arith.constant 5.000000e-01 : f32
      %322 = vector.broadcast %cst_140 : f32 to vector<4x32xf32>
      %323 = arith.mulf %322, %321 : vector<4x32xf32>
      %324 = arith.mulf %317, %298 : vector<4x32xf32>
      %325 = arith.mulf %312, %318 : vector<4x32xf32>
      %326 = arith.addf %324, %325 : vector<4x32xf32>
      %327 = math.tanh %326 : vector<4x32xf32>
      %328 = arith.mulf %323, %327 : vector<4x32xf32>
      %329 = vector.extract_strided_slice %130 {offsets = [28, 0], sizes = [4, 128], strides = [1, 1]} : vector<36x128xf32> to vector<4x128xf32>
      %330 = arith.truncf %328 : vector<4x32xf32> to vector<4x32xbf16>
      %cst_141 = arith.constant dense<0.000000e+00> : vector<4x128xf32>
      %331 = tpu.matmul %330, %123, %cst_141 {dimension_numbers = #tpu.dot_dimension_numbers<[1], [0], [0], [1], [0, 0, 1, 1], [], []>} : vector<4x32xbf16>, vector<32x128xbf16>, vector<4x128xf32> -> vector<4x128xf32>
      %332 = arith.addf %329, %331 : vector<4x128xf32>
      %333 = vector.broadcast %62 : vector<1x128xf32> to vector<4x128xf32>
      %334 = arith.mulf %332, %333 : vector<4x128xf32>
      %335 = math.tanh %334 : vector<4x128xf32>
      %336 = vector.extract_strided_slice %335 {offsets = [0, 0], sizes = [4, 32], strides = [1, 1]} : vector<4x128xf32> to vector<4x32xf32>
      %cst_142 = arith.constant 1.000000e+00 : f32
      %337 = vector.broadcast %cst_142 : f32 to vector<4x32xf32>
      %338 = arith.addf %336, %337 : vector<4x32xf32>
      %cst_143 = arith.constant 5.000000e-01 : f32
      %339 = vector.broadcast %cst_143 : f32 to vector<4x32xf32>
      %340 = arith.mulf %339, %338 : vector<4x32xf32>
      %341 = vector.extract_strided_slice %335 {offsets = [0, 32], sizes = [4, 32], strides = [1, 1]} : vector<4x128xf32> to vector<4x32xf32>
      %cst_144 = arith.constant 1.000000e+00 : f32
      %342 = vector.broadcast %cst_144 : f32 to vector<4x32xf32>
      %343 = arith.addf %341, %342 : vector<4x32xf32>
      %cst_145 = arith.constant 5.000000e-01 : f32
      %344 = vector.broadcast %cst_145 : f32 to vector<4x32xf32>
      %345 = arith.mulf %344, %343 : vector<4x32xf32>
      %346 = vector.extract_strided_slice %335 {offsets = [0, 64], sizes = [4, 32], strides = [1, 1]} : vector<4x128xf32> to vector<4x32xf32>
      %347 = vector.extract_strided_slice %335 {offsets = [0, 96], sizes = [4, 32], strides = [1, 1]} : vector<4x128xf32> to vector<4x32xf32>
      %cst_146 = arith.constant 1.000000e+00 : f32
      %348 = vector.broadcast %cst_146 : f32 to vector<4x32xf32>
      %349 = arith.addf %347, %348 : vector<4x32xf32>
      %cst_147 = arith.constant 5.000000e-01 : f32
      %350 = vector.broadcast %cst_147 : f32 to vector<4x32xf32>
      %351 = arith.mulf %350, %349 : vector<4x32xf32>
      %352 = arith.mulf %345, %326 : vector<4x32xf32>
      %353 = arith.mulf %340, %346 : vector<4x32xf32>
      %354 = arith.addf %352, %353 : vector<4x32xf32>
      %355 = math.tanh %354 : vector<4x32xf32>
      %356 = arith.mulf %351, %355 : vector<4x32xf32>
      %357 = vector.extract_strided_slice %130 {offsets = [32, 0], sizes = [4, 128], strides = [1, 1]} : vector<36x128xf32> to vector<4x128xf32>
      %358 = arith.truncf %356 : vector<4x32xf32> to vector<4x32xbf16>
      %cst_148 = arith.constant dense<0.000000e+00> : vector<4x128xf32>
      %359 = tpu.matmul %358, %123, %cst_148 {dimension_numbers = #tpu.dot_dimension_numbers<[1], [0], [0], [1], [0, 0, 1, 1], [], []>} : vector<4x32xbf16>, vector<32x128xbf16>, vector<4x128xf32> -> vector<4x128xf32>
      %360 = arith.addf %357, %359 : vector<4x128xf32>
      %361 = vector.broadcast %62 : vector<1x128xf32> to vector<4x128xf32>
      %362 = arith.mulf %360, %361 : vector<4x128xf32>
      %363 = math.tanh %362 : vector<4x128xf32>
      %364 = vector.extract_strided_slice %363 {offsets = [0, 0], sizes = [4, 32], strides = [1, 1]} : vector<4x128xf32> to vector<4x32xf32>
      %cst_149 = arith.constant 1.000000e+00 : f32
      %365 = vector.broadcast %cst_149 : f32 to vector<4x32xf32>
      %366 = arith.addf %364, %365 : vector<4x32xf32>
      %cst_150 = arith.constant 5.000000e-01 : f32
      %367 = vector.broadcast %cst_150 : f32 to vector<4x32xf32>
      %368 = arith.mulf %367, %366 : vector<4x32xf32>
      %369 = vector.extract_strided_slice %363 {offsets = [0, 32], sizes = [4, 32], strides = [1, 1]} : vector<4x128xf32> to vector<4x32xf32>
      %cst_151 = arith.constant 1.000000e+00 : f32
      %370 = vector.broadcast %cst_151 : f32 to vector<4x32xf32>
      %371 = arith.addf %369, %370 : vector<4x32xf32>
      %cst_152 = arith.constant 5.000000e-01 : f32
      %372 = vector.broadcast %cst_152 : f32 to vector<4x32xf32>
      %373 = arith.mulf %372, %371 : vector<4x32xf32>
      %374 = vector.extract_strided_slice %363 {offsets = [0, 64], sizes = [4, 32], strides = [1, 1]} : vector<4x128xf32> to vector<4x32xf32>
      %375 = vector.extract_strided_slice %363 {offsets = [0, 96], sizes = [4, 32], strides = [1, 1]} : vector<4x128xf32> to vector<4x32xf32>
      %cst_153 = arith.constant 1.000000e+00 : f32
      %376 = vector.broadcast %cst_153 : f32 to vector<4x32xf32>
      %377 = arith.addf %375, %376 : vector<4x32xf32>
      %cst_154 = arith.constant 5.000000e-01 : f32
      %378 = vector.broadcast %cst_154 : f32 to vector<4x32xf32>
      %379 = arith.mulf %378, %377 : vector<4x32xf32>
      %380 = arith.mulf %373, %354 : vector<4x32xf32>
      %381 = arith.mulf %368, %374 : vector<4x32xf32>
      %382 = arith.addf %380, %381 : vector<4x32xf32>
      %383 = math.tanh %382 : vector<4x32xf32>
      %384 = arith.mulf %379, %383 : vector<4x32xf32>
      %385 = tpu.concatenate %160, %188, %216, %244, %272, %300, %328, %356, %384 in 0 : vector<4x32xf32>, vector<4x32xf32>, vector<4x32xf32>, vector<4x32xf32>, vector<4x32xf32>, vector<4x32xf32>, vector<4x32xf32>, vector<4x32xf32>, vector<4x32xf32> -> vector<36x32xf32>
      scf.yield %385 : vector<36x32xf32>
    }
    %c12_i32_41 = arith.constant 12 : i32
    %c0_i32_42 = arith.constant 0 : i32
    %65 = arith.sitofp %c0_i32_42 : i32 to f32
    %66 = vector.broadcast %65 : f32 to vector<36x224xf32>
    %67 = tpu.concatenate %64, %66 in 1 : vector<36x32xf32>, vector<36x224xf32> -> vector<36x256xf32>
    %68 = arith.truncf %67 : vector<36x256xf32> to vector<36x256xbf16>
    %c0_43 = arith.constant 0 : index
    %c0_44 = arith.constant 0 : index
    %c0_45 = arith.constant 0 : index
    %69 = vector.load %arg7[%c0_43, %c0_44, %c0_45] : memref<5x256x256xbf16, #tpu.memory_space<vmem>>, vector<1x256x256xbf16>
    %70 = vector.shape_cast %69 : vector<1x256x256xbf16> to vector<256x256xbf16>
    %cst_46 = arith.constant dense<0.000000e+00> : vector<36x256xf32>
    %71 = tpu.matmul %68, %70, %cst_46 {dimension_numbers = #tpu.dot_dimension_numbers<[1], [0], [0], [1], [0, 0, 1, 1], [], []>} : vector<36x256xbf16>, vector<256x256xbf16>, vector<36x256xf32> -> vector<36x256xf32>
    %c0_47 = arith.constant 0 : index
    %c0_48 = arith.constant 0 : index
    %c0_49 = arith.constant 0 : index
    %72 = vector.load %arg8[%c0_47, %c0_48, %c0_49] : memref<5x1x256xf32, #tpu.memory_space<vmem>>, vector<1x1x256xf32>
    %73 = vector.shape_cast %72 : vector<1x1x256xf32> to vector<1x256xf32>
    %74 = vector.broadcast %73 : vector<1x256xf32> to vector<36x256xf32>
    %75 = arith.addf %71, %74 : vector<36x256xf32>
    %cst_50 = arith.constant 0.000000e+00 : f32
    %76 = vector.broadcast %cst_50 : f32 to vector<36x256xf32>
    %77 = arith.maximumf %75, %76 : vector<36x256xf32>
    %78 = arith.truncf %77 : vector<36x256xf32> to vector<36x256xbf16>
    %c1_51 = arith.constant 1 : index
    %c0_52 = arith.constant 0 : index
    %c0_53 = arith.constant 0 : index
    %79 = vector.load %arg7[%c1_51, %c0_52, %c0_53] : memref<5x256x256xbf16, #tpu.memory_space<vmem>>, vector<1x256x256xbf16>
    %80 = vector.shape_cast %79 : vector<1x256x256xbf16> to vector<256x256xbf16>
    %cst_54 = arith.constant dense<0.000000e+00> : vector<36x256xf32>
    %81 = tpu.matmul %78, %80, %cst_54 {dimension_numbers = #tpu.dot_dimension_numbers<[1], [0], [0], [1], [0, 0, 1, 1], [], []>} : vector<36x256xbf16>, vector<256x256xbf16>, vector<36x256xf32> -> vector<36x256xf32>
    %c1_55 = arith.constant 1 : index
    %c0_56 = arith.constant 0 : index
    %c0_57 = arith.constant 0 : index
    %82 = vector.load %arg8[%c1_55, %c0_56, %c0_57] : memref<5x1x256xf32, #tpu.memory_space<vmem>>, vector<1x1x256xf32>
    %83 = vector.shape_cast %82 : vector<1x1x256xf32> to vector<1x256xf32>
    %84 = vector.broadcast %83 : vector<1x256xf32> to vector<36x256xf32>
    %85 = arith.addf %81, %84 : vector<36x256xf32>
    %cst_58 = arith.constant 0.000000e+00 : f32
    %86 = vector.broadcast %cst_58 : f32 to vector<36x256xf32>
    %87 = arith.maximumf %85, %86 : vector<36x256xf32>
    %88 = arith.truncf %87 : vector<36x256xf32> to vector<36x256xbf16>
    %c2_59 = arith.constant 2 : index
    %c0_60 = arith.constant 0 : index
    %c0_61 = arith.constant 0 : index
    %89 = vector.load %arg7[%c2_59, %c0_60, %c0_61] : memref<5x256x256xbf16, #tpu.memory_space<vmem>>, vector<1x256x256xbf16>
    %90 = vector.shape_cast %89 : vector<1x256x256xbf16> to vector<256x256xbf16>
    %cst_62 = arith.constant dense<0.000000e+00> : vector<36x256xf32>
    %91 = tpu.matmul %88, %90, %cst_62 {dimension_numbers = #tpu.dot_dimension_numbers<[1], [0], [0], [1], [0, 0, 1, 1], [], []>} : vector<36x256xbf16>, vector<256x256xbf16>, vector<36x256xf32> -> vector<36x256xf32>
    %c2_63 = arith.constant 2 : index
    %c0_64 = arith.constant 0 : index
    %c0_65 = arith.constant 0 : index
    %92 = vector.load %arg8[%c2_63, %c0_64, %c0_65] : memref<5x1x256xf32, #tpu.memory_space<vmem>>, vector<1x1x256xf32>
    %93 = vector.shape_cast %92 : vector<1x1x256xf32> to vector<1x256xf32>
    %94 = vector.broadcast %93 : vector<1x256xf32> to vector<36x256xf32>
    %95 = arith.addf %91, %94 : vector<36x256xf32>
    %cst_66 = arith.constant 0.000000e+00 : f32
    %96 = vector.broadcast %cst_66 : f32 to vector<36x256xf32>
    %97 = arith.maximumf %95, %96 : vector<36x256xf32>
    %98 = arith.truncf %97 : vector<36x256xf32> to vector<36x256xbf16>
    %c3_67 = arith.constant 3 : index
    %c0_68 = arith.constant 0 : index
    %c0_69 = arith.constant 0 : index
    %99 = vector.load %arg7[%c3_67, %c0_68, %c0_69] : memref<5x256x256xbf16, #tpu.memory_space<vmem>>, vector<1x256x256xbf16>
    %100 = vector.shape_cast %99 : vector<1x256x256xbf16> to vector<256x256xbf16>
    %cst_70 = arith.constant dense<0.000000e+00> : vector<36x256xf32>
    %101 = tpu.matmul %98, %100, %cst_70 {dimension_numbers = #tpu.dot_dimension_numbers<[1], [0], [0], [1], [0, 0, 1, 1], [], []>} : vector<36x256xbf16>, vector<256x256xbf16>, vector<36x256xf32> -> vector<36x256xf32>
    %c3_71 = arith.constant 3 : index
    %c0_72 = arith.constant 0 : index
    %c0_73 = arith.constant 0 : index
    %102 = vector.load %arg8[%c3_71, %c0_72, %c0_73] : memref<5x1x256xf32, #tpu.memory_space<vmem>>, vector<1x1x256xf32>
    %103 = vector.shape_cast %102 : vector<1x1x256xf32> to vector<1x256xf32>
    %104 = vector.broadcast %103 : vector<1x256xf32> to vector<36x256xf32>
    %105 = arith.addf %101, %104 : vector<36x256xf32>
    %cst_74 = arith.constant 0.000000e+00 : f32
    %106 = vector.broadcast %cst_74 : f32 to vector<36x256xf32>
    %107 = arith.maximumf %105, %106 : vector<36x256xf32>
    %108 = arith.truncf %107 : vector<36x256xf32> to vector<36x256xbf16>
    %c4_75 = arith.constant 4 : index
    %c0_76 = arith.constant 0 : index
    %c0_77 = arith.constant 0 : index
    %109 = vector.load %arg7[%c4_75, %c0_76, %c0_77] : memref<5x256x256xbf16, #tpu.memory_space<vmem>>, vector<1x256x256xbf16>
    %110 = vector.shape_cast %109 : vector<1x256x256xbf16> to vector<256x256xbf16>
    %cst_78 = arith.constant dense<0.000000e+00> : vector<36x256xf32>
    %111 = tpu.matmul %108, %110, %cst_78 {dimension_numbers = #tpu.dot_dimension_numbers<[1], [0], [0], [1], [0, 0, 1, 1], [], []>} : vector<36x256xbf16>, vector<256x256xbf16>, vector<36x256xf32> -> vector<36x256xf32>
    %c4_79 = arith.constant 4 : index
    %c0_80 = arith.constant 0 : index
    %c0_81 = arith.constant 0 : index
    %112 = vector.load %arg8[%c4_79, %c0_80, %c0_81] : memref<5x1x256xf32, #tpu.memory_space<vmem>>, vector<1x1x256xf32>
    %113 = vector.shape_cast %112 : vector<1x1x256xf32> to vector<1x256xf32>
    %114 = vector.broadcast %113 : vector<1x256xf32> to vector<36x256xf32>
    %115 = arith.addf %111, %114 : vector<36x256xf32>
    %c0_82 = arith.constant 0 : index
    %c0_83 = arith.constant 0 : index
    %c0_84 = arith.constant 0 : index
    %116 = vector.load %arg9[%c0_82, %c0_83, %c0_84] : memref<1x36x256xf32, #tpu.memory_space<vmem>>, vector<1x36x256xf32>
    %117 = vector.shape_cast %116 : vector<1x36x256xf32> to vector<36x256xf32>
    %118 = vector.shape_cast %115 : vector<36x256xf32> to vector<1x36x256xf32>
    tpu.vector_store %arg9[%c0_82, %c0_83, %c0_84], %118 {strides = array<i32>} : memref<1x36x256xf32, #tpu.memory_space<vmem>>, vector<1x36x256xf32>,
    return
  }
  func.func @transform_0(%arg0: i32) -> (i32, i32, i32) {
    %c0_i32 = arith.constant 0 : i32
    %c0_i32_0 = arith.constant 0 : i32
    %c0_i32_1 = arith.constant 0 : i32
    return %arg0, %c0_i32, %c0_i32_0 : i32, i32, i32
  }
  func.func @transform_1(%arg0: i32) -> (i32, i32, i32) {
    %c0_i32 = arith.constant 0 : i32
    %c0_i32_0 = arith.constant 0 : i32
    %c0_i32_1 = arith.constant 0 : i32
    return %arg0, %c0_i32, %c0_i32_0 : i32, i32, i32
  }
  func.func @transform_2(%arg0: i32) -> (i32, i32, i32) {
    %c0_i32 = arith.constant 0 : i32
    %c0_i32_0 = arith.constant 0 : i32
    %c0_i32_1 = arith.constant 0 : i32
    %c0_i32_2 = arith.constant 0 : i32
    return %c0_i32, %c0_i32_0, %c0_i32_1 : i32, i32, i32
  }
  func.func @transform_3(%arg0: i32) -> (i32, i32, i32) {
    %c0_i32 = arith.constant 0 : i32
    %c0_i32_0 = arith.constant 0 : i32
    %c0_i32_1 = arith.constant 0 : i32
    %c0_i32_2 = arith.constant 0 : i32
    return %c0_i32, %c0_i32_0, %c0_i32_1 : i32, i32, i32
  }
  func.func @transform_4(%arg0: i32) -> (i32, i32, i32) {
    %c0_i32 = arith.constant 0 : i32
    %c0_i32_0 = arith.constant 0 : i32
    %c0_i32_1 = arith.constant 0 : i32
    %c0_i32_2 = arith.constant 0 : i32
    return %c0_i32, %c0_i32_0, %c0_i32_1 : i32, i32, i32
  }
  func.func @transform_5(%arg0: i32) -> (i32, i32, i32) {
    %c0_i32 = arith.constant 0 : i32
    %c0_i32_0 = arith.constant 0 : i32
    %c0_i32_1 = arith.constant 0 : i32
    %c0_i32_2 = arith.constant 0 : i32
    return %c0_i32, %c0_i32_0, %c0_i32_1 : i32, i32, i32
  }
  func.func @transform_6(%arg0: i32) -> (i32, i32, i32) {
    %c0_i32 = arith.constant 0 : i32
    %c0_i32_0 = arith.constant 0 : i32
    %c0_i32_1 = arith.constant 0 : i32
    %c0_i32_2 = arith.constant 0 : i32
    return %c0_i32, %c0_i32_0, %c0_i32_1 : i32, i32, i32
  }
  func.func @transform_7(%arg0: i32) -> (i32, i32, i32) {
    %c0_i32 = arith.constant 0 : i32
    %c0_i32_0 = arith.constant 0 : i32
    %c0_i32_1 = arith.constant 0 : i32
    %c0_i32_2 = arith.constant 0 : i32
    return %c0_i32, %c0_i32_0, %c0_i32_1 : i32, i32, i32
  }
  func.func @transform_8(%arg0: i32) -> (i32, i32, i32) {
    %c0_i32 = arith.constant 0 : i32
    %c0_i32_0 = arith.constant 0 : i32
    %c0_i32_1 = arith.constant 0 : i32
    return %arg0, %c0_i32, %c0_i32_0 : i32, i32, i32
  }
}

</mosaic_0001>

<llo_original>
// kernel: tpu_custom_call.1
$region0: #{tpu_custom_call.1}
  #allocation0 [shape = 'u32[]', space=smem, size = 0x4, offset = 0x4, fixed_abs, tag = 'smem constant byte address 0x4 - core index']
  #allocation1 [shape = 'u32[144,128]{1,0:T(1,128)}', space=vmem, size = 0x12000, scoped, tag = 'internal scratch']
  %s0 = inlined_call_operand.hbm [shape: f32[2,32,256], index: 0, kind: input, shape index: {}]
  %s1 = inlined_call_operand.hbm [shape: f32[2,4,32], index: 1, kind: input, shape index: {}]
  %s2 = inlined_call_operand.hbm [shape: bf16[5,256,256], index: 2, kind: input, shape index: {}]
  %s3 = inlined_call_operand.hbm [shape: f32[5,1,256], index: 3, kind: input, shape index: {}]
  %s4 = inlined_call_operand.hbm [shape: bf16[12,64,128], index: 4, kind: input, shape index: {}]
  %s5 = inlined_call_operand.vmem [shape: f32[12,1,128], index: 5, kind: input, shape index: {}]
  %s6 = inlined_call_operand.hbm [shape: bf16[5,256,256], index: 6, kind: input, shape index: {}]
  %s7 = inlined_call_operand.vmem [shape: f32[5,1,256], index: 7, kind: input, shape index: {}]
  %s8 = inlined_call_operand.vmem [shape: f32[2,36,256], index: 8, kind: output, shape index: {}]
  %s9 = sld [smem:[#allocation0]]
  $region96: #{tpu_custom_call.1} parent=0
    _
  %s11 = ssub.s32 1, %s9
  %s12 = scalar_select 0, %s11, %s9
  $region1: #{tpu_custom_call.1} parent=0
    #allocation2 [shape = 'u8[65536]{0}', space=vmem, size = 0x10000, scoped, tag = 'input window, operand 0']
    #allocation3 [shape = 's32[2]{0}', space=sflag, size = 0x8, scoped, tag = 'scoped memory for tpu_custom_call.1']
    #allocation4 [shape = 'u8[4096]{0}', space=vmem, size = 0x1000, scoped, tag = 'input window, operand 1']
    #allocation5 [shape = 's32[2]{0}', space=sflag, size = 0x8, scoped, tag = 'scoped memory for tpu_custom_call.1']
    #allocation6 [shape = 'u8[655360]{0}', space=vmem, size = 0xa0000, scoped, tag = 'input window, operand 2, single buffered']
    #allocation7 [shape = 'u8[5120]{0}', space=vmem, size = 0x1400, scoped, tag = 'input window, operand 3, single buffered']
    #allocation8 [shape = 's32[1]{0}', space=sflag, size = 0x4, scoped, tag = 'scoped memory for tpu_custom_call.1']
    #allocation9 [shape = 'u8[196608]{0}', space=vmem, size = 0x30000, scoped, tag = 'input window, operand 4, single buffered']
    #allocation10 [shape = 'u8[655360]{0}', space=vmem, size = 0xa0000, scoped, tag = 'input window, operand 6, single buffered']
    #allocation11 [shape = 's32[1]{0}', space=sflag, size = 0x4, scoped, tag = 'scoped memory for tpu_custom_call.1']
    %13 = vsyncpa [#allocation3], 0
    %s14 = scalar_lea.sflag [#allocation3], 1
    %15 = vsyncpa %s14, 0
    %16 = vsyncpa [#allocation5], 0
    %s17 = scalar_lea.sflag [#allocation5], 1
    %18 = vsyncpa %s17, 0
    %19 = vsyncpa [#allocation8], 0
    %20 = vsyncpa [#allocation11], 0
    loop: start=0, step=1, limit=4
    $region2: #{tpu_custom_call.1} parent=1 // loop_pre_header
      _
    $region3: #{tpu_custom_call.1} parent=1 // loop_header
      %s22 = sphi 0, %s26
      %p23 = scmp.ge.s32.totalorder %s22, 4
      %s32 = sphi 0, %s34
      %s35 = sphi 0, %s32
      %s36 = sphi 0, %s35
      %s52 = sphi 0, %s36
      %s58 = sphi 0, %s60
      %s61 = sphi 0, %s58
      %s62 = sphi 0, %s61
      %s78 = sphi 0, %s62
      %s82 = sphi 0, %s82
      %s84 = sphi 0, %s82
      %s85 = sphi 0, %s84
      %s99 = sphi 0, %s85
      %s103 = sphi 0, %s103
      %s105 = sphi 0, %s103
      %s106 = sphi 0, %s105
      %s120 = sphi 0, %s106
      %s124 = sphi 0, %s124
      %s126 = sphi 0, %s124
      %s127 = sphi 0, %s126
      %s141 = sphi 0, %s127
      %s145 = sphi 0, %s145
      %s147 = sphi 0, %s145
      %s148 = sphi 0, %s147
      %s162 = sphi 0, %s148
      %s166 = sphi 0, %s166
      %s168 = sphi 0, %s166
      %s169 = sphi 0, %s168
      %s183 = sphi 0, %s169
      %s187 = sphi 0, %s187
      %s189 = sphi 0, %s187
      %s190 = sphi 0, %s189
      %s204 = sphi 0, %s190
      %s210 = sphi 0, %s212
      %s213 = sphi 0, %s210
      %s214 = sphi 0, %s213
      %s230 = sphi 0, %s214
    $region4: #{tpu_custom_call.1} parent=1 // loop_header_branch
      %25 = sbr.rel (%p23) target = $region8
    $region5: #{tpu_custom_call.1} parent=1 // loop_body
      %s27 = ssub.s32 %s22, 1
      %s28 = ssub.s32 %s22, 2
      %s29 = sadd.s32 %s22, 1
      %s30 = ssub.s32 %s22, %s29
      %p31 = scmp.eq.s32.totalorder %s30, 0
      %s33 = sadd.s32 %s32, 1
      %s34 = scalar_select %p31, %s32, %s33
      %p37 = pneg %p31
      %p38 = scmp.eq.s32.totalorder %s22, 1
      %p39 = por %p37, %p38
      %p40 = scmp.ne.s32.totalorder %s32, %s35
      %p41 = scmp.eq.s32.totalorder %s22, 0
      %p42 = por %p40, %p41
      %p43 = scmp.ne.s32.totalorder %s32, %s35
      %p44 = scmp.eq.s32.totalorder %s27, 1
      %p45 = por %p43, %p44
      %p46 = scmp.ne.s32.totalorder %s35, %s36
      %p47 = scmp.eq.s32.totalorder %s27, 0
      %p48 = por %p46, %p47
      %p49 = scmp.ne.s32.totalorder %s35, %s36
      %p50 = scmp.eq.s32.totalorder %s28, 1
      %p51 = por %p49, %p50
      %p53 = scmp.ne.s32.totalorder %s36, %s52
      %p54 = scmp.eq.s32.totalorder %s28, 0
      %p55 = por %p53, %p54
      %s56 = ssub.s32 %s22, %s29
      %p57 = scmp.eq.s32.totalorder %s56, 0
      %s59 = sadd.s32 %s58, 1
      %s60 = scalar_select %p57, %s58, %s59
      %p63 = pneg %p57
      %p64 = scmp.eq.s32.totalorder %s22, 1
      %p65 = por %p63, %p64
      %p66 = scmp.ne.s32.totalorder %s58, %s61
      %p67 = scmp.eq.s32.totalorder %s22, 0
      %p68 = por %p66, %p67
      %p69 = scmp.ne.s32.totalorder %s58, %s61
      %p70 = scmp.eq.s32.totalorder %s27, 1
      %p71 = por %p69, %p70
      %p72 = scmp.ne.s32.totalorder %s61, %s62
      %p73 = scmp.eq.s32.totalorder %s27, 0
      %p74 = por %p72, %p73
      %p75 = scmp.ne.s32.totalorder %s61, %s62
      %p76 = scmp.eq.s32.totalorder %s28, 1
      %p77 = por %p75, %p76
      %p79 = scmp.ne.s32.totalorder %s62, %s78
      %p80 = scmp.eq.s32.totalorder %s28, 0
      %p81 = por %p79, %p80
      %s83 = sadd.s32 %s82, 1
      %p86 = scmp.eq.s32.totalorder %s22, 1
      %p87 = scmp.ne.s32.totalorder %s82, %s84
      %p88 = scmp.eq.s32.totalorder %s22, 0
      %p89 = por %p87, %p88
      %p90 = scmp.ne.s32.totalorder %s82, %s84
      %p91 = scmp.eq.s32.totalorder %s27, 1
      %p92 = por %p90, %p91
      %p93 = scmp.ne.s32.totalorder %s84, %s85
      %p94 = scmp.eq.s32.totalorder %s27, 0
      %p95 = por %p93, %p94
      %p96 = scmp.ne.s32.totalorder %s84, %s85
      %p97 = scmp.eq.s32.totalorder %s28, 1
      %p98 = por %p96, %p97
      %p100 = scmp.ne.s32.totalorder %s85, %s99
      %p101 = scmp.eq.s32.totalorder %s28, 0
      %p102 = por %p100, %p101
      %s104 = sadd.s32 %s103, 1
      %p107 = scmp.eq.s32.totalorder %s22, 1
      %p108 = scmp.ne.s32.totalorder %s103, %s105
      %p109 = scmp.eq.s32.totalorder %s22, 0
      %p110 = por %p108, %p109
      %p111 = scmp.ne.s32.totalorder %s103, %s105
      %p112 = scmp.eq.s32.totalorder %s27, 1
      %p113 = por %p111, %p112
      %p114 = scmp.ne.s32.totalorder %s105, %s106
      %p115 = scmp.eq.s32.totalorder %s27, 0
      %p116 = por %p114, %p115
      %p117 = scmp.ne.s32.totalorder %s105, %s106
      %p118 = scmp.eq.s32.totalorder %s28, 1
      %p119 = por %p117, %p118
      %p121 = scmp.ne.s32.totalorder %s106, %s120
      %p122 = scmp.eq.s32.totalorder %s28, 0
      %p123 = por %p121, %p122
      %s125 = sadd.s32 %s124, 1
      %p128 = scmp.eq.s32.totalorder %s22, 1
      %p129 = scmp.ne.s32.totalorder %s124, %s126
      %p130 = scmp.eq.s32.totalorder %s22, 0
      %p131 = por %p129, %p130
      %p132 = scmp.ne.s32.totalorder %s124, %s126
      %p133 = scmp.eq.s32.totalorder %s27, 1
      %p134 = por %p132, %p133
      %p135 = scmp.ne.s32.totalorder %s126, %s127
      %p136 = scmp.eq.s32.totalorder %s27, 0
      %p137 = por %p135, %p136
      %p138 = scmp.ne.s32.totalorder %s126, %s127
      %p139 = scmp.eq.s32.totalorder %s28, 1
      %p140 = por %p138, %p139
      %p142 = scmp.ne.s32.totalorder %s127, %s141
      %p143 = scmp.eq.s32.totalorder %s28, 0
      %p144 = por %p142, %p143
      %s146 = sadd.s32 %s145, 1
      %p149 = scmp.eq.s32.totalorder %s22, 1
      %p150 = scmp.ne.s32.totalorder %s145, %s147
      %p151 = scmp.eq.s32.totalorder %s22, 0
      %p152 = por %p150, %p151
      %p153 = scmp.ne.s32.totalorder %s145, %s147
      %p154 = scmp.eq.s32.totalorder %s27, 1
      %p155 = por %p153, %p154
      %p156 = scmp.ne.s32.totalorder %s147, %s148
      %p157 = scmp.eq.s32.totalorder %s27, 0
      %p158 = por %p156, %p157
      %p159 = scmp.ne.s32.totalorder %s147, %s148
      %p160 = scmp.eq.s32.totalorder %s28, 1
      %p161 = por %p159, %p160
      %p163 = scmp.ne.s32.totalorder %s148, %s162
      %p164 = scmp.eq.s32.totalorder %s28, 0
      %p165 = por %p163, %p164
      %s167 = sadd.s32 %s166, 1
      %p170 = scmp.eq.s32.totalorder %s22, 1
      %p171 = scmp.ne.s32.totalorder %s166, %s168
      %p172 = scmp.eq.s32.totalorder %s22, 0
      %p173 = por %p171, %p172
      %p174 = scmp.ne.s32.totalorder %s166, %s168
      %p175 = scmp.eq.s32.totalorder %s27, 1
      %p176 = por %p174, %p175
      %p177 = scmp.ne.s32.totalorder %s168, %s169
      %p178 = scmp.eq.s32.totalorder %s27, 0
      %p179 = por %p177, %p178
      %p180 = scmp.ne.s32.totalorder %s168, %s169
      %p181 = scmp.eq.s32.totalorder %s28, 1
      %p182 = por %p180, %p181
      %p184 = scmp.ne.s32.totalorder %s169, %s183
      %p185 = scmp.eq.s32.totalorder %s28, 0
      %p186 = por %p184, %p185
      %s188 = sadd.s32 %s187, 1
      %p191 = scmp.eq.s32.totalorder %s22, 1
      %p192 = scmp.ne.s32.totalorder %s187, %s189
      %p193 = scmp.eq.s32.totalorder %s22, 0
      %p194 = por %p192, %p193
      %p195 = scmp.ne.s32.totalorder %s187, %s189
      %p196 = scmp.eq.s32.totalorder %s27, 1
      %p197 = por %p195, %p196
      %p198 = scmp.ne.s32.totalorder %s189, %s190
      %p199 = scmp.eq.s32.totalorder %s27, 0
      %p200 = por %p198, %p199
      %p201 = scmp.ne.s32.totalorder %s189, %s190
      %p202 = scmp.eq.s32.totalorder %s28, 1
      %p203 = por %p201, %p202
      %p205 = scmp.ne.s32.totalorder %s190, %s204
      %p206 = scmp.eq.s32.totalorder %s28, 0
      %p207 = por %p205, %p206
      %s208 = ssub.s32 %s22, %s29
      %p209 = scmp.eq.s32.totalorder %s208, 0
      %s211 = sadd.s32 %s210, 1
      %s212 = scalar_select %p209, %s210, %s211
      %p215 = pneg %p209
      %p216 = scmp.eq.s32.totalorder %s22, 1
      %p217 = por %p215, %p216
      %p218 = scmp.ne.s32.totalorder %s210, %s213
      %p219 = scmp.eq.s32.totalorder %s22, 0
      %p220 = por %p218, %p219
      %p221 = scmp.ne.s32.totalorder %s210, %s213
      %p222 = scmp.eq.s32.totalorder %s27, 1
      %p223 = por %p221, %p222
      %p224 = scmp.ne.s32.totalorder %s213, %s214
      %p225 = scmp.eq.s32.totalorder %s27, 0
      %p226 = por %p224, %p225
      %p227 = scmp.ne.s32.totalorder %s213, %s214
      %p228 = scmp.eq.s32.totalorder %s28, 1
      %p229 = por %p227, %p228
      %p231 = scmp.ne.s32.totalorder %s214, %s230
      %p232 = scmp.eq.s32.totalorder %s28, 0
      %p233 = por %p231, %p232
      %p234 = scmp.le.s32.totalorder 1, %s22
      %p235 = scmp.lt.s32.totalorder %s22, 3
      %p236 = pnand %p234, %p235
      %p237 = pneg %p236
      // Predicated region
      $region9: #{tpu_custom_call.1} parent=5 // pred_check
        _
      $region10: #{tpu_custom_call.1} parent=5 // pred_check_branch
        %239 = sbr.rel (%p236) target = $region12
      $region11: #{tpu_custom_call.1} parent=5 // pred_region
        %s240 = ssub.s32 %s22, 1
        // Predicated region
        $region13: #{tpu_custom_call.1} parent=11 // pred_check
          %p241 = pneg %p95
        $region14: #{tpu_custom_call.1} parent=11 // pred_check_branch
          %243 = sbr.rel (%p241) target = $region16
        $region15: #{tpu_custom_call.1} parent=11 // pred_region
          %s245 = ssub.s32 20480, 20480
          %246 = vsyncadd [#allocation5], %s245
          %s247 = sshll.u32 [#allocation6], 4
          %s248 = int_to_ptr.vmem [resolvable:$true] %s247
          %253 = dma.hbm_to_vmem [thread:$0]  %s2, 20480, %s248, [#allocation5], 128, 128, 8
        $region16: #{tpu_custom_call.1} parent=11 // pred_fallthru
          _
        // Predicated region
        $region17: #{tpu_custom_call.1} parent=11 // pred_check
          %p254 = pneg %p116
        $region18: #{tpu_custom_call.1} parent=11 // pred_check_branch
          %256 = sbr.rel (%p254) target = $region20
        $region19: #{tpu_custom_call.1} parent=11 // pred_region
          %s258 = ssub.s32 160, 160
          %259 = vsyncadd [#allocation8], %s258
          %s260 = sshll.u32 [#allocation7], 4
          %s261 = int_to_ptr.vmem [resolvable:$true] %s260
          %266 = dma.hbm_to_vmem [thread:$0]  %s3, 160, %s261, [#allocation8], 32, 32, 2
        $region20: #{tpu_custom_call.1} parent=11 // pred_fallthru
          _
        // Predicated region
        $region21: #{tpu_custom_call.1} parent=11 // pred_check
          %p267 = pneg %p137
        $region22: #{tpu_custom_call.1} parent=11 // pred_check_branch
          %269 = sbr.rel (%p267) target = $region24
        $region23: #{tpu_custom_call.1} parent=11 // pred_region
          %s271 = ssub.s32 6144, 6144
          %272 = vsyncadd [#allocation8], %s271
          %s273 = sshll.u32 [#allocation9], 4
          %s274 = int_to_ptr.vmem [resolvable:$true] %s273
          %279 = dma.hbm_to_vmem [thread:$0]  %s4, 6144, %s274, [#allocation8], 64, 64, 4
        $region24: #{tpu_custom_call.1} parent=11 // pred_fallthru
          _
        // Predicated region
        $region25: #{tpu_custom_call.1} parent=11 // pred_check
          %p280 = pneg %p158
        $region26: #{tpu_custom_call.1} parent=11 // pred_check_branch
          %282 = sbr.rel (%p280) target = $region28
        $region27: #{tpu_custom_call.1} parent=11 // pred_region
          _
        $region28: #{tpu_custom_call.1} parent=11 // pred_fallthru
          _
        // Predicated region
        $region29: #{tpu_custom_call.1} parent=11 // pred_check
          %p283 = pneg %p179
        $region30: #{tpu_custom_call.1} parent=11 // pred_check_branch
          %285 = sbr.rel (%p283) target = $region32
        $region31: #{tpu_custom_call.1} parent=11 // pred_region
          %s287 = ssub.s32 20480, 20480
          %288 = vsyncadd [#allocation11], %s287
          %s289 = sshll.u32 [#allocation10], 4
          %s290 = int_to_ptr.vmem [resolvable:$true] %s289
          %295 = dma.hbm_to_vmem [thread:$0]  %s6, 20480, %s290, [#allocation11], 128, 128, 8
        $region32: #{tpu_custom_call.1} parent=11 // pred_fallthru
          _
        // Predicated region
        $region33: #{tpu_custom_call.1} parent=11 // pred_check
          %p296 = pneg %p200
        $region34: #{tpu_custom_call.1} parent=11 // pred_check_branch
          %298 = sbr.rel (%p296) target = $region36
        $region35: #{tpu_custom_call.1} parent=11 // pred_region
          _
        $region36: #{tpu_custom_call.1} parent=11 // pred_fallthru
          _
      $region12: #{tpu_custom_call.1} parent=5 // pred_fallthru
        _
      %p299 = scmp.lt.s32.totalorder %s22, 2
      // Predicated region
      $region37: #{tpu_custom_call.1} parent=5 // pred_check
        %p300 = pneg %p299
      $region38: #{tpu_custom_call.1} parent=5 // pred_check_branch
        %302 = sbr.rel (%p300) target = $region40
      $region39: #{tpu_custom_call.1} parent=5 // pred_region
        // Predicated region
        $region41: #{tpu_custom_call.1} parent=39 // pred_check
          %p303 = pneg %p42
        $region42: #{tpu_custom_call.1} parent=39 // pred_check_branch
          %305 = sbr.rel (%p303) target = $region44
        $region43: #{tpu_custom_call.1} parent=39 // pred_region
          %s306 = sand.u32 %s32, 1
          %s307 = scalar_lea.sflag [#allocation3], %s306
          %s308 = sand.u32 %s32, 1
          %s309 = smul.addr %s308, 64
          %s310 = scalar_lea.vmem [#allocation2], %s309
          %s312 = ssub.s32 1024, 1024
          %313 = vsyncadd %s307, %s312
          %s314 = smul.addr %s22, 8
          %s315 = smul.addr %s314, 128
          %s316 = scalar_lea.hbm %s0, %s315
          %s317 = sshll.u32 %s310, 4
          %s318 = int_to_ptr.vmem [resolvable:$true] %s317
          %323 = dma.hbm_to_vmem [thread:$0]  %s316, 1024, %s318, %s307, 256, 256, 16
        $region44: #{tpu_custom_call.1} parent=39 // pred_fallthru
          _
        // Predicated region
        $region45: #{tpu_custom_call.1} parent=39 // pred_check
          %p324 = pneg %p68
        $region46: #{tpu_custom_call.1} parent=39 // pred_check_branch
          %326 = sbr.rel (%p324) target = $region48
        $region47: #{tpu_custom_call.1} parent=39 // pred_region
          %s327 = sand.u32 %s22, 1
          %s328 = scalar_lea.sflag [#allocation5], %s327
          %s329 = sand.u32 %s58, 1
          %s330 = smul.addr %s329, 4
          %s331 = scalar_lea.vmem [#allocation4], %s330
          %s333 = ssub.s32 64, 64
          %334 = vsyncadd %s328, %s333
          %s335 = smul.addr %s22, 64
          %s336 = scalar_lea.hbm %s1, %s335
          %s338 = sshll.u32 %s331, 4
          %s339 = int_to_ptr.vmem [resolvable:$true] %s338
          %341 = dma.hbm_to_vmem [thread:$0]  %s336, 64, %s339, %s328
        $region48: #{tpu_custom_call.1} parent=39 // pred_fallthru
          _
      $region40: #{tpu_custom_call.1} parent=5 // pred_fallthru
        _
      %p342 = scmp.le.s32.totalorder 1, %s22
      %p343 = scmp.lt.s32.totalorder %s22, 3
      %p344 = pnand %p342, %p343
      %p345 = pneg %p344
      // Predicated region
      $region49: #{tpu_custom_call.1} parent=5 // pred_check
        _
      $region50: #{tpu_custom_call.1} parent=5 // pred_check_branch
        %347 = sbr.rel (%p344) target = $region52
      $region51: #{tpu_custom_call.1} parent=5 // pred_region
        %s348 = ssub.s32 %s22, 1
        %s349 = sand.u32 %s35, 1
        %s350 = scalar_lea.sflag [#allocation3], %s349
        %s351 = sand.u32 %s35, 1
        %s352 = smul.addr %s351, 64
        %s353 = scalar_lea.vmem [#allocation2], %s352
        // Predicated region
        $region53: #{tpu_custom_call.1} parent=51 // pred_check
          %p354 = pneg %p48
        $region54: #{tpu_custom_call.1} parent=51 // pred_check_branch
          %356 = sbr.rel (%p354) target = $region56
        $region55: #{tpu_custom_call.1} parent=51 // pred_region
          %357 = dma.done %s350, 1024
        $region56: #{tpu_custom_call.1} parent=51 // pred_fallthru
          _
        %s358 = sand.u32 %s27, 1
        %s359 = scalar_lea.sflag [#allocation5], %s358
        %s360 = sand.u32 %s61, 1
        %s361 = smul.addr %s360, 4
        %s362 = scalar_lea.vmem [#allocation4], %s361
        // Predicated region
        $region57: #{tpu_custom_call.1} parent=51 // pred_check
          %p363 = pneg %p74
        $region58: #{tpu_custom_call.1} parent=51 // pred_check_branch
          %365 = sbr.rel (%p363) target = $region60
        $region59: #{tpu_custom_call.1} parent=51 // pred_region
          %366 = dma.done %s359, 64
        $region60: #{tpu_custom_call.1} parent=51 // pred_fallthru
          _
        // Predicated region
        $region61: #{tpu_custom_call.1} parent=51 // pred_check
          %p367 = pneg %p95
        $region62: #{tpu_custom_call.1} parent=51 // pred_check_branch
          %369 = sbr.rel (%p367) target = $region64
        $region63: #{tpu_custom_call.1} parent=51 // pred_region
          %370 = dma.done [#allocation5], 20480
        $region64: #{tpu_custom_call.1} parent=51 // pred_fallthru
          _
        // Predicated region
        $region65: #{tpu_custom_call.1} parent=51 // pred_check
          %p371 = pneg %p116
        $region66: #{tpu_custom_call.1} parent=51 // pred_check_branch
          %373 = sbr.rel (%p371) target = $region68
        $region67: #{tpu_custom_call.1} parent=51 // pred_region
          %374 = dma.done [#allocation8], 160
        $region68: #{tpu_custom_call.1} parent=51 // pred_fallthru
          _
        // Predicated region
        $region69: #{tpu_custom_call.1} parent=51 // pred_check
          %p375 = pneg %p137
        $region70: #{tpu_custom_call.1} parent=51 // pred_check_branch
          %377 = sbr.rel (%p375) target = $region72
        $region71: #{tpu_custom_call.1} parent=51 // pred_region
          %378 = dma.done [#allocation8], 6144
        $region72: #{tpu_custom_call.1} parent=51 // pred_fallthru
          _
        // Predicated region
        $region73: #{tpu_custom_call.1} parent=51 // pred_check
          %p379 = pneg %p179
        $region74: #{tpu_custom_call.1} parent=51 // pred_check_branch
          %381 = sbr.rel (%p379) target = $region76
        $region75: #{tpu_custom_call.1} parent=51 // pred_region
          %382 = dma.done [#allocation11], 20480
        $region76: #{tpu_custom_call.1} parent=51 // pred_fallthru
          _
        %s383 = sand.u32 %s35, 1
        %s384 = scalar_lea.sflag [#allocation3], %s383
        %s385 = sand.u32 %s35, 1
        %s386 = smul.addr %s385, 64
        %s387 = scalar_lea.vmem [#allocation2], %s386
        %p388 = pneg %p48
        %p389 = pneg %p45
        %s390 = sand.u32 %s27, 1
        %s391 = scalar_lea.sflag [#allocation5], %s390
        %s392 = sand.u32 %s61, 1
        %s393 = smul.addr %s392, 4
        %s394 = scalar_lea.vmem [#allocation4], %s393
        %p395 = pneg %p74
        %p396 = pneg %p71
        %p397 = pneg %p95
        %p398 = pneg %p92
        %p399 = pneg %p116
        %p400 = pneg %p113
        %p401 = pneg %p137
        %p402 = pneg %p134
        %p403 = pneg %p158
        %p404 = pneg %p155
        %p405 = pneg %p179
        %p406 = pneg %p176
        %p407 = pneg %p200
        %p408 = pneg %p197
        %p409 = pneg %p226
        %p410 = pneg %p223
        %p411 = scmp.lt.s32.totalorder %s27, 1
        %s412 = scalar_select %p411, %s27, 1
        %s413 = smul.addr %s412, 10
        %s414 = smul.addr %s413, 8
        %s415 = scalar_lea.vmem %s8, %s414
        %p416 = scmp.lt.s32.totalorder %s27, 1
        %s417 = scalar_select %p416, %s27, 1
        %s418 = smul.addr %s417, 10
        %s419 = smul.addr %s418, 8
        %s420 = scalar_lea.vmem %s8, %s419
        %v422 = vld [vmem:[%s353] sm:$0xff]
        %v423 = vld [vmem:[%s353 + $0x8] sm:$0xff]
        %v424 = vld [vmem:[%s353 + $0x10] sm:$0xff]
        %v425 = vld [vmem:[%s353 + $0x18] sm:$0xff]
        %v426 = vld [vmem:[%s353 + $0x20] sm:$0xff]
        %v427 = vld [vmem:[%s353 + $0x28] sm:$0xff]
        %v428 = vld [vmem:[%s353 + $0x30] sm:$0xff]
        %v429 = vld [vmem:[%s353 + $0x38] sm:$0xff]
        %v430 = vpack.c.bf16 %v424, %v422
        %v431 = vpack.c.bf16 %v425, %v423
        %v432 = vpack.c.bf16 %v428, %v426
        %v433 = vpack.c.bf16 %v429, %v427
        %v434 = vld [vmem:[#allocation6] sm:$0xff]
        %v435 = vld [vmem:[#allocation6 + $0x8] sm:$0xff]
        %v436 = vld [vmem:[#allocation6 + $0x10] sm:$0xff]
        %v437 = vld [vmem:[#allocation6 + $0x18] sm:$0xff]
        %v438 = vld [vmem:[#allocation6 + $0x20] sm:$0xff]
        %v439 = vld [vmem:[#allocation6 + $0x28] sm:$0xff]
        %v440 = vld [vmem:[#allocation6 + $0x30] sm:$0xff]
        %v441 = vld [vmem:[#allocation6 + $0x38] sm:$0xff]
        %v442 = vld [vmem:[#allocation6 + $0x40] sm:$0xff]
        %v443 = vld [vmem:[#allocation6 + $0x48] sm:$0xff]
        %v444 = vld [vmem:[#allocation6 + $0x50] sm:$0xff]
        %v445 = vld [vmem:[#allocation6 + $0x58] sm:$0xff]
        %v446 = vld [vmem:[#allocation6 + $0x60] sm:$0xff]
        %v447 = vld [vmem:[#allocation6 + $0x68] sm:$0xff]
        %v448 = vld [vmem:[#allocation6 + $0x70] sm:$0xff]
        %v449 = vld [vmem:[#allocation6 + $0x78] sm:$0xff]
        %v450 = vld [vmem:[#allocation6 + $0x80] sm:$0xff]
        %v451 = vld [vmem:[#allocation6 + $0x88] sm:$0xff]
        %v452 = vld [vmem:[#allocation6 + $0x90] sm:$0xff]
        %v453 = vld [vmem:[#allocation6 + $0x98] sm:$0xff]
        %v454 = vld [vmem:[#allocation6 + $0xa0] sm:$0xff]
        %v455 = vld [vmem:[#allocation6 + $0xa8] sm:$0xff]
        %v456 = vld [vmem:[#allocation6 + $0xb0] sm:$0xff]
        %v457 = vld [vmem:[#allocation6 + $0xb8] sm:$0xff]
        %v458 = vld [vmem:[#allocation6 + $0xc0] sm:$0xff]
        %v459 = vld [vmem:[#allocation6 + $0xc8] sm:$0xff]
        %v460 = vld [vmem:[#allocation6 + $0xd0] sm:$0xff]
        %v461 = vld [vmem:[#allocation6 + $0xd8] sm:$0xff]
        %v462 = vld [vmem:[#allocation6 + $0xe0] sm:$0xff]
        %v463 = vld [vmem:[#allocation6 + $0xe8] sm:$0xff]
        %v464 = vld [vmem:[#allocation6 + $0xf0] sm:$0xff]
        %v465 = vld [vmem:[#allocation6 + $0xf8] sm:$0xff]
        %v466 = vld [vmem:[#allocation7] sm:$0x3]
        %v468 = vlaneseq
        %v469 = vshrl.u32 %v468, 7
        %v470 = vsub.s32 0, %v469
        %v471 = vrot.slane %v466, %v470
        %v472 = vlaneseq
        %v473 = vshrl.u32 %v472, 7
        %v474 = vsub.s32 1, %v473
        %v475 = vrot.slane %v466, %v474
        %v510 = vunpack.c.l.b16 %v434
        %v511 = vunpack.c.h.b16 %v434
        %v512 = vunpack.c.l.b16 %v435
        %v513 = vunpack.c.h.b16 %v435
        %v514 = vunpack.c.l.b16 %v436
        %v515 = vunpack.c.h.b16 %v436
        %v516 = vunpack.c.l.b16 %v437
        %v517 = vunpack.c.h.b16 %v437
        %v518 = vunpack.c.l.b16 %v438
        %v519 = vunpack.c.h.b16 %v438
        %v520 = vunpack.c.l.b16 %v439
        %v521 = vunpack.c.h.b16 %v439
        %v522 = vunpack.c.l.b16 %v440
        %v523 = vunpack.c.h.b16 %v440
        %v524 = vunpack.c.l.b16 %v441
        %v525 = vunpack.c.h.b16 %v441
        %v526 = vunpack.c.l.b16 %v442
        %v527 = vunpack.c.h.b16 %v442
        %v528 = vunpack.c.l.b16 %v443
        %v529 = vunpack.c.h.b16 %v443
        %v530 = vunpack.c.l.b16 %v444
        %v531 = vunpack.c.h.b16 %v444
        %v532 = vunpack.c.l.b16 %v445
        %v533 = vunpack.c.h.b16 %v445
        %v534 = vunpack.c.l.b16 %v446
        %v535 = vunpack.c.h.b16 %v446
        %v536 = vunpack.c.l.b16 %v447
        %v537 = vunpack.c.h.b16 %v447
        %v538 = vunpack.c.l.b16 %v448
        %v539 = vunpack.c.h.b16 %v448
        %v540 = vunpack.c.l.b16 %v449
        %v541 = vunpack.c.h.b16 %v449
        %v542 = vunpack.c.l.b16 %v450
        %v543 = vunpack.c.h.b16 %v450
        %v544 = vunpack.c.l.b16 %v451
        %v545 = vunpack.c.h.b16 %v451
        %v546 = vunpack.c.l.b16 %v452
        %v547 = vunpack.c.h.b16 %v452
        %v548 = vunpack.c.l.b16 %v453
        %v549 = vunpack.c.h.b16 %v453
        %v550 = vunpack.c.l.b16 %v454
        %v551 = vunpack.c.h.b16 %v454
        %v552 = vunpack.c.l.b16 %v455
        %v553 = vunpack.c.h.b16 %v455
        %v554 = vunpack.c.l.b16 %v456
        %v555 = vunpack.c.h.b16 %v456
        %v556 = vunpack.c.l.b16 %v457
        %v557 = vunpack.c.h.b16 %v457
        %v558 = vunpack.c.l.b16 %v458
        %v559 = vunpack.c.h.b16 %v458
        %v560 = vunpack.c.l.b16 %v459
        %v561 = vunpack.c.h.b16 %v459
        %v562 = vunpack.c.l.b16 %v460
        %v563 = vunpack.c.h.b16 %v460
        %v564 = vunpack.c.l.b16 %v461
        %v565 = vunpack.c.h.b16 %v461
        %v566 = vunpack.c.l.b16 %v462
        %v567 = vunpack.c.h.b16 %v462
        %v568 = vunpack.c.l.b16 %v463
        %v569 = vunpack.c.h.b16 %v463
        %v570 = vunpack.c.l.b16 %v464
        %v571 = vunpack.c.h.b16 %v464
        %v572 = vunpack.c.l.b16 %v465
        %v573 = vunpack.c.h.b16 %v465
        %v574 = vpack.c.b16 %v512, %v510
        %v575 = vpack.c.b16 %v513, %v511
        %v576 = vpack.c.b16 %v516, %v514
        %v577 = vpack.c.b16 %v517, %v515
        %v578 = vpack.c.b16 %v520, %v518
        %v579 = vpack.c.b16 %v521, %v519
        %v580 = vpack.c.b16 %v524, %v522
        %v581 = vpack.c.b16 %v525, %v523
        %v582 = vpack.c.b16 %v528, %v526
        %v583 = vpack.c.b16 %v529, %v527
        %v584 = vpack.c.b16 %v532, %v530
        %v585 = vpack.c.b16 %v533, %v531
        %v586 = vpack.c.b16 %v536, %v534
        %v587 = vpack.c.b16 %v537, %v535
        %v588 = vpack.c.b16 %v540, %v538
        %v589 = vpack.c.b16 %v541, %v539
        %v590 = vpack.c.b16 %v544, %v542
        %v591 = vpack.c.b16 %v545, %v543
        %v592 = vpack.c.b16 %v548, %v546
        %v593 = vpack.c.b16 %v549, %v547
        %v594 = vpack.c.b16 %v552, %v550
        %v595 = vpack.c.b16 %v553, %v551
        %v596 = vpack.c.b16 %v556, %v554
        %v597 = vpack.c.b16 %v557, %v555
        %v598 = vpack.c.b16 %v560, %v558
        %v599 = vpack.c.b16 %v561, %v559
        %v600 = vpack.c.b16 %v564, %v562
        %v601 = vpack.c.b16 %v565, %v563
        %v602 = vpack.c.b16 %v568, %v566
        %v603 = vpack.c.b16 %v569, %v567
        %v604 = vpack.c.b16 %v572, %v570
        %v605 = vpack.c.b16 %v573, %v571
        %638 = vmatprep.subr.bf16.mxu0 %v575
        %639 = vmatpush1.bf16.msra.mxu0 %v574
        %640 = vmatprep.subr.bf16.mxu0 %v577
        %641 = vmatpush1.bf16.msra.mxu0 %v576
        %642 = vmatprep.subr.bf16.mxu0 %v579
        %643 = vmatpush1.bf16.msra.mxu0 %v578
        %644 = vmatprep.subr.bf16.mxu0 %v581
        %645 = vmatpush1.bf16.msra.mxu0 %v580
        %646 = vmatprep.subr.bf16.mxu0 %v583
        %647 = vmatpush1.bf16.msra.mxu0 %v582
        %648 = vmatprep.subr.bf16.mxu0 %v585
        %649 = vmatpush1.bf16.msra.mxu0 %v584
        %650 = vmatprep.subr.bf16.mxu0 %v587
        %651 = vmatpush1.bf16.msra.mxu0 %v586
        %652 = vmatprep.subr.bf16.mxu0 %v589
        %653 = vmatpush1.bf16.msra.mxu0 %v588
        %654 = vmatprep.subr.bf16.mxu0 %v591
        %655 = vmatpush1.bf16.msra.mxu0 %v590
        %656 = vmatprep.subr.bf16.mxu0 %v593
        %657 = vmatpush1.bf16.msra.mxu0 %v592
        %658 = vmatprep.subr.bf16.mxu0 %v595
        %659 = vmatpush1.bf16.msra.mxu0 %v594
        %660 = vmatprep.subr.bf16.mxu0 %v597
        %661 = vmatpush1.bf16.msra.mxu0 %v596
        %662 = vmatprep.subr.bf16.mxu0 %v599
        %663 = vmatpush1.bf16.msra.mxu0 %v598
        %664 = vmatprep.subr.bf16.mxu0 %v601
        %665 = vmatpush1.bf16.msra.mxu0 %v600
        %666 = vmatprep.subr.bf16.mxu0 %v603
        %667 = vmatpush1.bf16.msra.mxu0 %v602
        %668 = vmatprep.subr.bf16.mxu0 %v605
        %669 = vmatpush1.bf16.msra.mxu0 %v604
        %670 = vmatprep.mubr.bf16.mxu0 %v431
        %671 = vmatmul.mubr.bf16.gmra.mrb[0].mxu0 %v430
        %v672 = vpop.f32.mrb[0].mxu0
        %v673 = vadd.f32 %v471, %v672
        %v674 = vpop.f32.mrb[0].mxu0
        %v675 = vadd.f32 %v475, %v674
        %v676 = vpop.f32.mrb[0].mxu0
        %v677 = vadd.f32 %v471, %v676
        %v678 = vpop.f32.mrb[0].mxu0
        %v679 = vadd.f32 %v475, %v678
        %680 = vmatprep.mubr.bf16.mxu0 %v433
        %681 = vmatmul.mubr.bf16.gmra.mrb[0].mxu0 %v432
        %v682 = vpop.f32.mrb[0].mxu0
        %v683 = vadd.f32 %v471, %v682
        %v684 = vpop.f32.mrb[0].mxu0
        %v685 = vadd.f32 %v475, %v684
        %v686 = vpop.f32.mrb[0].mxu0
        %v687 = vadd.f32 %v471, %v686
        %v688 = vpop.f32.mrb[0].mxu0
        %v689 = vadd.f32 %v475, %v688
        %690 = vdwg.mxu0
        %v691 = vmax.f32 %v673, 0.0
        %v692 = vmax.f32 %v675, 0.0
        %v693 = vmax.f32 %v677, 0.0
        %v694 = vmax.f32 %v679, 0.0
        %v695 = vmax.f32 %v683, 0.0
        %v696 = vmax.f32 %v685, 0.0
        %v697 = vmax.f32 %v687, 0.0
        %v698 = vmax.f32 %v689, 0.0
        %v699 = vpack.c.bf16 %v693, %v691
        %v700 = vpack.c.bf16 %v694, %v692
        %v701 = vpack.c.bf16 %v697, %v695
        %v702 = vpack.c.bf16 %v698, %v696
        %s703 = scalar_lea.vmem [#allocation6], 256
        %v704 = vld [vmem:[%s703] sm:$0xff]
        %v705 = vld [vmem:[%s703 + $0x8] sm:$0xff]
        %v706 = vld [vmem:[%s703 + $0x10] sm:$0xff]
        %v707 = vld [vmem:[%s703 + $0x18] sm:$0xff]
        %v708 = vld [vmem:[%s703 + $0x20] sm:$0xff]
        %v709 = vld [vmem:[%s703 + $0x28] sm:$0xff]
        %v710 = vld [vmem:[%s703 + $0x30] sm:$0xff]
        %v711 = vld [vmem:[%s703 + $0x38] sm:$0xff]
        %v712 = vld [vmem:[%s703 + $0x40] sm:$0xff]
        %v713 = vld [vmem:[%s703 + $0x48] sm:$0xff]
        %v714 = vld [vmem:[%s703 + $0x50] sm:$0xff]
        %v715 = vld [vmem:[%s703 + $0x58] sm:$0xff]
        %v716 = vld [vmem:[%s703 + $0x60] sm:$0xff]
        %v717 = vld [vmem:[%s703 + $0x68] sm:$0xff]
        %v718 = vld [vmem:[%s703 + $0x70] sm:$0xff]
        %v719 = vld [vmem:[%s703 + $0x78] sm:$0xff]
        %v720 = vld [vmem:[%s703 + $0x80] sm:$0xff]
        %v721 = vld [vmem:[%s703 + $0x88] sm:$0xff]
        %v722 = vld [vmem:[%s703 + $0x90] sm:$0xff]
        %v723 = vld [vmem:[%s703 + $0x98] sm:$0xff]
        %v724 = vld [vmem:[%s703 + $0xa0] sm:$0xff]
        %v725 = vld [vmem:[%s703 + $0xa8] sm:$0xff]
        %v726 = vld [vmem:[%s703 + $0xb0] sm:$0xff]
        %v727 = vld [vmem:[%s703 + $0xb8] sm:$0xff]
        %v728 = vld [vmem:[%s703 + $0xc0] sm:$0xff]
        %v729 = vld [vmem:[%s703 + $0xc8] sm:$0xff]
        %v730 = vld [vmem:[%s703 + $0xd0] sm:$0xff]
        %v731 = vld [vmem:[%s703 + $0xd8] sm:$0xff]
        %v732 = vld [vmem:[%s703 + $0xe0] sm:$0xff]
        %v733 = vld [vmem:[%s703 + $0xe8] sm:$0xff]
        %v734 = vld [vmem:[%s703 + $0xf0] sm:$0xff]
        %v735 = vld [vmem:[%s703 + $0xf8] sm:$0xff]
        %s736 = scalar_lea.vmem [#allocation7], 2
        %v737 = vld [vmem:[%s736] sm:$0x3]
        %v739 = vlaneseq
        %v740 = vshrl.u32 %v739, 7
        %v741 = vsub.s32 0, %v740
        %v742 = vrot.slane %v737, %v741
        %v743 = vlaneseq
        %v744 = vshrl.u32 %v743, 7
        %v745 = vsub.s32 1, %v744
        %v746 = vrot.slane %v737, %v745
        %v781 = vunpack.c.l.b16 %v704
        %v782 = vunpack.c.h.b16 %v704
        %v783 = vunpack.c.l.b16 %v705
        %v784 = vunpack.c.h.b16 %v705
        %v785 = vunpack.c.l.b16 %v706
        %v786 = vunpack.c.h.b16 %v706
        %v787 = vunpack.c.l.b16 %v707
        %v788 = vunpack.c.h.b16 %v707
        %v789 = vunpack.c.l.b16 %v708
        %v790 = vunpack.c.h.b16 %v708
        %v791 = vunpack.c.l.b16 %v709
        %v792 = vunpack.c.h.b16 %v709
        %v793 = vunpack.c.l.b16 %v710
        %v794 = vunpack.c.h.b16 %v710
        %v795 = vunpack.c.l.b16 %v711
        %v796 = vunpack.c.h.b16 %v711
        %v797 = vunpack.c.l.b16 %v712
        %v798 = vunpack.c.h.b16 %v712
        %v799 = vunpack.c.l.b16 %v713
        %v800 = vunpack.c.h.b16 %v713
        %v801 = vunpack.c.l.b16 %v714
        %v802 = vunpack.c.h.b16 %v714
        %v803 = vunpack.c.l.b16 %v715
        %v804 = vunpack.c.h.b16 %v715
        %v805 = vunpack.c.l.b16 %v716
        %v806 = vunpack.c.h.b16 %v716
        %v807 = vunpack.c.l.b16 %v717
        %v808 = vunpack.c.h.b16 %v717
        %v809 = vunpack.c.l.b16 %v718
        %v810 = vunpack.c.h.b16 %v718
        %v811 = vunpack.c.l.b16 %v719
        %v812 = vunpack.c.h.b16 %v719
        %v813 = vunpack.c.l.b16 %v720
        %v814 = vunpack.c.h.b16 %v720
        %v815 = vunpack.c.l.b16 %v721
        %v816 = vunpack.c.h.b16 %v721
        %v817 = vunpack.c.l.b16 %v722
        %v818 = vunpack.c.h.b16 %v722
        %v819 = vunpack.c.l.b16 %v723
        %v820 = vunpack.c.h.b16 %v723
        %v821 = vunpack.c.l.b16 %v724
        %v822 = vunpack.c.h.b16 %v724
        %v823 = vunpack.c.l.b16 %v725
        %v824 = vunpack.c.h.b16 %v725
        %v825 = vunpack.c.l.b16 %v726
        %v826 = vunpack.c.h.b16 %v726
        %v827 = vunpack.c.l.b16 %v727
        %v828 = vunpack.c.h.b16 %v727
        %v829 = vunpack.c.l.b16 %v728
        %v830 = vunpack.c.h.b16 %v728
        %v831 = vunpack.c.l.b16 %v729
        %v832 = vunpack.c.h.b16 %v729
        %v833 = vunpack.c.l.b16 %v730
        %v834 = vunpack.c.h.b16 %v730
        %v835 = vunpack.c.l.b16 %v731
        %v836 = vunpack.c.h.b16 %v731
        %v837 = vunpack.c.l.b16 %v732
        %v838 = vunpack.c.h.b16 %v732
        %v839 = vunpack.c.l.b16 %v733
        %v840 = vunpack.c.h.b16 %v733
        %v841 = vunpack.c.l.b16 %v734
        %v842 = vunpack.c.h.b16 %v734
        %v843 = vunpack.c.l.b16 %v735
        %v844 = vunpack.c.h.b16 %v735
        %v845 = vpack.c.b16 %v783, %v781
        %v846 = vpack.c.b16 %v784, %v782
        %v847 = vpack.c.b16 %v787, %v785
        %v848 = vpack.c.b16 %v788, %v786
        %v849 = vpack.c.b16 %v791, %v789
        %v850 = vpack.c.b16 %v792, %v790
        %v851 = vpack.c.b16 %v795, %v793
        %v852 = vpack.c.b16 %v796, %v794
        %v853 = vpack.c.b16 %v799, %v797
        %v854 = vpack.c.b16 %v800, %v798
        %v855 = vpack.c.b16 %v803, %v801
        %v856 = vpack.c.b16 %v804, %v802
        %v857 = vpack.c.b16 %v807, %v805
        %v858 = vpack.c.b16 %v808, %v806
        %v859 = vpack.c.b16 %v811, %v809
        %v860 = vpack.c.b16 %v812, %v810
        %v861 = vpack.c.b16 %v815, %v813
        %v862 = vpack.c.b16 %v816, %v814
        %v863 = vpack.c.b16 %v819, %v817
        %v864 = vpack.c.b16 %v820, %v818
        %v865 = vpack.c.b16 %v823, %v821
        %v866 = vpack.c.b16 %v824, %v822
        %v867 = vpack.c.b16 %v827, %v825
        %v868 = vpack.c.b16 %v828, %v826
        %v869 = vpack.c.b16 %v831, %v829
        %v870 = vpack.c.b16 %v832, %v830
        %v871 = vpack.c.b16 %v835, %v833
        %v872 = vpack.c.b16 %v836, %v834
        %v873 = vpack.c.b16 %v839, %v837
        %v874 = vpack.c.b16 %v840, %v838
        %v875 = vpack.c.b16 %v843, %v841
        %v876 = vpack.c.b16 %v844, %v842
        %909 = vmatprep.subr.bf16.mxu0 %v846
        %910 = vmatpush1.bf16.msra.mxu0 %v845
        %911 = vmatprep.subr.bf16.mxu0 %v848
        %912 = vmatpush1.bf16.msra.mxu0 %v847
        %913 = vmatprep.subr.bf16.mxu0 %v850
        %914 = vmatpush1.bf16.msra.mxu0 %v849
        %915 = vmatprep.subr.bf16.mxu0 %v852
        %916 = vmatpush1.bf16.msra.mxu0 %v851
        %917 = vmatprep.subr.bf16.mxu0 %v854
        %918 = vmatpush1.bf16.msra.mxu0 %v853
        %919 = vmatprep.subr.bf16.mxu0 %v856
        %920 = vmatpush1.bf16.msra.mxu0 %v855
        %921 = vmatprep.subr.bf16.mxu0 %v858
        %922 = vmatpush1.bf16.msra.mxu0 %v857
        %923 = vmatprep.subr.bf16.mxu0 %v860
        %924 = vmatpush1.bf16.msra.mxu0 %v859
        %925 = vmatprep.subr.bf16.mxu0 %v862
        %926 = vmatpush1.bf16.msra.mxu0 %v861
        %927 = vmatprep.subr.bf16.mxu0 %v864
        %928 = vmatpush1.bf16.msra.mxu0 %v863
        %929 = vmatprep.subr.bf16.mxu0 %v866
        %930 = vmatpush1.bf16.msra.mxu0 %v865
        %931 = vmatprep.subr.bf16.mxu0 %v868
        %932 = vmatpush1.bf16.msra.mxu0 %v867
        %933 = vmatprep.subr.bf16.mxu0 %v870
        %934 = vmatpush1.bf16.msra.mxu0 %v869
        %935 = vmatprep.subr.bf16.mxu0 %v872
        %936 = vmatpush1.bf16.msra.mxu0 %v871
        %937 = vmatprep.subr.bf16.mxu0 %v874
        %938 = vmatpush1.bf16.msra.mxu0 %v873
        %939 = vmatprep.subr.bf16.mxu0 %v876
        %940 = vmatpush1.bf16.msra.mxu0 %v875
        %941 = vmatprep.mubr.bf16.mxu0 %v700
        %942 = vmatmul.mubr.bf16.gmra.mrb[0].mxu0 %v699
        %v943 = vpop.f32.mrb[0].mxu0
        %v944 = vadd.f32 %v742, %v943
        %v945 = vpop.f32.mrb[0].mxu0
        %v946 = vadd.f32 %v746, %v945
        %v947 = vpop.f32.mrb[0].mxu0
        %v948 = vadd.f32 %v742, %v947
        %v949 = vpop.f32.mrb[0].mxu0
        %v950 = vadd.f32 %v746, %v949
        %951 = vmatprep.mubr.bf16.mxu0 %v702
        %952 = vmatmul.mubr.bf16.gmra.mrb[0].mxu0 %v701
        %v953 = vpop.f32.mrb[0].mxu0
        %v954 = vadd.f32 %v742, %v953
        %v955 = vpop.f32.mrb[0].mxu0
        %v956 = vadd.f32 %v746, %v955
        %v957 = vpop.f32.mrb[0].mxu0
        %v958 = vadd.f32 %v742, %v957
        %v959 = vpop.f32.mrb[0].mxu0
        %v960 = vadd.f32 %v746, %v959
        %961 = vdwg.mxu0
        %v962 = vmax.f32 %v944, 0.0
        %v963 = vmax.f32 %v946, 0.0
        %v964 = vmax.f32 %v948, 0.0
        %v965 = vmax.f32 %v950, 0.0
        %v966 = vmax.f32 %v954, 0.0
        %v967 = vmax.f32 %v956, 0.0
        %v968 = vmax.f32 %v958, 0.0
        %v969 = vmax.f32 %v960, 0.0
        %v970 = vpack.c.bf16 %v964, %v962
        %v971 = vpack.c.bf16 %v965, %v963
        %v972 = vpack.c.bf16 %v968, %v966
        %v973 = vpack.c.bf16 %v969, %v967
        %s974 = scalar_lea.vmem [#allocation6], 512
        %v975 = vld [vmem:[%s974] sm:$0xff]
        %v976 = vld [vmem:[%s974 + $0x8] sm:$0xff]
        %v977 = vld [vmem:[%s974 + $0x10] sm:$0xff]
        %v978 = vld [vmem:[%s974 + $0x18] sm:$0xff]
        %v979 = vld [vmem:[%s974 + $0x20] sm:$0xff]
        %v980 = vld [vmem:[%s974 + $0x28] sm:$0xff]
        %v981 = vld [vmem:[%s974 + $0x30] sm:$0xff]
        %v982 = vld [vmem:[%s974 + $0x38] sm:$0xff]
        %v983 = vld [vmem:[%s974 + $0x40] sm:$0xff]
        %v984 = vld [vmem:[%s974 + $0x48] sm:$0xff]
        %v985 = vld [vmem:[%s974 + $0x50] sm:$0xff]
        %v986 = vld [vmem:[%s974 + $0x58] sm:$0xff]
        %v987 = vld [vmem:[%s974 + $0x60] sm:$0xff]
        %v988 = vld [vmem:[%s974 + $0x68] sm:$0xff]
        %v989 = vld [vmem:[%s974 + $0x70] sm:$0xff]
        %v990 = vld [vmem:[%s974 + $0x78] sm:$0xff]
        %v991 = vld [vmem:[%s974 + $0x80] sm:$0xff]
        %v992 = vld [vmem:[%s974 + $0x88] sm:$0xff]
        %v993 = vld [vmem:[%s974 + $0x90] sm:$0xff]
        %v994 = vld [vmem:[%s974 + $0x98] sm:$0xff]
        %v995 = vld [vmem:[%s974 + $0xa0] sm:$0xff]
        %v996 = vld [vmem:[%s974 + $0xa8] sm:$0xff]
        %v997 = vld [vmem:[%s974 + $0xb0] sm:$0xff]
        %v998 = vld [vmem:[%s974 + $0xb8] sm:$0xff]
        %v999 = vld [vmem:[%s974 + $0xc0] sm:$0xff]
        %v1000 = vld [vmem:[%s974 + $0xc8] sm:$0xff]
        %v1001 = vld [vmem:[%s974 + $0xd0] sm:$0xff]
        %v1002 = vld [vmem:[%s974 + $0xd8] sm:$0xff]
        %v1003 = vld [vmem:[%s974 + $0xe0] sm:$0xff]
        %v1004 = vld [vmem:[%s974 + $0xe8] sm:$0xff]
        %v1005 = vld [vmem:[%s974 + $0xf0] sm:$0xff]
        %v1006 = vld [vmem:[%s974 + $0xf8] sm:$0xff]
        %s1007 = scalar_lea.vmem [#allocation7], 4
        %v1008 = vld [vmem:[%s1007] sm:$0x3]
        %v1010 = vlaneseq
        %v1011 = vshrl.u32 %v1010, 7
        %v1012 = vsub.s32 0, %v1011
        %v1013 = vrot.slane %v1008, %v1012
        %v1014 = vlaneseq
        %v1015 = vshrl.u32 %v1014, 7
        %v1016 = vsub.s32 1, %v1015
        %v1017 = vrot.slane %v1008, %v1016
        %v1052 = vunpack.c.l.b16 %v975
        %v1053 = vunpack.c.h.b16 %v975
        %v1054 = vunpack.c.l.b16 %v976
        %v1055 = vunpack.c.h.b16 %v976
        %v1056 = vunpack.c.l.b16 %v977
        %v1057 = vunpack.c.h.b16 %v977
        %v1058 = vunpack.c.l.b16 %v978
        %v1059 = vunpack.c.h.b16 %v978
        %v1060 = vunpack.c.l.b16 %v979
        %v1061 = vunpack.c.h.b16 %v979
        %v1062 = vunpack.c.l.b16 %v980
        %v1063 = vunpack.c.h.b16 %v980
        %v1064 = vunpack.c.l.b16 %v981
        %v1065 = vunpack.c.h.b16 %v981
        %v1066 = vunpack.c.l.b16 %v982
        %v1067 = vunpack.c.h.b16 %v982
        %v1068 = vunpack.c.l.b16 %v983
        %v1069 = vunpack.c.h.b16 %v983
        %v1070 = vunpack.c.l.b16 %v984
        %v1071 = vunpack.c.h.b16 %v984
        %v1072 = vunpack.c.l.b16 %v985
        %v1073 = vunpack.c.h.b16 %v985
        %v1074 = vunpack.c.l.b16 %v986
        %v1075 = vunpack.c.h.b16 %v986
        %v1076 = vunpack.c.l.b16 %v987
        %v1077 = vunpack.c.h.b16 %v987
        %v1078 = vunpack.c.l.b16 %v988
        %v1079 = vunpack.c.h.b16 %v988
        %v1080 = vunpack.c.l.b16 %v989
        %v1081 = vunpack.c.h.b16 %v989
        %v1082 = vunpack.c.l.b16 %v990
        %v1083 = vunpack.c.h.b16 %v990
        %v1084 = vunpack.c.l.b16 %v991
        %v1085 = vunpack.c.h.b16 %v991
        %v1086 = vunpack.c.l.b16 %v992
        %v1087 = vunpack.c.h.b16 %v992
        %v1088 = vunpack.c.l.b16 %v993
        %v1089 = vunpack.c.h.b16 %v993
        %v1090 = vunpack.c.l.b16 %v994
        %v1091 = vunpack.c.h.b16 %v994
        %v1092 = vunpack.c.l.b16 %v995
        %v1093 = vunpack.c.h.b16 %v995
        %v1094 = vunpack.c.l.b16 %v996
        %v1095 = vunpack.c.h.b16 %v996
        %v1096 = vunpack.c.l.b16 %v997
        %v1097 = vunpack.c.h.b16 %v997
        %v1098 = vunpack.c.l.b16 %v998
        %v1099 = vunpack.c.h.b16 %v998
        %v1100 = vunpack.c.l.b16 %v999
        %v1101 = vunpack.c.h.b16 %v999
        %v1102 = vunpack.c.l.b16 %v1000
        %v1103 = vunpack.c.h.b16 %v1000
        %v1104 = vunpack.c.l.b16 %v1001
        %v1105 = vunpack.c.h.b16 %v1001
        %v1106 = vunpack.c.l.b16 %v1002
        %v1107 = vunpack.c.h.b16 %v1002
        %v1108 = vunpack.c.l.b16 %v1003
        %v1109 = vunpack.c.h.b16 %v1003
        %v1110 = vunpack.c.l.b16 %v1004
        %v1111 = vunpack.c.h.b16 %v1004
        %v1112 = vunpack.c.l.b16 %v1005
        %v1113 = vunpack.c.h.b16 %v1005
        %v1114 = vunpack.c.l.b16 %v1006
        %v1115 = vunpack.c.h.b16 %v1006
        %v1116 = vpack.c.b16 %v1054, %v1052
        %v1117 = vpack.c.b16 %v1055, %v1053
        %v1118 = vpack.c.b16 %v1058, %v1056
        %v1119 = vpack.c.b16 %v1059, %v1057
        %v1120 = vpack.c.b16 %v1062, %v1060
        %v1121 = vpack.c.b16 %v1063, %v1061
        %v1122 = vpack.c.b16 %v1066, %v1064
        %v1123 = vpack.c.b16 %v1067, %v1065
        %v1124 = vpack.c.b16 %v1070, %v1068
        %v1125 = vpack.c.b16 %v1071, %v1069
        %v1126 = vpack.c.b16 %v1074, %v1072
        %v1127 = vpack.c.b16 %v1075, %v1073
        %v1128 = vpack.c.b16 %v1078, %v1076
        %v1129 = vpack.c.b16 %v1079, %v1077
        %v1130 = vpack.c.b16 %v1082, %v1080
        %v1131 = vpack.c.b16 %v1083, %v1081
        %v1132 = vpack.c.b16 %v1086, %v1084
        %v1133 = vpack.c.b16 %v1087, %v1085
        %v1134 = vpack.c.b16 %v1090, %v1088
        %v1135 = vpack.c.b16 %v1091, %v1089
        %v1136 = vpack.c.b16 %v1094, %v1092
        %v1137 = vpack.c.b16 %v1095, %v1093
        %v1138 = vpack.c.b16 %v1098, %v1096
        %v1139 = vpack.c.b16 %v1099, %v1097
        %v1140 = vpack.c.b16 %v1102, %v1100
        %v1141 = vpack.c.b16 %v1103, %v1101
        %v1142 = vpack.c.b16 %v1106, %v1104
        %v1143 = vpack.c.b16 %v1107, %v1105
        %v1144 = vpack.c.b16 %v1110, %v1108
        %v1145 = vpack.c.b16 %v1111, %v1109
        %v1146 = vpack.c.b16 %v1114, %v1112
        %v1147 = vpack.c.b16 %v1115, %v1113
        %1180 = vmatprep.subr.bf16.mxu0 %v1117
        %1181 = vmatpush1.bf16.msra.mxu0 %v1116
        %1182 = vmatprep.subr.bf16.mxu0 %v1119
        %1183 = vmatpush1.bf16.msra.mxu0 %v1118
        %1184 = vmatprep.subr.bf16.mxu0 %v1121
        %1185 = vmatpush1.bf16.msra.mxu0 %v1120
        %1186 = vmatprep.subr.bf16.mxu0 %v1123
        %1187 = vmatpush1.bf16.msra.mxu0 %v1122
        %1188 = vmatprep.subr.bf16.mxu0 %v1125
        %1189 = vmatpush1.bf16.msra.mxu0 %v1124
        %1190 = vmatprep.subr.bf16.mxu0 %v1127
        %1191 = vmatpush1.bf16.msra.mxu0 %v1126
        %1192 = vmatprep.subr.bf16.mxu0 %v1129
        %1193 = vmatpush1.bf16.msra.mxu0 %v1128
        %1194 = vmatprep.subr.bf16.mxu0 %v1131
        %1195 = vmatpush1.bf16.msra.mxu0 %v1130
        %1196 = vmatprep.subr.bf16.mxu0 %v1133
        %1197 = vmatpush1.bf16.msra.mxu0 %v1132
        %1198 = vmatprep.subr.bf16.mxu0 %v1135
        %1199 = vmatpush1.bf16.msra.mxu0 %v1134
        %1200 = vmatprep.subr.bf16.mxu0 %v1137
        %1201 = vmatpush1.bf16.msra.mxu0 %v1136
        %1202 = vmatprep.subr.bf16.mxu0 %v1139
        %1203 = vmatpush1.bf16.msra.mxu0 %v1138
        %1204 = vmatprep.subr.bf16.mxu0 %v1141
        %1205 = vmatpush1.bf16.msra.mxu0 %v1140
        %1206 = vmatprep.subr.bf16.mxu0 %v1143
        %1207 = vmatpush1.bf16.msra.mxu0 %v1142
        %1208 = vmatprep.subr.bf16.mxu0 %v1145
        %1209 = vmatpush1.bf16.msra.mxu0 %v1144
        %1210 = vmatprep.subr.bf16.mxu0 %v1147
        %1211 = vmatpush1.bf16.msra.mxu0 %v1146
        %1212 = vmatprep.mubr.bf16.mxu0 %v971
        %1213 = vmatmul.mubr.bf16.gmra.mrb[0].mxu0 %v970
        %v1214 = vpop.f32.mrb[0].mxu0
        %v1215 = vadd.f32 %v1013, %v1214
        %v1216 = vpop.f32.mrb[0].mxu0
        %v1217 = vadd.f32 %v1017, %v1216
        %v1218 = vpop.f32.mrb[0].mxu0
        %v1219 = vadd.f32 %v1013, %v1218
        %v1220 = vpop.f32.mrb[0].mxu0
        %v1221 = vadd.f32 %v1017, %v1220
        %1222 = vmatprep.mubr.bf16.mxu0 %v973
        %1223 = vmatmul.mubr.bf16.gmra.mrb[0].mxu0 %v972
        %v1224 = vpop.f32.mrb[0].mxu0
        %v1225 = vadd.f32 %v1013, %v1224
        %v1226 = vpop.f32.mrb[0].mxu0
        %v1227 = vadd.f32 %v1017, %v1226
        %v1228 = vpop.f32.mrb[0].mxu0
        %v1229 = vadd.f32 %v1013, %v1228
        %v1230 = vpop.f32.mrb[0].mxu0
        %v1231 = vadd.f32 %v1017, %v1230
        %1232 = vdwg.mxu0
        %v1233 = vmax.f32 %v1215, 0.0
        %v1234 = vmax.f32 %v1217, 0.0
        %v1235 = vmax.f32 %v1219, 0.0
        %v1236 = vmax.f32 %v1221, 0.0
        %v1237 = vmax.f32 %v1225, 0.0
        %v1238 = vmax.f32 %v1227, 0.0
        %v1239 = vmax.f32 %v1229, 0.0
        %v1240 = vmax.f32 %v1231, 0.0
        %v1241 = vpack.c.bf16 %v1235, %v1233
        %v1242 = vpack.c.bf16 %v1236, %v1234
        %v1243 = vpack.c.bf16 %v1239, %v1237
        %v1244 = vpack.c.bf16 %v1240, %v1238
        %s1245 = scalar_lea.vmem [#allocation6], 768
        %v1246 = vld [vmem:[%s1245] sm:$0xff]
        %v1247 = vld [vmem:[%s1245 + $0x8] sm:$0xff]
        %v1248 = vld [vmem:[%s1245 + $0x10] sm:$0xff]
        %v1249 = vld [vmem:[%s1245 + $0x18] sm:$0xff]
        %v1250 = vld [vmem:[%s1245 + $0x20] sm:$0xff]
        %v1251 = vld [vmem:[%s1245 + $0x28] sm:$0xff]
        %v1252 = vld [vmem:[%s1245 + $0x30] sm:$0xff]
        %v1253 = vld [vmem:[%s1245 + $0x38] sm:$0xff]
        %v1254 = vld [vmem:[%s1245 + $0x40] sm:$0xff]
        %v1255 = vld [vmem:[%s1245 + $0x48] sm:$0xff]
        %v1256 = vld [vmem:[%s1245 + $0x50] sm:$0xff]
        %v1257 = vld [vmem:[%s1245 + $0x58] sm:$0xff]
        %v1258 = vld [vmem:[%s1245 + $0x60] sm:$0xff]
        %v1259 = vld [vmem:[%s1245 + $0x68] sm:$0xff]
        %v1260 = vld [vmem:[%s1245 + $0x70] sm:$0xff]
        %v1261 = vld [vmem:[%s1245 + $0x78] sm:$0xff]
        %v1262 = vld [vmem:[%s1245 + $0x80] sm:$0xff]
        %v1263 = vld [vmem:[%s1245 + $0x88] sm:$0xff]
        %v1264 = vld [vmem:[%s1245 + $0x90] sm:$0xff]
        %v1265 = vld [vmem:[%s1245 + $0x98] sm:$0xff]
        %v1266 = vld [vmem:[%s1245 + $0xa0] sm:$0xff]
        %v1267 = vld [vmem:[%s1245 + $0xa8] sm:$0xff]
        %v1268 = vld [vmem:[%s1245 + $0xb0] sm:$0xff]
        %v1269 = vld [vmem:[%s1245 + $0xb8] sm:$0xff]
        %v1270 = vld [vmem:[%s1245 + $0xc0] sm:$0xff]
        %v1271 = vld [vmem:[%s1245 + $0xc8] sm:$0xff]
        %v1272 = vld [vmem:[%s1245 + $0xd0] sm:$0xff]
        %v1273 = vld [vmem:[%s1245 + $0xd8] sm:$0xff]
        %v1274 = vld [vmem:[%s1245 + $0xe0] sm:$0xff]
        %v1275 = vld [vmem:[%s1245 + $0xe8] sm:$0xff]
        %v1276 = vld [vmem:[%s1245 + $0xf0] sm:$0xff]
        %v1277 = vld [vmem:[%s1245 + $0xf8] sm:$0xff]
        %s1278 = scalar_lea.vmem [#allocation7], 6
        %v1279 = vld [vmem:[%s1278] sm:$0x3]
        %v1281 = vlaneseq
        %v1282 = vshrl.u32 %v1281, 7
        %v1283 = vsub.s32 0, %v1282
        %v1284 = vrot.slane %v1279, %v1283
        %v1285 = vlaneseq
        %v1286 = vshrl.u32 %v1285, 7
        %v1287 = vsub.s32 1, %v1286
        %v1288 = vrot.slane %v1279, %v1287
        %v1323 = vunpack.c.l.b16 %v1246
        %v1324 = vunpack.c.h.b16 %v1246
        %v1325 = vunpack.c.l.b16 %v1247
        %v1326 = vunpack.c.h.b16 %v1247
        %v1327 = vunpack.c.l.b16 %v1248
        %v1328 = vunpack.c.h.b16 %v1248
        %v1329 = vunpack.c.l.b16 %v1249
        %v1330 = vunpack.c.h.b16 %v1249
        %v1331 = vunpack.c.l.b16 %v1250
        %v1332 = vunpack.c.h.b16 %v1250
        %v1333 = vunpack.c.l.b16 %v1251
        %v1334 = vunpack.c.h.b16 %v1251
        %v1335 = vunpack.c.l.b16 %v1252
        %v1336 = vunpack.c.h.b16 %v1252
        %v1337 = vunpack.c.l.b16 %v1253
        %v1338 = vunpack.c.h.b16 %v1253
        %v1339 = vunpack.c.l.b16 %v1254
        %v1340 = vunpack.c.h.b16 %v1254
        %v1341 = vunpack.c.l.b16 %v1255
        %v1342 = vunpack.c.h.b16 %v1255
        %v1343 = vunpack.c.l.b16 %v1256
        %v1344 = vunpack.c.h.b16 %v1256
        %v1345 = vunpack.c.l.b16 %v1257
        %v1346 = vunpack.c.h.b16 %v1257
        %v1347 = vunpack.c.l.b16 %v1258
        %v1348 = vunpack.c.h.b16 %v1258
        %v1349 = vunpack.c.l.b16 %v1259
        %v1350 = vunpack.c.h.b16 %v1259
        %v1351 = vunpack.c.l.b16 %v1260
        %v1352 = vunpack.c.h.b16 %v1260
        %v1353 = vunpack.c.l.b16 %v1261
        %v1354 = vunpack.c.h.b16 %v1261
        %v1355 = vunpack.c.l.b16 %v1262
        %v1356 = vunpack.c.h.b16 %v1262
        %v1357 = vunpack.c.l.b16 %v1263
        %v1358 = vunpack.c.h.b16 %v1263
        %v1359 = vunpack.c.l.b16 %v1264
        %v1360 = vunpack.c.h.b16 %v1264
        %v1361 = vunpack.c.l.b16 %v1265
        %v1362 = vunpack.c.h.b16 %v1265
        %v1363 = vunpack.c.l.b16 %v1266
        %v1364 = vunpack.c.h.b16 %v1266
        %v1365 = vunpack.c.l.b16 %v1267
        %v1366 = vunpack.c.h.b16 %v1267
        %v1367 = vunpack.c.l.b16 %v1268
        %v1368 = vunpack.c.h.b16 %v1268
        %v1369 = vunpack.c.l.b16 %v1269
        %v1370 = vunpack.c.h.b16 %v1269
        %v1371 = vunpack.c.l.b16 %v1270
        %v1372 = vunpack.c.h.b16 %v1270
        %v1373 = vunpack.c.l.b16 %v1271
        %v1374 = vunpack.c.h.b16 %v1271
        %v1375 = vunpack.c.l.b16 %v1272
        %v1376 = vunpack.c.h.b16 %v1272
        %v1377 = vunpack.c.l.b16 %v1273
        %v1378 = vunpack.c.h.b16 %v1273
        %v1379 = vunpack.c.l.b16 %v1274
        %v1380 = vunpack.c.h.b16 %v1274
        %v1381 = vunpack.c.l.b16 %v1275
        %v1382 = vunpack.c.h.b16 %v1275
        %v1383 = vunpack.c.l.b16 %v1276
        %v1384 = vunpack.c.h.b16 %v1276
        %v1385 = vunpack.c.l.b16 %v1277
        %v1386 = vunpack.c.h.b16 %v1277
        %v1387 = vpack.c.b16 %v1325, %v1323
        %v1388 = vpack.c.b16 %v1326, %v1324
        %v1389 = vpack.c.b16 %v1329, %v1327
        %v1390 = vpack.c.b16 %v1330, %v1328
        %v1391 = vpack.c.b16 %v1333, %v1331
        %v1392 = vpack.c.b16 %v1334, %v1332
        %v1393 = vpack.c.b16 %v1337, %v1335
        %v1394 = vpack.c.b16 %v1338, %v1336
        %v1395 = vpack.c.b16 %v1341, %v1339
        %v1396 = vpack.c.b16 %v1342, %v1340
        %v1397 = vpack.c.b16 %v1345, %v1343
        %v1398 = vpack.c.b16 %v1346, %v1344
        %v1399 = vpack.c.b16 %v1349, %v1347
        %v1400 = vpack.c.b16 %v1350, %v1348
        %v1401 = vpack.c.b16 %v1353, %v1351
        %v1402 = vpack.c.b16 %v1354, %v1352
        %v1403 = vpack.c.b16 %v1357, %v1355
        %v1404 = vpack.c.b16 %v1358, %v1356
        %v1405 = vpack.c.b16 %v1361, %v1359
        %v1406 = vpack.c.b16 %v1362, %v1360
        %v1407 = vpack.c.b16 %v1365, %v1363
        %v1408 = vpack.c.b16 %v1366, %v1364
        %v1409 = vpack.c.b16 %v1369, %v1367
        %v1410 = vpack.c.b16 %v1370, %v1368
        %v1411 = vpack.c.b16 %v1373, %v1371
        %v1412 = vpack.c.b16 %v1374, %v1372
        %v1413 = vpack.c.b16 %v1377, %v1375
        %v1414 = vpack.c.b16 %v1378, %v1376
        %v1415 = vpack.c.b16 %v1381, %v1379
        %v1416 = vpack.c.b16 %v1382, %v1380
        %v1417 = vpack.c.b16 %v1385, %v1383
        %v1418 = vpack.c.b16 %v1386, %v1384
        %1451 = vmatprep.subr.bf16.mxu0 %v1388
        %1452 = vmatpush1.bf16.msra.mxu0 %v1387
        %1453 = vmatprep.subr.bf16.mxu0 %v1390
        %1454 = vmatpush1.bf16.msra.mxu0 %v1389
        %1455 = vmatprep.subr.bf16.mxu0 %v1392
        %1456 = vmatpush1.bf16.msra.mxu0 %v1391
        %1457 = vmatprep.subr.bf16.mxu0 %v1394
        %1458 = vmatpush1.bf16.msra.mxu0 %v1393
        %1459 = vmatprep.subr.bf16.mxu0 %v1396
        %1460 = vmatpush1.bf16.msra.mxu0 %v1395
        %1461 = vmatprep.subr.bf16.mxu0 %v1398
        %1462 = vmatpush1.bf16.msra.mxu0 %v1397
        %1463 = vmatprep.subr.bf16.mxu0 %v1400
        %1464 = vmatpush1.bf16.msra.mxu0 %v1399
        %1465 = vmatprep.subr.bf16.mxu0 %v1402
        %1466 = vmatpush1.bf16.msra.mxu0 %v1401
        %1467 = vmatprep.subr.bf16.mxu0 %v1404
        %1468 = vmatpush1.bf16.msra.mxu0 %v1403
        %1469 = vmatprep.subr.bf16.mxu0 %v1406
        %1470 = vmatpush1.bf16.msra.mxu0 %v1405
        %1471 = vmatprep.subr.bf16.mxu0 %v1408
        %1472 = vmatpush1.bf16.msra.mxu0 %v1407
        %1473 = vmatprep.subr.bf16.mxu0 %v1410
        %1474 = vmatpush1.bf16.msra.mxu0 %v1409
        %1475 = vmatprep.subr.bf16.mxu0 %v1412
        %1476 = vmatpush1.bf16.msra.mxu0 %v1411
        %1477 = vmatprep.subr.bf16.mxu0 %v1414
        %1478 = vmatpush1.bf16.msra.mxu0 %v1413
        %1479 = vmatprep.subr.bf16.mxu0 %v1416
        %1480 = vmatpush1.bf16.msra.mxu0 %v1415
        %1481 = vmatprep.subr.bf16.mxu0 %v1418
        %1482 = vmatpush1.bf16.msra.mxu0 %v1417
        %1483 = vmatprep.mubr.bf16.mxu0 %v1242
        %1484 = vmatmul.mubr.bf16.gmra.mrb[0].mxu0 %v1241
        %v1485 = vpop.f32.mrb[0].mxu0
        %v1486 = vadd.f32 %v1284, %v1485
        %v1487 = vpop.f32.mrb[0].mxu0
        %v1488 = vadd.f32 %v1288, %v1487
        %v1489 = vpop.f32.mrb[0].mxu0
        %v1490 = vadd.f32 %v1284, %v1489
        %v1491 = vpop.f32.mrb[0].mxu0
        %v1492 = vadd.f32 %v1288, %v1491
        %1493 = vmatprep.mubr.bf16.mxu0 %v1244
        %1494 = vmatmul.mubr.bf16.gmra.mrb[0].mxu0 %v1243
        %v1495 = vpop.f32.mrb[0].mxu0
        %v1496 = vadd.f32 %v1284, %v1495
        %v1497 = vpop.f32.mrb[0].mxu0
        %v1498 = vadd.f32 %v1288, %v1497
        %v1499 = vpop.f32.mrb[0].mxu0
        %v1500 = vadd.f32 %v1284, %v1499
        %v1501 = vpop.f32.mrb[0].mxu0
        %v1502 = vadd.f32 %v1288, %v1501
        %1503 = vdwg.mxu0
        %v1504 = vmax.f32 %v1486, 0.0
        %v1505 = vmax.f32 %v1488, 0.0
        %v1506 = vmax.f32 %v1490, 0.0
        %v1507 = vmax.f32 %v1492, 0.0
        %v1508 = vmax.f32 %v1496, 0.0
        %v1509 = vmax.f32 %v1498, 0.0
        %v1510 = vmax.f32 %v1500, 0.0
        %v1511 = vmax.f32 %v1502, 0.0
        %v1512 = vpack.c.bf16 %v1506, %v1504
        %v1513 = vpack.c.bf16 %v1507, %v1505
        %v1514 = vpack.c.bf16 %v1510, %v1508
        %v1515 = vpack.c.bf16 %v1511, %v1509
        %s1516 = scalar_lea.vmem [#allocation6], 1024
        %v1517 = vld [vmem:[%s1516] sm:$0xff]
        %v1518 = vld [vmem:[%s1516 + $0x8] sm:$0xff]
        %v1519 = vld [vmem:[%s1516 + $0x10] sm:$0xff]
        %v1520 = vld [vmem:[%s1516 + $0x18] sm:$0xff]
        %v1521 = vld [vmem:[%s1516 + $0x20] sm:$0xff]
        %v1522 = vld [vmem:[%s1516 + $0x28] sm:$0xff]
        %v1523 = vld [vmem:[%s1516 + $0x30] sm:$0xff]
        %v1524 = vld [vmem:[%s1516 + $0x38] sm:$0xff]
        %v1525 = vld [vmem:[%s1516 + $0x40] sm:$0xff]
        %v1526 = vld [vmem:[%s1516 + $0x48] sm:$0xff]
        %v1527 = vld [vmem:[%s1516 + $0x50] sm:$0xff]
        %v1528 = vld [vmem:[%s1516 + $0x58] sm:$0xff]
        %v1529 = vld [vmem:[%s1516 + $0x60] sm:$0xff]
        %v1530 = vld [vmem:[%s1516 + $0x68] sm:$0xff]
        %v1531 = vld [vmem:[%s1516 + $0x70] sm:$0xff]
        %v1532 = vld [vmem:[%s1516 + $0x78] sm:$0xff]
        %v1533 = vld [vmem:[%s1516 + $0x80] sm:$0xff]
        %v1534 = vld [vmem:[%s1516 + $0x88] sm:$0xff]
        %v1535 = vld [vmem:[%s1516 + $0x90] sm:$0xff]
        %v1536 = vld [vmem:[%s1516 + $0x98] sm:$0xff]
        %v1537 = vld [vmem:[%s1516 + $0xa0] sm:$0xff]
        %v1538 = vld [vmem:[%s1516 + $0xa8] sm:$0xff]
        %v1539 = vld [vmem:[%s1516 + $0xb0] sm:$0xff]
        %v1540 = vld [vmem:[%s1516 + $0xb8] sm:$0xff]
        %v1541 = vld [vmem:[%s1516 + $0xc0] sm:$0xff]
        %v1542 = vld [vmem:[%s1516 + $0xc8] sm:$0xff]
        %v1543 = vld [vmem:[%s1516 + $0xd0] sm:$0xff]
        %v1544 = vld [vmem:[%s1516 + $0xd8] sm:$0xff]
        %v1545 = vld [vmem:[%s1516 + $0xe0] sm:$0xff]
        %v1546 = vld [vmem:[%s1516 + $0xe8] sm:$0xff]
        %v1547 = vld [vmem:[%s1516 + $0xf0] sm:$0xff]
        %v1548 = vld [vmem:[%s1516 + $0xf8] sm:$0xff]
        %s1549 = scalar_lea.vmem [#allocation7], 8
        %v1550 = vld [vmem:[%s1549] sm:$0x3]
        %v1552 = vlaneseq
        %v1553 = vshrl.u32 %v1552, 7
        %v1554 = vsub.s32 0, %v1553
        %v1555 = vrot.slane %v1550, %v1554
        %v1589 = vunpack.c.l.b16 %v1517
        %v1590 = vunpack.c.h.b16 %v1517
        %v1591 = vunpack.c.l.b16 %v1518
        %v1592 = vunpack.c.h.b16 %v1518
        %v1593 = vunpack.c.l.b16 %v1519
        %v1594 = vunpack.c.h.b16 %v1519
        %v1595 = vunpack.c.l.b16 %v1520
        %v1596 = vunpack.c.h.b16 %v1520
        %v1597 = vunpack.c.l.b16 %v1521
        %v1598 = vunpack.c.h.b16 %v1521
        %v1599 = vunpack.c.l.b16 %v1522
        %v1600 = vunpack.c.h.b16 %v1522
        %v1601 = vunpack.c.l.b16 %v1523
        %v1602 = vunpack.c.h.b16 %v1523
        %v1603 = vunpack.c.l.b16 %v1524
        %v1604 = vunpack.c.h.b16 %v1524
        %v1605 = vunpack.c.l.b16 %v1525
        %v1606 = vunpack.c.h.b16 %v1525
        %v1607 = vunpack.c.l.b16 %v1526
        %v1608 = vunpack.c.h.b16 %v1526
        %v1609 = vunpack.c.l.b16 %v1527
        %v1610 = vunpack.c.h.b16 %v1527
        %v1611 = vunpack.c.l.b16 %v1528
        %v1612 = vunpack.c.h.b16 %v1528
        %v1613 = vunpack.c.l.b16 %v1529
        %v1614 = vunpack.c.h.b16 %v1529
        %v1615 = vunpack.c.l.b16 %v1530
        %v1616 = vunpack.c.h.b16 %v1530
        %v1617 = vunpack.c.l.b16 %v1531
        %v1618 = vunpack.c.h.b16 %v1531
        %v1619 = vunpack.c.l.b16 %v1532
        %v1620 = vunpack.c.h.b16 %v1532
        %v1621 = vunpack.c.l.b16 %v1533
        %v1622 = vunpack.c.h.b16 %v1533
        %v1623 = vunpack.c.l.b16 %v1534
        %v1624 = vunpack.c.h.b16 %v1534
        %v1625 = vunpack.c.l.b16 %v1535
        %v1626 = vunpack.c.h.b16 %v1535
        %v1627 = vunpack.c.l.b16 %v1536
        %v1628 = vunpack.c.h.b16 %v1536
        %v1629 = vunpack.c.l.b16 %v1537
        %v1630 = vunpack.c.h.b16 %v1537
        %v1631 = vunpack.c.l.b16 %v1538
        %v1632 = vunpack.c.h.b16 %v1538
        %v1633 = vunpack.c.l.b16 %v1539
        %v1634 = vunpack.c.h.b16 %v1539
        %v1635 = vunpack.c.l.b16 %v1540
        %v1636 = vunpack.c.h.b16 %v1540
        %v1637 = vunpack.c.l.b16 %v1541
        %v1638 = vunpack.c.h.b16 %v1541
        %v1639 = vunpack.c.l.b16 %v1542
        %v1640 = vunpack.c.h.b16 %v1542
        %v1641 = vunpack.c.l.b16 %v1543
        %v1642 = vunpack.c.h.b16 %v1543
        %v1643 = vunpack.c.l.b16 %v1544
        %v1644 = vunpack.c.h.b16 %v1544
        %v1645 = vunpack.c.l.b16 %v1545
        %v1646 = vunpack.c.h.b16 %v1545
        %v1647 = vunpack.c.l.b16 %v1546
        %v1648 = vunpack.c.h.b16 %v1546
        %v1649 = vunpack.c.l.b16 %v1547
        %v1650 = vunpack.c.h.b16 %v1547
        %v1651 = vunpack.c.l.b16 %v1548
        %v1652 = vunpack.c.h.b16 %v1548
        %v1653 = vpack.c.b16 %v1591, %v1589
        %v1654 = vpack.c.b16 %v1592, %v1590
        %v1655 = vpack.c.b16 %v1595, %v1593
        %v1656 = vpack.c.b16 %v1596, %v1594
        %v1657 = vpack.c.b16 %v1599, %v1597
        %v1658 = vpack.c.b16 %v1600, %v1598
        %v1659 = vpack.c.b16 %v1603, %v1601
        %v1660 = vpack.c.b16 %v1604, %v1602
        %v1661 = vpack.c.b16 %v1607, %v1605
        %v1662 = vpack.c.b16 %v1608, %v1606
        %v1663 = vpack.c.b16 %v1611, %v1609
        %v1664 = vpack.c.b16 %v1612, %v1610
        %v1665 = vpack.c.b16 %v1615, %v1613
        %v1666 = vpack.c.b16 %v1616, %v1614
        %v1667 = vpack.c.b16 %v1619, %v1617
        %v1668 = vpack.c.b16 %v1620, %v1618
        %v1669 = vpack.c.b16 %v1623, %v1621
        %v1670 = vpack.c.b16 %v1624, %v1622
        %v1671 = vpack.c.b16 %v1627, %v1625
        %v1672 = vpack.c.b16 %v1628, %v1626
        %v1673 = vpack.c.b16 %v1631, %v1629
        %v1674 = vpack.c.b16 %v1632, %v1630
        %v1675 = vpack.c.b16 %v1635, %v1633
        %v1676 = vpack.c.b16 %v1636, %v1634
        %v1677 = vpack.c.b16 %v1639, %v1637
        %v1678 = vpack.c.b16 %v1640, %v1638
        %v1679 = vpack.c.b16 %v1643, %v1641
        %v1680 = vpack.c.b16 %v1644, %v1642
        %v1681 = vpack.c.b16 %v1647, %v1645
        %v1682 = vpack.c.b16 %v1648, %v1646
        %v1683 = vpack.c.b16 %v1651, %v1649
        %v1684 = vpack.c.b16 %v1652, %v1650
        %1717 = vmatprep.subr.bf16.mxu0 %v1654
        %1718 = vmatpush1.bf16.msra.mxu0 %v1653
        %1719 = vmatprep.subr.bf16.mxu0 %v1656
        %1720 = vmatpush1.bf16.msra.mxu0 %v1655
        %1721 = vmatprep.subr.bf16.mxu0 %v1658
        %1722 = vmatpush1.bf16.msra.mxu0 %v1657
        %1723 = vmatprep.subr.bf16.mxu0 %v1660
        %1724 = vmatpush1.bf16.msra.mxu0 %v1659
        %1725 = vmatprep.subr.bf16.mxu0 %v1662
        %1726 = vmatpush1.bf16.msra.mxu0 %v1661
        %1727 = vmatprep.subr.bf16.mxu0 %v1664
        %1728 = vmatpush1.bf16.msra.mxu0 %v1663
        %1729 = vmatprep.subr.bf16.mxu0 %v1666
        %1730 = vmatpush1.bf16.msra.mxu0 %v1665
        %1731 = vmatprep.subr.bf16.mxu0 %v1668
        %1732 = vmatpush1.bf16.msra.mxu0 %v1667
        %1733 = vmatprep.subr.bf16.mxu0 %v1670
        %1734 = vmatpush1.bf16.msra.mxu0 %v1669
        %1735 = vmatprep.subr.bf16.mxu0 %v1672
        %1736 = vmatpush1.bf16.msra.mxu0 %v1671
        %1737 = vmatprep.subr.bf16.mxu0 %v1674
        %1738 = vmatpush1.bf16.msra.mxu0 %v1673
        %1739 = vmatprep.subr.bf16.mxu0 %v1676
        %1740 = vmatpush1.bf16.msra.mxu0 %v1675
        %1741 = vmatprep.subr.bf16.mxu0 %v1678
        %1742 = vmatpush1.bf16.msra.mxu0 %v1677
        %1743 = vmatprep.subr.bf16.mxu0 %v1680
        %1744 = vmatpush1.bf16.msra.mxu0 %v1679
        %1745 = vmatprep.subr.bf16.mxu0 %v1682
        %1746 = vmatpush1.bf16.msra.mxu0 %v1681
        %1747 = vmatprep.subr.bf16.mxu0 %v1684
        %1748 = vmatpush1.bf16.msra.mxu0 %v1683
        %1749 = vmatprep.mubr.bf16.mxu0 %v1513
        %1750 = vmatmul.mubr.bf16.gmra.mrb[0].mxu0 %v1512
        %v1751 = vpop.f32.mrb[0].mxu0
        %v1752 = vadd.f32 %v1555, %v1751
        %v1753 = vpop.f32.mrb[0].mxu0
        %v1754 = vpop.f32.mrb[0].mxu0
        %v1755 = vadd.f32 %v1555, %v1754
        %v1756 = vpop.f32.mrb[0].mxu0
        %1757 = vmatprep.mubr.bf16.mxu0 %v1515
        %1758 = vmatmul.mubr.bf16.gmra.mrb[0].mxu0 %v1514
        %v1759 = vpop.f32.mrb[0].mxu0
        %v1760 = vadd.f32 %v1555, %v1759
        %v1761 = vpop.f32.mrb[0].mxu0
        %v1762 = vpop.f32.mrb[0].mxu0
        %v1763 = vadd.f32 %v1555, %v1762
        %v1764 = vpop.f32.mrb[0].mxu0
        %1765 = vdwg.mxu0
        %v1766 = vld [vmem:[%s362] sm:$0xf]
        %v1767 = vlaneseq
        %v1768 = vand.u32 %v1767, 127
        %vm1769 = vcmp.ge.s32.totalorder %v1768, 64
        %vm1770 = vcmp.lt.s32.totalorder %v1768, 96
        %vm1771 = vmand %vm1769, %vm1770
        %v1772 = vsel %vm1771, 1.0, 0.5
        loop: start=0, step=1, limit=12
        $region77: #{tpu_custom_call.1} parent=51 // loop_pre_header
          _
        $region78: #{tpu_custom_call.1} parent=51 // loop_header
          %s1774 = sphi 0, %s1778
          %p1775 = scmp.ge.s32.totalorder %s1774, 12
          %v1779 = vphi %v1752, %v2564
          %v1780 = vphi %v1755, %v2566
          %v1781 = vphi %v1760, %v2568
          %v1782 = vphi %v1763, %v2570
          %v1783 = vphi %v1766, %v2572
        $region79: #{tpu_custom_call.1} parent=51 // loop_header_branch
          %1777 = sbr.rel (%p1775) target = $region83
        $region80: #{tpu_custom_call.1} parent=51 // loop_body
          %s1784 = smul.u32 %s1774, 8
          %s1785 = smul.addr %s1784, 4
          %s1786 = scalar_lea.vmem [#allocation9], %s1785
          %v1787 = vld [vmem:[%s1786] sm:$0xf]
          %v1788 = vld [vmem:[%s1786 + $0x4] sm:$0xf]
          %v1789 = vld [vmem:[%s1786 + $0x8] sm:$0xf]
          %v1790 = vld [vmem:[%s1786 + $0xc] sm:$0xf]
          %v1791 = vld [vmem:[%s1786 + $0x10] sm:$0xf]
          %v1792 = vld [vmem:[%s1786 + $0x14] sm:$0xf]
          %v1793 = vld [vmem:[%s1786 + $0x18] sm:$0xf]
          %v1794 = vld [vmem:[%s1786 + $0x1c] sm:$0xf]
          %s1795 = scalar_lea.vmem %s5, %s1774
          %v1796 = vld [vmem:[%s1795] sm:$0x1]
          %v1797 = vpack.c.bf16 %v1780, %v1779
          %v1798 = vpack.c.bf16 %v1782, %v1781
          %v1799 = vpack.c.bf16 %v1783, %v1783
          %v1801 = vlaneseq
          %v1802 = vshrl.u32 %v1801, 7
          %v1803 = vsub.s32 0, %v1802
          %v1804 = vrot.slane %v1796, %v1803
          %v1810 = vunpack.c.l.b16 %v1787
          %v1811 = vunpack.c.l.b16 %v1788
          %v1812 = vunpack.c.l.b16 %v1789
          %v1813 = vunpack.c.l.b16 %v1790
          %v1814 = vpack.c.b16 %v1811, %v1810
          %v1815 = vpack.c.b16 %v1813, %v1812
          %vm1818 = vcmask 261120
          %v1820 = vsel %vm1818, %v1797, 0
          %v1823 = vsel %vm1818, %v1798, 0
          %v1826 = vsel %vm1818, %v1799, 0
          %1828 = vmatprep.subr.bf16.mxu0 0
          %1829 = vmatpush1.bf16.msra.mxu0 %v1814
          %1830 = vmatprep.subr.bf16.mxu0 0
          %1831 = vmatpush1.bf16.msra.mxu0 %v1815
          %1832 = vmatprep.subr.bf16.mxu0 0
          %1833 = vmatpush1.bf16.msra.mxu0 0
          %1834 = vmatprep.subr.bf16.mxu0 0
          %1835 = vmatpush1.bf16.msra.mxu0 0
          %1836 = vmatprep.subr.bf16.mxu0 0
          %1837 = vmatpush1.bf16.msra.mxu0 0
          %1838 = vmatprep.subr.bf16.mxu0 0
          %1839 = vmatpush1.bf16.msra.mxu0 0
          %1840 = vmatprep.subr.bf16.mxu0 0
          %1841 = vmatpush1.bf16.msra.mxu0 0
          %1842 = vmatprep.subr.bf16.mxu0 0
          %1843 = vmatpush1.bf16.msra.mxu0 0
          %1844 = vmatprep.subr.bf16.mxu0 0
          %1845 = vmatpush1.bf16.msra.mxu0 0
          %1846 = vmatprep.subr.bf16.mxu0 0
          %1847 = vmatpush1.bf16.msra.mxu0 0
          %1848 = vmatprep.subr.bf16.mxu0 0
          %1849 = vmatpush1.bf16.msra.mxu0 0
          %1850 = vmatprep.subr.bf16.mxu0 0
          %1851 = vmatpush1.bf16.msra.mxu0 0
          %1852 = vmatprep.subr.bf16.mxu0 0
          %1853 = vmatpush1.bf16.msra.mxu0 0
          %1854 = vmatprep.subr.bf16.mxu0 0
          %1855 = vmatpush1.bf16.msra.mxu0 0
          %1856 = vmatprep.subr.bf16.mxu0 0
          %1857 = vmatpush1.bf16.msra.mxu0 0
          %1858 = vmatprep.subr.bf16.mxu0 0
          %1859 = vmatpush1.bf16.msra.mxu0 0
          %1860 = vmatprep.mubr.bf16.mxu0 0
          %1861 = vmatmul.mubr.bf16.gmra.mrb[0].mxu0 %v1820
          %v1862 = vpop.f32.mrb[0].mxu0
          %v1863 = vadd.f32 %v1804, %v1862
          %v1864 = vpop.f32.mrb[0].mxu0
          %v1865 = vpop.f32.mrb[0].mxu0
          %v1866 = vadd.f32 %v1804, %v1865
          %v1867 = vpop.f32.mrb[0].mxu0
          %1868 = vmatprep.mubr.bf16.mxu0 0
          %1869 = vmatmul.mubr.bf16.gmra.mrb[0].mxu0 %v1823
          %v1870 = vpop.f32.mrb[0].mxu0
          %v1871 = vadd.f32 %v1804, %v1870
          %v1872 = vpop.f32.mrb[0].mxu0
          %v1873 = vpop.f32.mrb[0].mxu0
          %v1874 = vadd.f32 %v1804, %v1873
          %v1875 = vpop.f32.mrb[0].mxu0
          %1876 = vmatprep.mubr.bf16.mxu0 0
          %1877 = vmatmul.mubr.bf16.gmra.mrb[0].mxu0 %v1826
          %v1878 = vpop.f32.mrb[0].mxu0
          %v1879 = vadd.f32 %v1804, %v1878
          %v1880 = vpop.f32.mrb[0].mxu0
          %v1881 = vpop.f32.mrb[0].mxu0
          %v1882 = vpop.f32.mrb[0].mxu0
          %1883 = vdwg.mxu0
          %v1888 = vunpack.c.l.b16 %v1791
          %v1889 = vunpack.c.l.b16 %v1792
          %v1890 = vunpack.c.l.b16 %v1793
          %v1891 = vunpack.c.l.b16 %v1794
          %v1892 = vpack.c.b16 %v1889, %v1888
          %v1893 = vpack.c.b16 %v1891, %v1890
          %v1897 = vsel %vm1818, 0, 0
          %1899 = vmatprep.subr.bf16.mxu0 0
          %1900 = vmatpush1.bf16.msra.mxu0 %v1892
          %1901 = vmatprep.subr.bf16.mxu0 0
          %1902 = vmatpush1.bf16.msra.mxu0 %v1893
          %1903 = vmatprep.subr.bf16.mxu0 0
          %1904 = vmatpush1.bf16.msra.mxu0 0
          %1905 = vmatprep.subr.bf16.mxu0 0
          %1906 = vmatpush1.bf16.msra.mxu0 0
          %1907 = vmatprep.subr.bf16.mxu0 0
          %1908 = vmatpush1.bf16.msra.mxu0 0
          %1909 = vmatprep.subr.bf16.mxu0 0
          %1910 = vmatpush1.bf16.msra.mxu0 0
          %1911 = vmatprep.subr.bf16.mxu0 0
          %1912 = vmatpush1.bf16.msra.mxu0 0
          %1913 = vmatprep.subr.bf16.mxu0 0
          %1914 = vmatpush1.bf16.msra.mxu0 0
          %1915 = vmatprep.subr.bf16.mxu0 0
          %1916 = vmatpush1.bf16.msra.mxu0 0
          %1917 = vmatprep.subr.bf16.mxu0 0
          %1918 = vmatpush1.bf16.msra.mxu0 0
          %1919 = vmatprep.subr.bf16.mxu0 0
          %1920 = vmatpush1.bf16.msra.mxu0 0
          %1921 = vmatprep.subr.bf16.mxu0 0
          %1922 = vmatpush1.bf16.msra.mxu0 0
          %1923 = vmatprep.subr.bf16.mxu0 0
          %1924 = vmatpush1.bf16.msra.mxu0 0
          %1925 = vmatprep.subr.bf16.mxu0 0
          %1926 = vmatpush1.bf16.msra.mxu0 0
          %1927 = vmatprep.subr.bf16.mxu0 0
          %1928 = vmatpush1.bf16.msra.mxu0 0
          %1929 = vmatprep.subr.bf16.mxu0 0
          %1930 = vmatpush1.bf16.msra.mxu0 0
          %1931 = vmatprep.mubr.bf16.mxu0 0
          %1932 = vmatmul.mubr.bf16.gmra.mrb[0].mxu0 %v1897
          %v1933 = vpop.f32.mrb[0].mxu0
          %v1934 = vadd.f32 0.0, %v1933
          %v1935 = vpop.f32.mrb[0].mxu0
          %v1936 = vpop.f32.mrb[0].mxu0
          %v1937 = vpop.f32.mrb[0].mxu0
          %1938 = vdwg.mxu0
          %v1939 = vadd.f32 %v1863, %v1934
          %v1940 = vmul.f32 %v1939, %v1772
          %v1941 = vtanh.pop %v1940
          %v1942 = vadd.f32 %v1941, 1.0
          %v1943 = vmul.f32 %v1942, 0.5
          %v1944 = vmul.f32 %v1943, 0.0
          %1946 = vrot.lane.b32.xlu0 %v1941, 64
          %v1947 = vpop.permute.xlu0 %1946
          %v1949 = vmul.f32 %v1943, %v1947
          %1951 = vrot.lane.b32.xlu0 %v1949, 32
          %v1952 = vpop.permute.xlu0 %1951
          %v1954 = vadd.f32 %v1944, %v1952
          %v1955 = vtanh.pop %v1954
          %1957 = vrot.lane.b32.xlu0 %v1955, 64
          %v1958 = vpop.permute.xlu0 %1957
          %v1960 = vmul.f32 %v1943, %v1958
          %v1961 = vpack.c.bf16 %v1960, %v1960
          %1963 = vrot.lane.b32.xlu0 %v1961, 32
          %v1964 = vpop.permute.xlu0 %1963
          %v1966 = vsel %vm1818, %v1964, 0
          %1968 = vmatprep.subr.bf16.mxu0 0
          %1969 = vmatpush1.bf16.msra.mxu0 %v1892
          %1970 = vmatprep.subr.bf16.mxu0 0
          %1971 = vmatpush1.bf16.msra.mxu0 %v1893
          %1972 = vmatprep.subr.bf16.mxu0 0
          %1973 = vmatpush1.bf16.msra.mxu0 0
          %1974 = vmatprep.subr.bf16.mxu0 0
          %1975 = vmatpush1.bf16.msra.mxu0 0
          %1976 = vmatprep.subr.bf16.mxu0 0
          %1977 = vmatpush1.bf16.msra.mxu0 0
          %1978 = vmatprep.subr.bf16.mxu0 0
          %1979 = vmatpush1.bf16.msra.mxu0 0
          %1980 = vmatprep.subr.bf16.mxu0 0
          %1981 = vmatpush1.bf16.msra.mxu0 0
          %1982 = vmatprep.subr.bf16.mxu0 0
          %1983 = vmatpush1.bf16.msra.mxu0 0
          %1984 = vmatprep.subr.bf16.mxu0 0
          %1985 = vmatpush1.bf16.msra.mxu0 0
          %1986 = vmatprep.subr.bf16.mxu0 0
          %1987 = vmatpush1.bf16.msra.mxu0 0
          %1988 = vmatprep.subr.bf16.mxu0 0
          %1989 = vmatpush1.bf16.msra.mxu0 0
          %1990 = vmatprep.subr.bf16.mxu0 0
          %1991 = vmatpush1.bf16.msra.mxu0 0
          %1992 = vmatprep.subr.bf16.mxu0 0
          %1993 = vmatpush1.bf16.msra.mxu0 0
          %1994 = vmatprep.subr.bf16.mxu0 0
          %1995 = vmatpush1.bf16.msra.mxu0 0
          %1996 = vmatprep.subr.bf16.mxu0 0
          %1997 = vmatpush1.bf16.msra.mxu0 0
          %1998 = vmatprep.subr.bf16.mxu0 0
          %1999 = vmatpush1.bf16.msra.mxu0 0
          %2000 = vmatprep.mubr.bf16.mxu0 0
          %2001 = vmatmul.mubr.bf16.gmra.mrb[0].mxu0 %v1966
          %v2002 = vpop.f32.mrb[0].mxu0
          %v2003 = vadd.f32 0.0, %v2002
          %v2004 = vpop.f32.mrb[0].mxu0
          %v2005 = vpop.f32.mrb[0].mxu0
          %v2006 = vpop.f32.mrb[0].mxu0
          %2007 = vdwg.mxu0
          %v2009 = vrot.slane %v2003, 4
          %v2011 = vadd.f32 %v1863, %v2009
          %v2012 = vmul.f32 %v2011, %v1772
          %v2013 = vtanh.pop %v2012
          %v2014 = vadd.f32 %v2013, 1.0
          %v2015 = vmul.f32 %v2014, 0.5
          %v2017 = vrot.slane %v1954, 4
          %v2019 = vmul.f32 %v2015, %v2017
          %2021 = vrot.lane.b32.xlu0 %v2013, 64
          %v2022 = vpop.permute.xlu0 %2021
          %v2024 = vmul.f32 %v2015, %v2022
          %2026 = vrot.lane.b32.xlu0 %v2024, 32
          %v2027 = vpop.permute.xlu0 %2026
          %v2029 = vadd.f32 %v2019, %v2027
          %v2030 = vtanh.pop %v2029
          %2032 = vrot.lane.b32.xlu0 %v2030, 64
          %v2033 = vpop.permute.xlu0 %2032
          %v2035 = vmul.f32 %v2015, %v2033
          %v2036 = vpack.c.bf16 %v2035, %v2035
          %v2038 = vrot.slane %v2036, 2
          %2039 = vrot.lane.b32.xlu0 %v2038, 32
          %v2040 = vpop.permute.xlu0 %2039
          %v2042 = vsel %vm1818, %v2040, 0
          %2044 = vmatprep.subr.bf16.mxu0 0
          %2045 = vmatpush1.bf16.msra.mxu0 %v1892
          %2046 = vmatprep.subr.bf16.mxu0 0
          %2047 = vmatpush1.bf16.msra.mxu0 %v1893
          %2048 = vmatprep.subr.bf16.mxu0 0
          %2049 = vmatpush1.bf16.msra.mxu0 0
          %2050 = vmatprep.subr.bf16.mxu0 0
          %2051 = vmatpush1.bf16.msra.mxu0 0
          %2052 = vmatprep.subr.bf16.mxu0 0
          %2053 = vmatpush1.bf16.msra.mxu0 0
          %2054 = vmatprep.subr.bf16.mxu0 0
          %2055 = vmatpush1.bf16.msra.mxu0 0
          %2056 = vmatprep.subr.bf16.mxu0 0
          %2057 = vmatpush1.bf16.msra.mxu0 0
          %2058 = vmatprep.subr.bf16.mxu0 0
          %2059 = vmatpush1.bf16.msra.mxu0 0
          %2060 = vmatprep.subr.bf16.mxu0 0
          %2061 = vmatpush1.bf16.msra.mxu0 0
          %2062 = vmatprep.subr.bf16.mxu0 0
          %2063 = vmatpush1.bf16.msra.mxu0 0
          %2064 = vmatprep.subr.bf16.mxu0 0
          %2065 = vmatpush1.bf16.msra.mxu0 0
          %2066 = vmatprep.subr.bf16.mxu0 0
          %2067 = vmatpush1.bf16.msra.mxu0 0
          %2068 = vmatprep.subr.bf16.mxu0 0
          %2069 = vmatpush1.bf16.msra.mxu0 0
          %2070 = vmatprep.subr.bf16.mxu0 0
          %2071 = vmatpush1.bf16.msra.mxu0 0
          %2072 = vmatprep.subr.bf16.mxu0 0
          %2073 = vmatpush1.bf16.msra.mxu0 0
          %2074 = vmatprep.subr.bf16.mxu0 0
          %2075 = vmatpush1.bf16.msra.mxu0 0
          %2076 = vmatprep.mubr.bf16.mxu0 0
          %2077 = vmatmul.mubr.bf16.gmra.mrb[0].mxu0 %v2042
          %v2078 = vpop.f32.mrb[0].mxu0
          %v2079 = vadd.f32 0.0, %v2078
          %v2080 = vpop.f32.mrb[0].mxu0
          %v2081 = vpop.f32.mrb[0].mxu0
          %v2082 = vpop.f32.mrb[0].mxu0
          %2083 = vdwg.mxu0
          %v2084 = vadd.f32 %v1866, %v2079
          %v2085 = vmul.f32 %v2084, %v1772
          %v2086 = vtanh.pop %v2085
          %v2087 = vadd.f32 %v2086, 1.0
          %v2088 = vmul.f32 %v2087, 0.5
          %v2090 = vrot.slane %v2029, 4
          %v2092 = vmul.f32 %v2088, %v2090
          %2094 = vrot.lane.b32.xlu0 %v2086, 64
          %v2095 = vpop.permute.xlu0 %2094
          %v2097 = vmul.f32 %v2088, %v2095
          %2099 = vrot.lane.b32.xlu0 %v2097, 32
          %v2100 = vpop.permute.xlu0 %2099
          %v2102 = vadd.f32 %v2092, %v2100
          %v2103 = vtanh.pop %v2102
          %2105 = vrot.lane.b32.xlu0 %v2103, 64
          %v2106 = vpop.permute.xlu0 %2105
          %v2108 = vmul.f32 %v2088, %v2106
          %v2109 = vpack.c.bf16 %v2108, %v2108
          %2111 = vrot.lane.b32.xlu0 %v2109, 32
          %v2112 = vpop.permute.xlu0 %2111
          %v2114 = vsel %vm1818, %v2112, 0
          %2116 = vmatprep.subr.bf16.mxu0 0
          %2117 = vmatpush1.bf16.msra.mxu0 %v1892
          %2118 = vmatprep.subr.bf16.mxu0 0
          %2119 = vmatpush1.bf16.msra.mxu0 %v1893
          %2120 = vmatprep.subr.bf16.mxu0 0
          %2121 = vmatpush1.bf16.msra.mxu0 0
          %2122 = vmatprep.subr.bf16.mxu0 0
          %2123 = vmatpush1.bf16.msra.mxu0 0
          %2124 = vmatprep.subr.bf16.mxu0 0
          %2125 = vmatpush1.bf16.msra.mxu0 0
          %2126 = vmatprep.subr.bf16.mxu0 0
          %2127 = vmatpush1.bf16.msra.mxu0 0
          %2128 = vmatprep.subr.bf16.mxu0 0
          %2129 = vmatpush1.bf16.msra.mxu0 0
          %2130 = vmatprep.subr.bf16.mxu0 0
          %2131 = vmatpush1.bf16.msra.mxu0 0
          %2132 = vmatprep.subr.bf16.mxu0 0
          %2133 = vmatpush1.bf16.msra.mxu0 0
          %2134 = vmatprep.subr.bf16.mxu0 0
          %2135 = vmatpush1.bf16.msra.mxu0 0
          %2136 = vmatprep.subr.bf16.mxu0 0
          %2137 = vmatpush1.bf16.msra.mxu0 0
          %2138 = vmatprep.subr.bf16.mxu0 0
          %2139 = vmatpush1.bf16.msra.mxu0 0
          %2140 = vmatprep.subr.bf16.mxu0 0
          %2141 = vmatpush1.bf16.msra.mxu0 0
          %2142 = vmatprep.subr.bf16.mxu0 0
          %2143 = vmatpush1.bf16.msra.mxu0 0
          %2144 = vmatprep.subr.bf16.mxu0 0
          %2145 = vmatpush1.bf16.msra.mxu0 0
          %2146 = vmatprep.subr.bf16.mxu0 0
          %2147 = vmatpush1.bf16.msra.mxu0 0
          %2148 = vmatprep.mubr.bf16.mxu0 0
          %2149 = vmatmul.mubr.bf16.gmra.mrb[0].mxu0 %v2114
          %v2150 = vpop.f32.mrb[0].mxu0
          %v2151 = vadd.f32 0.0, %v2150
          %v2152 = vpop.f32.mrb[0].mxu0
          %v2153 = vpop.f32.mrb[0].mxu0
          %v2154 = vpop.f32.mrb[0].mxu0
          %2155 = vdwg.mxu0
          %v2157 = vrot.slane %v2151, 4
          %v2159 = vadd.f32 %v1866, %v2157
          %v2160 = vmul.f32 %v2159, %v1772
          %v2161 = vtanh.pop %v2160
          %v2162 = vadd.f32 %v2161, 1.0
          %v2163 = vmul.f32 %v2162, 0.5
          %v2165 = vrot.slane %v2102, 4
          %v2167 = vmul.f32 %v2163, %v2165
          %2169 = vrot.lane.b32.xlu0 %v2161, 64
          %v2170 = vpop.permute.xlu0 %2169
          %v2172 = vmul.f32 %v2163, %v2170
          %2174 = vrot.lane.b32.xlu0 %v2172, 32
          %v2175 = vpop.permute.xlu0 %2174
          %v2177 = vadd.f32 %v2167, %v2175
          %v2178 = vtanh.pop %v2177
          %2180 = vrot.lane.b32.xlu0 %v2178, 64
          %v2181 = vpop.permute.xlu0 %2180
          %v2183 = vmul.f32 %v2163, %v2181
          %v2184 = vpack.c.bf16 %v2183, %v2183
          %v2186 = vrot.slane %v2184, 2
          %2187 = vrot.lane.b32.xlu0 %v2186, 32
          %v2188 = vpop.permute.xlu0 %2187
          %v2190 = vsel %vm1818, %v2188, 0
          %2192 = vmatprep.subr.bf16.mxu0 0
          %2193 = vmatpush1.bf16.msra.mxu0 %v1892
          %2194 = vmatprep.subr.bf16.mxu0 0
          %2195 = vmatpush1.bf16.msra.mxu0 %v1893
          %2196 = vmatprep.subr.bf16.mxu0 0
          %2197 = vmatpush1.bf16.msra.mxu0 0
          %2198 = vmatprep.subr.bf16.mxu0 0
          %2199 = vmatpush1.bf16.msra.mxu0 0
          %2200 = vmatprep.subr.bf16.mxu0 0
          %2201 = vmatpush1.bf16.msra.mxu0 0
          %2202 = vmatprep.subr.bf16.mxu0 0
          %2203 = vmatpush1.bf16.msra.mxu0 0
          %2204 = vmatprep.subr.bf16.mxu0 0
          %2205 = vmatpush1.bf16.msra.mxu0 0
          %2206 = vmatprep.subr.bf16.mxu0 0
          %2207 = vmatpush1.bf16.msra.mxu0 0
          %2208 = vmatprep.subr.bf16.mxu0 0
          %2209 = vmatpush1.bf16.msra.mxu0 0
          %2210 = vmatprep.subr.bf16.mxu0 0
          %2211 = vmatpush1.bf16.msra.mxu0 0
          %2212 = vmatprep.subr.bf16.mxu0 0
          %2213 = vmatpush1.bf16.msra.mxu0 0
          %2214 = vmatprep.subr.bf16.mxu0 0
          %2215 = vmatpush1.bf16.msra.mxu0 0
          %2216 = vmatprep.subr.bf16.mxu0 0
          %2217 = vmatpush1.bf16.msra.mxu0 0
          %2218 = vmatprep.subr.bf16.mxu0 0
          %2219 = vmatpush1.bf16.msra.mxu0 0
          %2220 = vmatprep.subr.bf16.mxu0 0
          %2221 = vmatpush1.bf16.msra.mxu0 0
          %2222 = vmatprep.subr.bf16.mxu0 0
          %2223 = vmatpush1.bf16.msra.mxu0 0
          %2224 = vmatprep.mubr.bf16.mxu0 0
          %2225 = vmatmul.mubr.bf16.gmra.mrb[0].mxu0 %v2190
          %v2226 = vpop.f32.mrb[0].mxu0
          %v2227 = vadd.f32 0.0, %v2226
          %v2228 = vpop.f32.mrb[0].mxu0
          %v2229 = vpop.f32.mrb[0].mxu0
          %v2230 = vpop.f32.mrb[0].mxu0
          %2231 = vdwg.mxu0
          %v2232 = vadd.f32 %v1871, %v2227
          %v2233 = vmul.f32 %v2232, %v1772
          %v2234 = vtanh.pop %v2233
          %v2235 = vadd.f32 %v2234, 1.0
          %v2236 = vmul.f32 %v2235, 0.5
          %v2238 = vrot.slane %v2177, 4
          %v2240 = vmul.f32 %v2236, %v2238
          %2242 = vrot.lane.b32.xlu0 %v2234, 64
          %v2243 = vpop.permute.xlu0 %2242
          %v2245 = vmul.f32 %v2236, %v2243
          %2247 = vrot.lane.b32.xlu0 %v2245, 32
          %v2248 = vpop.permute.xlu0 %2247
          %v2250 = vadd.f32 %v2240, %v2248
          %v2251 = vtanh.pop %v2250
          %2253 = vrot.lane.b32.xlu0 %v2251, 64
          %v2254 = vpop.permute.xlu0 %2253
          %v2256 = vmul.f32 %v2236, %v2254
          %v2257 = vpack.c.bf16 %v2256, %v2256
          %2259 = vrot.lane.b32.xlu0 %v2257, 32
          %v2260 = vpop.permute.xlu0 %2259
          %v2262 = vsel %vm1818, %v2260, 0
          %2264 = vmatprep.subr.bf16.mxu0 0
          %2265 = vmatpush1.bf16.msra.mxu0 %v1892
          %2266 = vmatprep.subr.bf16.mxu0 0
          %2267 = vmatpush1.bf16.msra.mxu0 %v1893
          %2268 = vmatprep.subr.bf16.mxu0 0
          %2269 = vmatpush1.bf16.msra.mxu0 0
          %2270 = vmatprep.subr.bf16.mxu0 0
          %2271 = vmatpush1.bf16.msra.mxu0 0
          %2272 = vmatprep.subr.bf16.mxu0 0
          %2273 = vmatpush1.bf16.msra.mxu0 0
          %2274 = vmatprep.subr.bf16.mxu0 0
          %2275 = vmatpush1.bf16.msra.mxu0 0
          %2276 = vmatprep.subr.bf16.mxu0 0
          %2277 = vmatpush1.bf16.msra.mxu0 0
          %2278 = vmatprep.subr.bf16.mxu0 0
          %2279 = vmatpush1.bf16.msra.mxu0 0
          %2280 = vmatprep.subr.bf16.mxu0 0
          %2281 = vmatpush1.bf16.msra.mxu0 0
          %2282 = vmatprep.subr.bf16.mxu0 0
          %2283 = vmatpush1.bf16.msra.mxu0 0
          %2284 = vmatprep.subr.bf16.mxu0 0
          %2285 = vmatpush1.bf16.msra.mxu0 0
          %2286 = vmatprep.subr.bf16.mxu0 0
          %2287 = vmatpush1.bf16.msra.mxu0 0
          %2288 = vmatprep.subr.bf16.mxu0 0
          %2289 = vmatpush1.bf16.msra.mxu0 0
          %2290 = vmatprep.subr.bf16.mxu0 0
          %2291 = vmatpush1.bf16.msra.mxu0 0
          %2292 = vmatprep.subr.bf16.mxu0 0
          %2293 = vmatpush1.bf16.msra.mxu0 0
          %2294 = vmatprep.subr.bf16.mxu0 0
          %2295 = vmatpush1.bf16.msra.mxu0 0
          %2296 = vmatprep.mubr.bf16.mxu0 0
          %2297 = vmatmul.mubr.bf16.gmra.mrb[0].mxu0 %v2262
          %v2298 = vpop.f32.mrb[0].mxu0
          %v2299 = vadd.f32 0.0, %v2298
          %v2300 = vpop.f32.mrb[0].mxu0
          %v2301 = vpop.f32.mrb[0].mxu0
          %v2302 = vpop.f32.mrb[0].mxu0
          %2303 = vdwg.mxu0
          %v2305 = vrot.slane %v2299, 4
          %v2307 = vadd.f32 %v1871, %v2305
          %v2308 = vmul.f32 %v2307, %v1772
          %v2309 = vtanh.pop %v2308
          %v2310 = vadd.f32 %v2309, 1.0
          %v2311 = vmul.f32 %v2310, 0.5
          %v2313 = vrot.slane %v2250, 4
          %v2315 = vmul.f32 %v2311, %v2313
          %2317 = vrot.lane.b32.xlu0 %v2309, 64
          %v2318 = vpop.permute.xlu0 %2317
          %v2320 = vmul.f32 %v2311, %v2318
          %2322 = vrot.lane.b32.xlu0 %v2320, 32
          %v2323 = vpop.permute.xlu0 %2322
          %v2325 = vadd.f32 %v2315, %v2323
          %v2326 = vtanh.pop %v2325
          %2328 = vrot.lane.b32.xlu0 %v2326, 64
          %v2329 = vpop.permute.xlu0 %2328
          %v2331 = vmul.f32 %v2311, %v2329
          %v2332 = vpack.c.bf16 %v2331, %v2331
          %v2334 = vrot.slane %v2332, 2
          %2335 = vrot.lane.b32.xlu0 %v2334, 32
          %v2336 = vpop.permute.xlu0 %2335
          %v2338 = vsel %vm1818, %v2336, 0
          %2340 = vmatprep.subr.bf16.mxu0 0
          %2341 = vmatpush1.bf16.msra.mxu0 %v1892
          %2342 = vmatprep.subr.bf16.mxu0 0
          %2343 = vmatpush1.bf16.msra.mxu0 %v1893
          %2344 = vmatprep.subr.bf16.mxu0 0
          %2345 = vmatpush1.bf16.msra.mxu0 0
          %2346 = vmatprep.subr.bf16.mxu0 0
          %2347 = vmatpush1.bf16.msra.mxu0 0
          %2348 = vmatprep.subr.bf16.mxu0 0
          %2349 = vmatpush1.bf16.msra.mxu0 0
          %2350 = vmatprep.subr.bf16.mxu0 0
          %2351 = vmatpush1.bf16.msra.mxu0 0
          %2352 = vmatprep.subr.bf16.mxu0 0
          %2353 = vmatpush1.bf16.msra.mxu0 0
          %2354 = vmatprep.subr.bf16.mxu0 0
          %2355 = vmatpush1.bf16.msra.mxu0 0
          %2356 = vmatprep.subr.bf16.mxu0 0
          %2357 = vmatpush1.bf16.msra.mxu0 0
          %2358 = vmatprep.subr.bf16.mxu0 0
          %2359 = vmatpush1.bf16.msra.mxu0 0
          %2360 = vmatprep.subr.bf16.mxu0 0
          %2361 = vmatpush1.bf16.msra.mxu0 0
          %2362 = vmatprep.subr.bf16.mxu0 0
          %2363 = vmatpush1.bf16.msra.mxu0 0
          %2364 = vmatprep.subr.bf16.mxu0 0
          %2365 = vmatpush1.bf16.msra.mxu0 0
          %2366 = vmatprep.subr.bf16.mxu0 0
          %2367 = vmatpush1.bf16.msra.mxu0 0
          %2368 = vmatprep.subr.bf16.mxu0 0
          %2369 = vmatpush1.bf16.msra.mxu0 0
          %2370 = vmatprep.subr.bf16.mxu0 0
          %2371 = vmatpush1.bf16.msra.mxu0 0
          %2372 = vmatprep.mubr.bf16.mxu0 0
          %2373 = vmatmul.mubr.bf16.gmra.mrb[0].mxu0 %v2338
          %v2374 = vpop.f32.mrb[0].mxu0
          %v2375 = vadd.f32 0.0, %v2374
          %v2376 = vpop.f32.mrb[0].mxu0
          %v2377 = vpop.f32.mrb[0].mxu0
          %v2378 = vpop.f32.mrb[0].mxu0
          %2379 = vdwg.mxu0
          %v2380 = vadd.f32 %v1874, %v2375
          %v2381 = vmul.f32 %v2380, %v1772
          %v2382 = vtanh.pop %v2381
          %v2383 = vadd.f32 %v2382, 1.0
          %v2384 = vmul.f32 %v2383, 0.5
          %v2386 = vrot.slane %v2325, 4
          %v2388 = vmul.f32 %v2384, %v2386
          %2390 = vrot.lane.b32.xlu0 %v2382, 64
          %v2391 = vpop.permute.xlu0 %2390
          %v2393 = vmul.f32 %v2384, %v2391
          %2395 = vrot.lane.b32.xlu0 %v2393, 32
          %v2396 = vpop.permute.xlu0 %2395
          %v2398 = vadd.f32 %v2388, %v2396
          %v2399 = vtanh.pop %v2398
          %2401 = vrot.lane.b32.xlu0 %v2399, 64
          %v2402 = vpop.permute.xlu0 %2401
          %v2404 = vmul.f32 %v2384, %v2402
          %v2405 = vpack.c.bf16 %v2404, %v2404
          %2407 = vrot.lane.b32.xlu0 %v2405, 32
          %v2408 = vpop.permute.xlu0 %2407
          %v2410 = vsel %vm1818, %v2408, 0
          %2412 = vmatprep.subr.bf16.mxu0 0
          %2413 = vmatpush1.bf16.msra.mxu0 %v1892
          %2414 = vmatprep.subr.bf16.mxu0 0
          %2415 = vmatpush1.bf16.msra.mxu0 %v1893
          %2416 = vmatprep.subr.bf16.mxu0 0
          %2417 = vmatpush1.bf16.msra.mxu0 0
          %2418 = vmatprep.subr.bf16.mxu0 0
          %2419 = vmatpush1.bf16.msra.mxu0 0
          %2420 = vmatprep.subr.bf16.mxu0 0
          %2421 = vmatpush1.bf16.msra.mxu0 0
          %2422 = vmatprep.subr.bf16.mxu0 0
          %2423 = vmatpush1.bf16.msra.mxu0 0
          %2424 = vmatprep.subr.bf16.mxu0 0
          %2425 = vmatpush1.bf16.msra.mxu0 0
          %2426 = vmatprep.subr.bf16.mxu0 0
          %2427 = vmatpush1.bf16.msra.mxu0 0
          %2428 = vmatprep.subr.bf16.mxu0 0
          %2429 = vmatpush1.bf16.msra.mxu0 0
          %2430 = vmatprep.subr.bf16.mxu0 0
          %2431 = vmatpush1.bf16.msra.mxu0 0
          %2432 = vmatprep.subr.bf16.mxu0 0
          %2433 = vmatpush1.bf16.msra.mxu0 0
          %2434 = vmatprep.subr.bf16.mxu0 0
          %2435 = vmatpush1.bf16.msra.mxu0 0
          %2436 = vmatprep.subr.bf16.mxu0 0
          %2437 = vmatpush1.bf16.msra.mxu0 0
          %2438 = vmatprep.subr.bf16.mxu0 0
          %2439 = vmatpush1.bf16.msra.mxu0 0
          %2440 = vmatprep.subr.bf16.mxu0 0
          %2441 = vmatpush1.bf16.msra.mxu0 0
          %2442 = vmatprep.subr.bf16.mxu0 0
          %2443 = vmatpush1.bf16.msra.mxu0 0
          %2444 = vmatprep.mubr.bf16.mxu0 0
          %2445 = vmatmul.mubr.bf16.gmra.mrb[0].mxu0 %v2410
          %v2446 = vpop.f32.mrb[0].mxu0
          %v2447 = vadd.f32 0.0, %v2446
          %v2448 = vpop.f32.mrb[0].mxu0
          %v2449 = vpop.f32.mrb[0].mxu0
          %v2450 = vpop.f32.mrb[0].mxu0
          %2451 = vdwg.mxu0
          %v2453 = vrot.slane %v2447, 4
          %v2455 = vadd.f32 %v1874, %v2453
          %v2456 = vmul.f32 %v2455, %v1772
          %v2457 = vtanh.pop %v2456
          %v2458 = vadd.f32 %v2457, 1.0
          %v2459 = vmul.f32 %v2458, 0.5
          %v2461 = vrot.slane %v2398, 4
          %v2463 = vmul.f32 %v2459, %v2461
          %2465 = vrot.lane.b32.xlu0 %v2457, 64
          %v2466 = vpop.permute.xlu0 %2465
          %v2468 = vmul.f32 %v2459, %v2466
          %2470 = vrot.lane.b32.xlu0 %v2468, 32
          %v2471 = vpop.permute.xlu0 %2470
          %v2473 = vadd.f32 %v2463, %v2471
          %v2474 = vtanh.pop %v2473
          %2476 = vrot.lane.b32.xlu0 %v2474, 64
          %v2477 = vpop.permute.xlu0 %2476
          %v2479 = vmul.f32 %v2459, %v2477
          %v2480 = vpack.c.bf16 %v2479, %v2479
          %v2482 = vrot.slane %v2480, 2
          %2483 = vrot.lane.b32.xlu0 %v2482, 32
          %v2484 = vpop.permute.xlu0 %2483
          %v2486 = vsel %vm1818, %v2484, 0
          %2488 = vmatprep.subr.bf16.mxu0 0
          %2489 = vmatpush1.bf16.msra.mxu0 %v1892
          %2490 = vmatprep.subr.bf16.mxu0 0
          %2491 = vmatpush1.bf16.msra.mxu0 %v1893
          %2492 = vmatprep.subr.bf16.mxu0 0
          %2493 = vmatpush1.bf16.msra.mxu0 0
          %2494 = vmatprep.subr.bf16.mxu0 0
          %2495 = vmatpush1.bf16.msra.mxu0 0
          %2496 = vmatprep.subr.bf16.mxu0 0
          %2497 = vmatpush1.bf16.msra.mxu0 0
          %2498 = vmatprep.subr.bf16.mxu0 0
          %2499 = vmatpush1.bf16.msra.mxu0 0
          %2500 = vmatprep.subr.bf16.mxu0 0
          %2501 = vmatpush1.bf16.msra.mxu0 0
          %2502 = vmatprep.subr.bf16.mxu0 0
          %2503 = vmatpush1.bf16.msra.mxu0 0
          %2504 = vmatprep.subr.bf16.mxu0 0
          %2505 = vmatpush1.bf16.msra.mxu0 0
          %2506 = vmatprep.subr.bf16.mxu0 0
          %2507 = vmatpush1.bf16.msra.mxu0 0
          %2508 = vmatprep.subr.bf16.mxu0 0
          %2509 = vmatpush1.bf16.msra.mxu0 0
          %2510 = vmatprep.subr.bf16.mxu0 0
          %2511 = vmatpush1.bf16.msra.mxu0 0
          %2512 = vmatprep.subr.bf16.mxu0 0
          %2513 = vmatpush1.bf16.msra.mxu0 0
          %2514 = vmatprep.subr.bf16.mxu0 0
          %2515 = vmatpush1.bf16.msra.mxu0 0
          %2516 = vmatprep.subr.bf16.mxu0 0
          %2517 = vmatpush1.bf16.msra.mxu0 0
          %2518 = vmatprep.subr.bf16.mxu0 0
          %2519 = vmatpush1.bf16.msra.mxu0 0
          %2520 = vmatprep.mubr.bf16.mxu0 0
          %2521 = vmatmul.mubr.bf16.gmra.mrb[0].mxu0 %v2486
          %v2522 = vpop.f32.mrb[0].mxu0
          %v2523 = vadd.f32 0.0, %v2522
          %v2524 = vpop.f32.mrb[0].mxu0
          %v2525 = vpop.f32.mrb[0].mxu0
          %v2526 = vpop.f32.mrb[0].mxu0
          %2527 = vdwg.mxu0
          %v2528 = vadd.f32 %v1879, %v2523
          %v2529 = vmul.f32 %v2528, %v1772
          %v2530 = vtanh.pop %v2529
          %v2531 = vadd.f32 %v2530, 1.0
          %v2532 = vmul.f32 %v2531, 0.5
          %v2534 = vrot.slane %v2473, 4
          %v2536 = vmul.f32 %v2532, %v2534
          %2538 = vrot.lane.b32.xlu0 %v2530, 64
          %v2539 = vpop.permute.xlu0 %2538
          %v2541 = vmul.f32 %v2532, %v2539
          %2543 = vrot.lane.b32.xlu0 %v2541, 32
          %v2544 = vpop.permute.xlu0 %2543
          %v2546 = vadd.f32 %v2536, %v2544
          %v2547 = vtanh.pop %v2546
          %2549 = vrot.lane.b32.xlu0 %v2547, 64
          %v2550 = vpop.permute.xlu0 %2549
          %v2552 = vmul.f32 %v2532, %v2550
          %vm2553 = vcmask 1043456
          %v2554 = vsel %vm2553, %v1960, %v2035
          %v2555 = vsel %vm2553, %v2108, %v2183
          %v2556 = vsel %vm2553, %v2256, %v2331
          %v2557 = vsel %vm2553, %v2404, %v2479
          %2563 = vrot.lane.b32.xlu0 %v2554, 32
          %v2564 = vpop.permute.xlu0 %2563
          %2565 = vrot.lane.b32.xlu0 %v2555, 32
          %v2566 = vpop.permute.xlu0 %2565
          %2567 = vrot.lane.b32.xlu0 %v2556, 32
          %v2568 = vpop.permute.xlu0 %2567
          %2569 = vrot.lane.b32.xlu0 %v2557, 32
          %v2570 = vpop.permute.xlu0 %2569
          %2571 = vrot.lane.b32.xlu0 %v2552, 32
          %v2572 = vpop.permute.xlu0 %2571
        $region81: #{tpu_custom_call.1} parent=51 // loop_footer
          %s1778 = sadd.s32 1, %s1774
        $region82: #{tpu_custom_call.1} parent=51 // loop_footer_branch
          %1773 = sbr.rel target = $region78
        $region83: #{tpu_custom_call.1} parent=51 // loop_exit
          _
        %vm2578 = vcmask 261120
        %v2579 = vsel %vm2578, %v1779, 0.0
        %v2580 = vsel %vm2578, %v1780, 0.0
        %v2581 = vsel %vm2578, %v1781, 0.0
        %v2582 = vsel %vm2578, %v1782, 0.0
        %v2583 = vsel %vm2578, %v1783, 0.0
        %v2584 = vpack.c.bf16 %v2580, %v2579
        %v2585 = vpack.c.bf16 0.0, 0.0
        %v2586 = vpack.c.bf16 %v2582, %v2581
        %v2587 = vpack.c.bf16 %v2583, %v2583
        %v2588 = vld [vmem:[#allocation10] sm:$0xff]
        %v2589 = vld [vmem:[#allocation10 + $0x8] sm:$0xff]
        %v2590 = vld [vmem:[#allocation10 + $0x10] sm:$0xff]
        %v2591 = vld [vmem:[#allocation10 + $0x18] sm:$0xff]
        %v2592 = vld [vmem:[#allocation10 + $0x20] sm:$0xff]
        %v2593 = vld [vmem:[#allocation10 + $0x28] sm:$0xff]
        %v2594 = vld [vmem:[#allocation10 + $0x30] sm:$0xff]
        %v2595 = vld [vmem:[#allocation10 + $0x38] sm:$0xff]
        %v2596 = vld [vmem:[#allocation10 + $0x40] sm:$0xff]
        %v2597 = vld [vmem:[#allocation10 + $0x48] sm:$0xff]
        %v2598 = vld [vmem:[#allocation10 + $0x50] sm:$0xff]
        %v2599 = vld [vmem:[#allocation10 + $0x58] sm:$0xff]
        %v2600 = vld [vmem:[#allocation10 + $0x60] sm:$0xff]
        %v2601 = vld [vmem:[#allocation10 + $0x68] sm:$0xff]
        %v2602 = vld [vmem:[#allocation10 + $0x70] sm:$0xff]
        %v2603 = vld [vmem:[#allocation10 + $0x78] sm:$0xff]
        %v2604 = vld [vmem:[#allocation10 + $0x80] sm:$0xff]
        %v2605 = vld [vmem:[#allocation10 + $0x88] sm:$0xff]
        %v2606 = vld [vmem:[#allocation10 + $0x90] sm:$0xff]
        %v2607 = vld [vmem:[#allocation10 + $0x98] sm:$0xff]
        %v2608 = vld [vmem:[#allocation10 + $0xa0] sm:$0xff]
        %v2609 = vld [vmem:[#allocation10 + $0xa8] sm:$0xff]
        %v2610 = vld [vmem:[#allocation10 + $0xb0] sm:$0xff]
        %v2611 = vld [vmem:[#allocation10 + $0xb8] sm:$0xff]
        %v2612 = vld [vmem:[#allocation10 + $0xc0] sm:$0xff]
        %v2613 = vld [vmem:[#allocation10 + $0xc8] sm:$0xff]
        %v2614 = vld [vmem:[#allocation10 + $0xd0] sm:$0xff]
        %v2615 = vld [vmem:[#allocation10 + $0xd8] sm:$0xff]
        %v2616 = vld [vmem:[#allocation10 + $0xe0] sm:$0xff]
        %v2617 = vld [vmem:[#allocation10 + $0xe8] sm:$0xff]
        %v2618 = vld [vmem:[#allocation10 + $0xf0] sm:$0xff]
        %v2619 = vld [vmem:[#allocation10 + $0xf8] sm:$0xff]
        %v2620 = vld [vmem:[%s7] sm:$0x3]
        %v2622 = vlaneseq
        %v2623 = vshrl.u32 %v2622, 7
        %v2624 = vsub.s32 0, %v2623
        %v2625 = vrot.slane %v2620, %v2624
        %v2626 = vlaneseq
        %v2627 = vshrl.u32 %v2626, 7
        %v2628 = vsub.s32 1, %v2627
        %v2629 = vrot.slane %v2620, %v2628
        %v2664 = vunpack.c.l.b16 %v2588
        %v2665 = vunpack.c.h.b16 %v2588
        %v2666 = vunpack.c.l.b16 %v2589
        %v2667 = vunpack.c.h.b16 %v2589
        %v2668 = vunpack.c.l.b16 %v2590
        %v2669 = vunpack.c.h.b16 %v2590
        %v2670 = vunpack.c.l.b16 %v2591
        %v2671 = vunpack.c.h.b16 %v2591
        %v2672 = vunpack.c.l.b16 %v2592
        %v2673 = vunpack.c.h.b16 %v2592
        %v2674 = vunpack.c.l.b16 %v2593
        %v2675 = vunpack.c.h.b16 %v2593
        %v2676 = vunpack.c.l.b16 %v2594
        %v2677 = vunpack.c.h.b16 %v2594
        %v2678 = vunpack.c.l.b16 %v2595
        %v2679 = vunpack.c.h.b16 %v2595
        %v2680 = vunpack.c.l.b16 %v2596
        %v2681 = vunpack.c.h.b16 %v2596
        %v2682 = vunpack.c.l.b16 %v2597
        %v2683 = vunpack.c.h.b16 %v2597
        %v2684 = vunpack.c.l.b16 %v2598
        %v2685 = vunpack.c.h.b16 %v2598
        %v2686 = vunpack.c.l.b16 %v2599
        %v2687 = vunpack.c.h.b16 %v2599
        %v2688 = vunpack.c.l.b16 %v2600
        %v2689 = vunpack.c.h.b16 %v2600
        %v2690 = vunpack.c.l.b16 %v2601
        %v2691 = vunpack.c.h.b16 %v2601
        %v2692 = vunpack.c.l.b16 %v2602
        %v2693 = vunpack.c.h.b16 %v2602
        %v2694 = vunpack.c.l.b16 %v2603
        %v2695 = vunpack.c.h.b16 %v2603
        %v2696 = vunpack.c.l.b16 %v2604
        %v2697 = vunpack.c.h.b16 %v2604
        %v2698 = vunpack.c.l.b16 %v2605
        %v2699 = vunpack.c.h.b16 %v2605
        %v2700 = vunpack.c.l.b16 %v2606
        %v2701 = vunpack.c.h.b16 %v2606
        %v2702 = vunpack.c.l.b16 %v2607
        %v2703 = vunpack.c.h.b16 %v2607
        %v2704 = vunpack.c.l.b16 %v2608
        %v2705 = vunpack.c.h.b16 %v2608
        %v2706 = vunpack.c.l.b16 %v2609
        %v2707 = vunpack.c.h.b16 %v2609
        %v2708 = vunpack.c.l.b16 %v2610
        %v2709 = vunpack.c.h.b16 %v2610
        %v2710 = vunpack.c.l.b16 %v2611
        %v2711 = vunpack.c.h.b16 %v2611
        %v2712 = vunpack.c.l.b16 %v2612
        %v2713 = vunpack.c.h.b16 %v2612
        %v2714 = vunpack.c.l.b16 %v2613
        %v2715 = vunpack.c.h.b16 %v2613
        %v2716 = vunpack.c.l.b16 %v2614
        %v2717 = vunpack.c.h.b16 %v2614
        %v2718 = vunpack.c.l.b16 %v2615
        %v2719 = vunpack.c.h.b16 %v2615
        %v2720 = vunpack.c.l.b16 %v2616
        %v2721 = vunpack.c.h.b16 %v2616
        %v2722 = vunpack.c.l.b16 %v2617
        %v2723 = vunpack.c.h.b16 %v2617
        %v2724 = vunpack.c.l.b16 %v2618
        %v2725 = vunpack.c.h.b16 %v2618
        %v2726 = vunpack.c.l.b16 %v2619
        %v2727 = vunpack.c.h.b16 %v2619
        %v2728 = vpack.c.b16 %v2666, %v2664
        %v2729 = vpack.c.b16 %v2667, %v2665
        %v2730 = vpack.c.b16 %v2670, %v2668
        %v2731 = vpack.c.b16 %v2671, %v2669
        %v2732 = vpack.c.b16 %v2674, %v2672
        %v2733 = vpack.c.b16 %v2675, %v2673
        %v2734 = vpack.c.b16 %v2678, %v2676
        %v2735 = vpack.c.b16 %v2679, %v2677
        %v2736 = vpack.c.b16 %v2682, %v2680
        %v2737 = vpack.c.b16 %v2683, %v2681
        %v2738 = vpack.c.b16 %v2686, %v2684
        %v2739 = vpack.c.b16 %v2687, %v2685
        %v2740 = vpack.c.b16 %v2690, %v2688
        %v2741 = vpack.c.b16 %v2691, %v2689
        %v2742 = vpack.c.b16 %v2694, %v2692
        %v2743 = vpack.c.b16 %v2695, %v2693
        %v2744 = vpack.c.b16 %v2698, %v2696
        %v2745 = vpack.c.b16 %v2699, %v2697
        %v2746 = vpack.c.b16 %v2702, %v2700
        %v2747 = vpack.c.b16 %v2703, %v2701
        %v2748 = vpack.c.b16 %v2706, %v2704
        %v2749 = vpack.c.b16 %v2707, %v2705
        %v2750 = vpack.c.b16 %v2710, %v2708
        %v2751 = vpack.c.b16 %v2711, %v2709
        %v2752 = vpack.c.b16 %v2714, %v2712
        %v2753 = vpack.c.b16 %v2715, %v2713
        %v2754 = vpack.c.b16 %v2718, %v2716
        %v2755 = vpack.c.b16 %v2719, %v2717
        %v2756 = vpack.c.b16 %v2722, %v2720
        %v2757 = vpack.c.b16 %v2723, %v2721
        %v2758 = vpack.c.b16 %v2726, %v2724
        %v2759 = vpack.c.b16 %v2727, %v2725
        %2792 = vmatprep.subr.bf16.mxu0 %v2729
        %2793 = vmatpush1.bf16.msra.mxu0 %v2728
        %2794 = vmatprep.subr.bf16.mxu0 %v2731
        %2795 = vmatpush1.bf16.msra.mxu0 %v2730
        %2796 = vmatprep.subr.bf16.mxu0 %v2733
        %2797 = vmatpush1.bf16.msra.mxu0 %v2732
        %2798 = vmatprep.subr.bf16.mxu0 %v2735
        %2799 = vmatpush1.bf16.msra.mxu0 %v2734
        %2800 = vmatprep.subr.bf16.mxu0 %v2737
        %2801 = vmatpush1.bf16.msra.mxu0 %v2736
        %2802 = vmatprep.subr.bf16.mxu0 %v2739
        %2803 = vmatpush1.bf16.msra.mxu0 %v2738
        %2804 = vmatprep.subr.bf16.mxu0 %v2741
        %2805 = vmatpush1.bf16.msra.mxu0 %v2740
        %2806 = vmatprep.subr.bf16.mxu0 %v2743
        %2807 = vmatpush1.bf16.msra.mxu0 %v2742
        %2808 = vmatprep.subr.bf16.mxu0 %v2745
        %2809 = vmatpush1.bf16.msra.mxu0 %v2744
        %2810 = vmatprep.subr.bf16.mxu0 %v2747
        %2811 = vmatpush1.bf16.msra.mxu0 %v2746
        %2812 = vmatprep.subr.bf16.mxu0 %v2749
        %2813 = vmatpush1.bf16.msra.mxu0 %v2748
        %2814 = vmatprep.subr.bf16.mxu0 %v2751
        %2815 = vmatpush1.bf16.msra.mxu0 %v2750
        %2816 = vmatprep.subr.bf16.mxu0 %v2753
        %2817 = vmatpush1.bf16.msra.mxu0 %v2752
        %2818 = vmatprep.subr.bf16.mxu0 %v2755
        %2819 = vmatpush1.bf16.msra.mxu0 %v2754
        %2820 = vmatprep.subr.bf16.mxu0 %v2757
        %2821 = vmatpush1.bf16.msra.mxu0 %v2756
        %2822 = vmatprep.subr.bf16.mxu0 %v2759
        %2823 = vmatpush1.bf16.msra.mxu0 %v2758
        %2824 = vmatprep.mubr.bf16.mxu0 %v2585
        %2825 = vmatmul.mubr.bf16.gmra.mrb[0].mxu0 %v2584
        %v2826 = vpop.f32.mrb[0].mxu0
        %v2827 = vadd.f32 %v2625, %v2826
        %v2828 = vpop.f32.mrb[0].mxu0
        %v2829 = vadd.f32 %v2629, %v2828
        %v2830 = vpop.f32.mrb[0].mxu0
        %v2831 = vadd.f32 %v2625, %v2830
        %v2832 = vpop.f32.mrb[0].mxu0
        %v2833 = vadd.f32 %v2629, %v2832
        %2834 = vmatprep.mubr.bf16.mxu0 %v2585
        %2835 = vmatmul.mubr.bf16.gmra.mrb[0].mxu0 %v2586
        %v2836 = vpop.f32.mrb[0].mxu0
        %v2837 = vadd.f32 %v2625, %v2836
        %v2838 = vpop.f32.mrb[0].mxu0
        %v2839 = vadd.f32 %v2629, %v2838
        %v2840 = vpop.f32.mrb[0].mxu0
        %v2841 = vadd.f32 %v2625, %v2840
        %v2842 = vpop.f32.mrb[0].mxu0
        %v2843 = vadd.f32 %v2629, %v2842
        %2844 = vmatprep.mubr.bf16.mxu0 %v2585
        %2845 = vmatmul.mubr.bf16.gmra.mrb[0].mxu0 %v2587
        %v2846 = vpop.f32.mrb[0].mxu0
        %v2847 = vadd.f32 %v2625, %v2846
        %v2848 = vpop.f32.mrb[0].mxu0
        %v2849 = vadd.f32 %v2629, %v2848
        %v2850 = vpop.f32.mrb[0].mxu0
        %v2851 = vpop.f32.mrb[0].mxu0
        %2852 = vdwg.mxu0
        %v2853 = vmax.f32 %v2827, 0.0
        %v2854 = vmax.f32 %v2829, 0.0
        %v2855 = vmax.f32 %v2831, 0.0
        %v2856 = vmax.f32 %v2833, 0.0
        %v2857 = vmax.f32 %v2837, 0.0
        %v2858 = vmax.f32 %v2839, 0.0
        %v2859 = vmax.f32 %v2841, 0.0
        %v2860 = vmax.f32 %v2843, 0.0
        %v2861 = vmax.f32 %v2847, 0.0
        %v2862 = vmax.f32 %v2849, 0.0
        %v2863 = vpack.c.bf16 %v2855, %v2853
        %v2864 = vpack.c.bf16 %v2856, %v2854
        %v2865 = vpack.c.bf16 %v2859, %v2857
        %v2866 = vpack.c.bf16 %v2860, %v2858
        %v2867 = vpack.c.bf16 %v2861, %v2861
        %v2868 = vpack.c.bf16 %v2862, %v2862
        %s2869 = scalar_lea.vmem [#allocation10], 256
        %v2870 = vld [vmem:[%s2869] sm:$0xff]
        %v2871 = vld [vmem:[%s2869 + $0x8] sm:$0xff]
        %v2872 = vld [vmem:[%s2869 + $0x10] sm:$0xff]
        %v2873 = vld [vmem:[%s2869 + $0x18] sm:$0xff]
        %v2874 = vld [vmem:[%s2869 + $0x20] sm:$0xff]
        %v2875 = vld [vmem:[%s2869 + $0x28] sm:$0xff]
        %v2876 = vld [vmem:[%s2869 + $0x30] sm:$0xff]
        %v2877 = vld [vmem:[%s2869 + $0x38] sm:$0xff]
        %v2878 = vld [vmem:[%s2869 + $0x40] sm:$0xff]
        %v2879 = vld [vmem:[%s2869 + $0x48] sm:$0xff]
        %v2880 = vld [vmem:[%s2869 + $0x50] sm:$0xff]
        %v2881 = vld [vmem:[%s2869 + $0x58] sm:$0xff]
        %v2882 = vld [vmem:[%s2869 + $0x60] sm:$0xff]
        %v2883 = vld [vmem:[%s2869 + $0x68] sm:$0xff]
        %v2884 = vld [vmem:[%s2869 + $0x70] sm:$0xff]
        %v2885 = vld [vmem:[%s2869 + $0x78] sm:$0xff]
        %v2886 = vld [vmem:[%s2869 + $0x80] sm:$0xff]
        %v2887 = vld [vmem:[%s2869 + $0x88] sm:$0xff]
        %v2888 = vld [vmem:[%s2869 + $0x90] sm:$0xff]
        %v2889 = vld [vmem:[%s2869 + $0x98] sm:$0xff]
        %v2890 = vld [vmem:[%s2869 + $0xa0] sm:$0xff]
        %v2891 = vld [vmem:[%s2869 + $0xa8] sm:$0xff]
        %v2892 = vld [vmem:[%s2869 + $0xb0] sm:$0xff]
        %v2893 = vld [vmem:[%s2869 + $0xb8] sm:$0xff]
        %v2894 = vld [vmem:[%s2869 + $0xc0] sm:$0xff]
        %v2895 = vld [vmem:[%s2869 + $0xc8] sm:$0xff]
        %v2896 = vld [vmem:[%s2869 + $0xd0] sm:$0xff]
        %v2897 = vld [vmem:[%s2869 + $0xd8] sm:$0xff]
        %v2898 = vld [vmem:[%s2869 + $0xe0] sm:$0xff]
        %v2899 = vld [vmem:[%s2869 + $0xe8] sm:$0xff]
        %v2900 = vld [vmem:[%s2869 + $0xf0] sm:$0xff]
        %v2901 = vld [vmem:[%s2869 + $0xf8] sm:$0xff]
        %s2902 = scalar_lea.vmem %s7, 2
        %v2903 = vld [vmem:[%s2902] sm:$0x3]
        %v2905 = vlaneseq
        %v2906 = vshrl.u32 %v2905, 7
        %v2907 = vsub.s32 0, %v2906
        %v2908 = vrot.slane %v2903, %v2907
        %v2909 = vlaneseq
        %v2910 = vshrl.u32 %v2909, 7
        %v2911 = vsub.s32 1, %v2910
        %v2912 = vrot.slane %v2903, %v2911
        %v2947 = vunpack.c.l.b16 %v2870
        %v2948 = vunpack.c.h.b16 %v2870
        %v2949 = vunpack.c.l.b16 %v2871
        %v2950 = vunpack.c.h.b16 %v2871
        %v2951 = vunpack.c.l.b16 %v2872
        %v2952 = vunpack.c.h.b16 %v2872
        %v2953 = vunpack.c.l.b16 %v2873
        %v2954 = vunpack.c.h.b16 %v2873
        %v2955 = vunpack.c.l.b16 %v2874
        %v2956 = vunpack.c.h.b16 %v2874
        %v2957 = vunpack.c.l.b16 %v2875
        %v2958 = vunpack.c.h.b16 %v2875
        %v2959 = vunpack.c.l.b16 %v2876
        %v2960 = vunpack.c.h.b16 %v2876
        %v2961 = vunpack.c.l.b16 %v2877
        %v2962 = vunpack.c.h.b16 %v2877
        %v2963 = vunpack.c.l.b16 %v2878
        %v2964 = vunpack.c.h.b16 %v2878
        %v2965 = vunpack.c.l.b16 %v2879
        %v2966 = vunpack.c.h.b16 %v2879
        %v2967 = vunpack.c.l.b16 %v2880
        %v2968 = vunpack.c.h.b16 %v2880
        %v2969 = vunpack.c.l.b16 %v2881
        %v2970 = vunpack.c.h.b16 %v2881
        %v2971 = vunpack.c.l.b16 %v2882
        %v2972 = vunpack.c.h.b16 %v2882
        %v2973 = vunpack.c.l.b16 %v2883
        %v2974 = vunpack.c.h.b16 %v2883
        %v2975 = vunpack.c.l.b16 %v2884
        %v2976 = vunpack.c.h.b16 %v2884
        %v2977 = vunpack.c.l.b16 %v2885
        %v2978 = vunpack.c.h.b16 %v2885
        %v2979 = vunpack.c.l.b16 %v2886
        %v2980 = vunpack.c.h.b16 %v2886
        %v2981 = vunpack.c.l.b16 %v2887
        %v2982 = vunpack.c.h.b16 %v2887
        %v2983 = vunpack.c.l.b16 %v2888
        %v2984 = vunpack.c.h.b16 %v2888
        %v2985 = vunpack.c.l.b16 %v2889
        %v2986 = vunpack.c.h.b16 %v2889
        %v2987 = vunpack.c.l.b16 %v2890
        %v2988 = vunpack.c.h.b16 %v2890
        %v2989 = vunpack.c.l.b16 %v2891
        %v2990 = vunpack.c.h.b16 %v2891
        %v2991 = vunpack.c.l.b16 %v2892
        %v2992 = vunpack.c.h.b16 %v2892
        %v2993 = vunpack.c.l.b16 %v2893
        %v2994 = vunpack.c.h.b16 %v2893
        %v2995 = vunpack.c.l.b16 %v2894
        %v2996 = vunpack.c.h.b16 %v2894
        %v2997 = vunpack.c.l.b16 %v2895
        %v2998 = vunpack.c.h.b16 %v2895
        %v2999 = vunpack.c.l.b16 %v2896
        %v3000 = vunpack.c.h.b16 %v2896
        %v3001 = vunpack.c.l.b16 %v2897
        %v3002 = vunpack.c.h.b16 %v2897
        %v3003 = vunpack.c.l.b16 %v2898
        %v3004 = vunpack.c.h.b16 %v2898
        %v3005 = vunpack.c.l.b16 %v2899
        %v3006 = vunpack.c.h.b16 %v2899
        %v3007 = vunpack.c.l.b16 %v2900
        %v3008 = vunpack.c.h.b16 %v2900
        %v3009 = vunpack.c.l.b16 %v2901
        %v3010 = vunpack.c.h.b16 %v2901
        %v3011 = vpack.c.b16 %v2949, %v2947
        %v3012 = vpack.c.b16 %v2950, %v2948
        %v3013 = vpack.c.b16 %v2953, %v2951
        %v3014 = vpack.c.b16 %v2954, %v2952
        %v3015 = vpack.c.b16 %v2957, %v2955
        %v3016 = vpack.c.b16 %v2958, %v2956
        %v3017 = vpack.c.b16 %v2961, %v2959
        %v3018 = vpack.c.b16 %v2962, %v2960
        %v3019 = vpack.c.b16 %v2965, %v2963
        %v3020 = vpack.c.b16 %v2966, %v2964
        %v3021 = vpack.c.b16 %v2969, %v2967
        %v3022 = vpack.c.b16 %v2970, %v2968
        %v3023 = vpack.c.b16 %v2973, %v2971
        %v3024 = vpack.c.b16 %v2974, %v2972
        %v3025 = vpack.c.b16 %v2977, %v2975
        %v3026 = vpack.c.b16 %v2978, %v2976
        %v3027 = vpack.c.b16 %v2981, %v2979
        %v3028 = vpack.c.b16 %v2982, %v2980
        %v3029 = vpack.c.b16 %v2985, %v2983
        %v3030 = vpack.c.b16 %v2986, %v2984
        %v3031 = vpack.c.b16 %v2989, %v2987
        %v3032 = vpack.c.b16 %v2990, %v2988
        %v3033 = vpack.c.b16 %v2993, %v2991
        %v3034 = vpack.c.b16 %v2994, %v2992
        %v3035 = vpack.c.b16 %v2997, %v2995
        %v3036 = vpack.c.b16 %v2998, %v2996
        %v3037 = vpack.c.b16 %v3001, %v2999
        %v3038 = vpack.c.b16 %v3002, %v3000
        %v3039 = vpack.c.b16 %v3005, %v3003
        %v3040 = vpack.c.b16 %v3006, %v3004
        %v3041 = vpack.c.b16 %v3009, %v3007
        %v3042 = vpack.c.b16 %v3010, %v3008
        %3075 = vmatprep.subr.bf16.mxu0 %v3012
        %3076 = vmatpush1.bf16.msra.mxu0 %v3011
        %3077 = vmatprep.subr.bf16.mxu0 %v3014
        %3078 = vmatpush1.bf16.msra.mxu0 %v3013
        %3079 = vmatprep.subr.bf16.mxu0 %v3016
        %3080 = vmatpush1.bf16.msra.mxu0 %v3015
        %3081 = vmatprep.subr.bf16.mxu0 %v3018
        %3082 = vmatpush1.bf16.msra.mxu0 %v3017
        %3083 = vmatprep.subr.bf16.mxu0 %v3020
        %3084 = vmatpush1.bf16.msra.mxu0 %v3019
        %3085 = vmatprep.subr.bf16.mxu0 %v3022
        %3086 = vmatpush1.bf16.msra.mxu0 %v3021
        %3087 = vmatprep.subr.bf16.mxu0 %v3024
        %3088 = vmatpush1.bf16.msra.mxu0 %v3023
        %3089 = vmatprep.subr.bf16.mxu0 %v3026
        %3090 = vmatpush1.bf16.msra.mxu0 %v3025
        %3091 = vmatprep.subr.bf16.mxu0 %v3028
        %3092 = vmatpush1.bf16.msra.mxu0 %v3027
        %3093 = vmatprep.subr.bf16.mxu0 %v3030
        %3094 = vmatpush1.bf16.msra.mxu0 %v3029
        %3095 = vmatprep.subr.bf16.mxu0 %v3032
        %3096 = vmatpush1.bf16.msra.mxu0 %v3031
        %3097 = vmatprep.subr.bf16.mxu0 %v3034
        %3098 = vmatpush1.bf16.msra.mxu0 %v3033
        %3099 = vmatprep.subr.bf16.mxu0 %v3036
        %3100 = vmatpush1.bf16.msra.mxu0 %v3035
        %3101 = vmatprep.subr.bf16.mxu0 %v3038
        %3102 = vmatpush1.bf16.msra.mxu0 %v3037
        %3103 = vmatprep.subr.bf16.mxu0 %v3040
        %3104 = vmatpush1.bf16.msra.mxu0 %v3039
        %3105 = vmatprep.subr.bf16.mxu0 %v3042
        %3106 = vmatpush1.bf16.msra.mxu0 %v3041
        %3107 = vmatprep.mubr.bf16.mxu0 %v2864
        %3108 = vmatmul.mubr.bf16.gmra.mrb[0].mxu0 %v2863
        %v3109 = vpop.f32.mrb[0].mxu0
        %v3110 = vadd.f32 %v2908, %v3109
        %v3111 = vpop.f32.mrb[0].mxu0
        %v3112 = vadd.f32 %v2912, %v3111
        %v3113 = vpop.f32.mrb[0].mxu0
        %v3114 = vadd.f32 %v2908, %v3113
        %v3115 = vpop.f32.mrb[0].mxu0
        %v3116 = vadd.f32 %v2912, %v3115
        %3117 = vmatprep.mubr.bf16.mxu0 %v2866
        %3118 = vmatmul.mubr.bf16.gmra.mrb[0].mxu0 %v2865
        %v3119 = vpop.f32.mrb[0].mxu0
        %v3120 = vadd.f32 %v2908, %v3119
        %v3121 = vpop.f32.mrb[0].mxu0
        %v3122 = vadd.f32 %v2912, %v3121
        %v3123 = vpop.f32.mrb[0].mxu0
        %v3124 = vadd.f32 %v2908, %v3123
        %v3125 = vpop.f32.mrb[0].mxu0
        %v3126 = vadd.f32 %v2912, %v3125
        %3127 = vmatprep.mubr.bf16.mxu0 %v2868
        %3128 = vmatmul.mubr.bf16.gmra.mrb[0].mxu0 %v2867
        %v3129 = vpop.f32.mrb[0].mxu0
        %v3130 = vadd.f32 %v2908, %v3129
        %v3131 = vpop.f32.mrb[0].mxu0
        %v3132 = vadd.f32 %v2912, %v3131
        %v3133 = vpop.f32.mrb[0].mxu0
        %v3134 = vpop.f32.mrb[0].mxu0
        %3135 = vdwg.mxu0
        %v3136 = vmax.f32 %v3110, 0.0
        %v3137 = vmax.f32 %v3112, 0.0
        %v3138 = vmax.f32 %v3114, 0.0
        %v3139 = vmax.f32 %v3116, 0.0
        %v3140 = vmax.f32 %v3120, 0.0
        %v3141 = vmax.f32 %v3122, 0.0
        %v3142 = vmax.f32 %v3124, 0.0
        %v3143 = vmax.f32 %v3126, 0.0
        %v3144 = vmax.f32 %v3130, 0.0
        %v3145 = vmax.f32 %v3132, 0.0
        %v3146 = vpack.c.bf16 %v3138, %v3136
        %v3147 = vpack.c.bf16 %v3139, %v3137
        %v3148 = vpack.c.bf16 %v3142, %v3140
        %v3149 = vpack.c.bf16 %v3143, %v3141
        %v3150 = vpack.c.bf16 %v3144, %v3144
        %v3151 = vpack.c.bf16 %v3145, %v3145
        %s3152 = scalar_lea.vmem [#allocation10], 512
        %v3153 = vld [vmem:[%s3152] sm:$0xff]
        %v3154 = vld [vmem:[%s3152 + $0x8] sm:$0xff]
        %v3155 = vld [vmem:[%s3152 + $0x10] sm:$0xff]
        %v3156 = vld [vmem:[%s3152 + $0x18] sm:$0xff]
        %v3157 = vld [vmem:[%s3152 + $0x20] sm:$0xff]
        %v3158 = vld [vmem:[%s3152 + $0x28] sm:$0xff]
        %v3159 = vld [vmem:[%s3152 + $0x30] sm:$0xff]
        %v3160 = vld [vmem:[%s3152 + $0x38] sm:$0xff]
        %v3161 = vld [vmem:[%s3152 + $0x40] sm:$0xff]
        %v3162 = vld [vmem:[%s3152 + $0x48] sm:$0xff]
        %v3163 = vld [vmem:[%s3152 + $0x50] sm:$0xff]
        %v3164 = vld [vmem:[%s3152 + $0x58] sm:$0xff]
        %v3165 = vld [vmem:[%s3152 + $0x60] sm:$0xff]
        %v3166 = vld [vmem:[%s3152 + $0x68] sm:$0xff]
        %v3167 = vld [vmem:[%s3152 + $0x70] sm:$0xff]
        %v3168 = vld [vmem:[%s3152 + $0x78] sm:$0xff]
        %v3169 = vld [vmem:[%s3152 + $0x80] sm:$0xff]
        %v3170 = vld [vmem:[%s3152 + $0x88] sm:$0xff]
        %v3171 = vld [vmem:[%s3152 + $0x90] sm:$0xff]
        %v3172 = vld [vmem:[%s3152 + $0x98] sm:$0xff]
        %v3173 = vld [vmem:[%s3152 + $0xa0] sm:$0xff]
        %v3174 = vld [vmem:[%s3152 + $0xa8] sm:$0xff]
        %v3175 = vld [vmem:[%s3152 + $0xb0] sm:$0xff]
        %v3176 = vld [vmem:[%s3152 + $0xb8] sm:$0xff]
        %v3177 = vld [vmem:[%s3152 + $0xc0] sm:$0xff]
        %v3178 = vld [vmem:[%s3152 + $0xc8] sm:$0xff]
        %v3179 = vld [vmem:[%s3152 + $0xd0] sm:$0xff]
        %v3180 = vld [vmem:[%s3152 + $0xd8] sm:$0xff]
        %v3181 = vld [vmem:[%s3152 + $0xe0] sm:$0xff]
        %v3182 = vld [vmem:[%s3152 + $0xe8] sm:$0xff]
        %v3183 = vld [vmem:[%s3152 + $0xf0] sm:$0xff]
        %v3184 = vld [vmem:[%s3152 + $0xf8] sm:$0xff]
        %s3185 = scalar_lea.vmem %s7, 4
        %v3186 = vld [vmem:[%s3185] sm:$0x3]
        %v3188 = vlaneseq
        %v3189 = vshrl.u32 %v3188, 7
        %v3190 = vsub.s32 0, %v3189
        %v3191 = vrot.slane %v3186, %v3190
        %v3192 = vlaneseq
        %v3193 = vshrl.u32 %v3192, 7
        %v3194 = vsub.s32 1, %v3193
        %v3195 = vrot.slane %v3186, %v3194
        %v3230 = vunpack.c.l.b16 %v3153
        %v3231 = vunpack.c.h.b16 %v3153
        %v3232 = vunpack.c.l.b16 %v3154
        %v3233 = vunpack.c.h.b16 %v3154
        %v3234 = vunpack.c.l.b16 %v3155
        %v3235 = vunpack.c.h.b16 %v3155
        %v3236 = vunpack.c.l.b16 %v3156
        %v3237 = vunpack.c.h.b16 %v3156
        %v3238 = vunpack.c.l.b16 %v3157
        %v3239 = vunpack.c.h.b16 %v3157
        %v3240 = vunpack.c.l.b16 %v3158
        %v3241 = vunpack.c.h.b16 %v3158
        %v3242 = vunpack.c.l.b16 %v3159
        %v3243 = vunpack.c.h.b16 %v3159
        %v3244 = vunpack.c.l.b16 %v3160
        %v3245 = vunpack.c.h.b16 %v3160
        %v3246 = vunpack.c.l.b16 %v3161
        %v3247 = vunpack.c.h.b16 %v3161
        %v3248 = vunpack.c.l.b16 %v3162
        %v3249 = vunpack.c.h.b16 %v3162
        %v3250 = vunpack.c.l.b16 %v3163
        %v3251 = vunpack.c.h.b16 %v3163
        %v3252 = vunpack.c.l.b16 %v3164
        %v3253 = vunpack.c.h.b16 %v3164
        %v3254 = vunpack.c.l.b16 %v3165
        %v3255 = vunpack.c.h.b16 %v3165
        %v3256 = vunpack.c.l.b16 %v3166
        %v3257 = vunpack.c.h.b16 %v3166
        %v3258 = vunpack.c.l.b16 %v3167
        %v3259 = vunpack.c.h.b16 %v3167
        %v3260 = vunpack.c.l.b16 %v3168
        %v3261 = vunpack.c.h.b16 %v3168
        %v3262 = vunpack.c.l.b16 %v3169
        %v3263 = vunpack.c.h.b16 %v3169
        %v3264 = vunpack.c.l.b16 %v3170
        %v3265 = vunpack.c.h.b16 %v3170
        %v3266 = vunpack.c.l.b16 %v3171
        %v3267 = vunpack.c.h.b16 %v3171
        %v3268 = vunpack.c.l.b16 %v3172
        %v3269 = vunpack.c.h.b16 %v3172
        %v3270 = vunpack.c.l.b16 %v3173
        %v3271 = vunpack.c.h.b16 %v3173
        %v3272 = vunpack.c.l.b16 %v3174
        %v3273 = vunpack.c.h.b16 %v3174
        %v3274 = vunpack.c.l.b16 %v3175
        %v3275 = vunpack.c.h.b16 %v3175
        %v3276 = vunpack.c.l.b16 %v3176
        %v3277 = vunpack.c.h.b16 %v3176
        %v3278 = vunpack.c.l.b16 %v3177
        %v3279 = vunpack.c.h.b16 %v3177
        %v3280 = vunpack.c.l.b16 %v3178
        %v3281 = vunpack.c.h.b16 %v3178
        %v3282 = vunpack.c.l.b16 %v3179
        %v3283 = vunpack.c.h.b16 %v3179
        %v3284 = vunpack.c.l.b16 %v3180
        %v3285 = vunpack.c.h.b16 %v3180
        %v3286 = vunpack.c.l.b16 %v3181
        %v3287 = vunpack.c.h.b16 %v3181
        %v3288 = vunpack.c.l.b16 %v3182
        %v3289 = vunpack.c.h.b16 %v3182
        %v3290 = vunpack.c.l.b16 %v3183
        %v3291 = vunpack.c.h.b16 %v3183
        %v3292 = vunpack.c.l.b16 %v3184
        %v3293 = vunpack.c.h.b16 %v3184
        %v3294 = vpack.c.b16 %v3232, %v3230
        %v3295 = vpack.c.b16 %v3233, %v3231
        %v3296 = vpack.c.b16 %v3236, %v3234
        %v3297 = vpack.c.b16 %v3237, %v3235
        %v3298 = vpack.c.b16 %v3240, %v3238
        %v3299 = vpack.c.b16 %v3241, %v3239
        %v3300 = vpack.c.b16 %v3244, %v3242
        %v3301 = vpack.c.b16 %v3245, %v3243
        %v3302 = vpack.c.b16 %v3248, %v3246
        %v3303 = vpack.c.b16 %v3249, %v3247
        %v3304 = vpack.c.b16 %v3252, %v3250
        %v3305 = vpack.c.b16 %v3253, %v3251
        %v3306 = vpack.c.b16 %v3256, %v3254
        %v3307 = vpack.c.b16 %v3257, %v3255
        %v3308 = vpack.c.b16 %v3260, %v3258
        %v3309 = vpack.c.b16 %v3261, %v3259
        %v3310 = vpack.c.b16 %v3264, %v3262
        %v3311 = vpack.c.b16 %v3265, %v3263
        %v3312 = vpack.c.b16 %v3268, %v3266
        %v3313 = vpack.c.b16 %v3269, %v3267
        %v3314 = vpack.c.b16 %v3272, %v3270
        %v3315 = vpack.c.b16 %v3273, %v3271
        %v3316 = vpack.c.b16 %v3276, %v3274
        %v3317 = vpack.c.b16 %v3277, %v3275
        %v3318 = vpack.c.b16 %v3280, %v3278
        %v3319 = vpack.c.b16 %v3281, %v3279
        %v3320 = vpack.c.b16 %v3284, %v3282
        %v3321 = vpack.c.b16 %v3285, %v3283
        %v3322 = vpack.c.b16 %v3288, %v3286
        %v3323 = vpack.c.b16 %v3289, %v3287
        %v3324 = vpack.c.b16 %v3292, %v3290
        %v3325 = vpack.c.b16 %v3293, %v3291
        %3358 = vmatprep.subr.bf16.mxu0 %v3295
        %3359 = vmatpush1.bf16.msra.mxu0 %v3294
        %3360 = vmatprep.subr.bf16.mxu0 %v3297
        %3361 = vmatpush1.bf16.msra.mxu0 %v3296
        %3362 = vmatprep.subr.bf16.mxu0 %v3299
        %3363 = vmatpush1.bf16.msra.mxu0 %v3298
        %3364 = vmatprep.subr.bf16.mxu0 %v3301
        %3365 = vmatpush1.bf16.msra.mxu0 %v3300
        %3366 = vmatprep.subr.bf16.mxu0 %v3303
        %3367 = vmatpush1.bf16.msra.mxu0 %v3302
        %3368 = vmatprep.subr.bf16.mxu0 %v3305
        %3369 = vmatpush1.bf16.msra.mxu0 %v3304
        %3370 = vmatprep.subr.bf16.mxu0 %v3307
        %3371 = vmatpush1.bf16.msra.mxu0 %v3306
        %3372 = vmatprep.subr.bf16.mxu0 %v3309
        %3373 = vmatpush1.bf16.msra.mxu0 %v3308
        %3374 = vmatprep.subr.bf16.mxu0 %v3311
        %3375 = vmatpush1.bf16.msra.mxu0 %v3310
        %3376 = vmatprep.subr.bf16.mxu0 %v3313
        %3377 = vmatpush1.bf16.msra.mxu0 %v3312
        %3378 = vmatprep.subr.bf16.mxu0 %v3315
        %3379 = vmatpush1.bf16.msra.mxu0 %v3314
        %3380 = vmatprep.subr.bf16.mxu0 %v3317
        %3381 = vmatpush1.bf16.msra.mxu0 %v3316
        %3382 = vmatprep.subr.bf16.mxu0 %v3319
        %3383 = vmatpush1.bf16.msra.mxu0 %v3318
        %3384 = vmatprep.subr.bf16.mxu0 %v3321
        %3385 = vmatpush1.bf16.msra.mxu0 %v3320
        %3386 = vmatprep.subr.bf16.mxu0 %v3323
        %3387 = vmatpush1.bf16.msra.mxu0 %v3322
        %3388 = vmatprep.subr.bf16.mxu0 %v3325
        %3389 = vmatpush1.bf16.msra.mxu0 %v3324
        %3390 = vmatprep.mubr.bf16.mxu0 %v3147
        %3391 = vmatmul.mubr.bf16.gmra.mrb[0].mxu0 %v3146
        %v3392 = vpop.f32.mrb[0].mxu0
        %v3393 = vadd.f32 %v3191, %v3392
        %v3394 = vpop.f32.mrb[0].mxu0
        %v3395 = vadd.f32 %v3195, %v3394
        %v3396 = vpop.f32.mrb[0].mxu0
        %v3397 = vadd.f32 %v3191, %v3396
        %v3398 = vpop.f32.mrb[0].mxu0
        %v3399 = vadd.f32 %v3195, %v3398
        %3400 = vmatprep.mubr.bf16.mxu0 %v3149
        %3401 = vmatmul.mubr.bf16.gmra.mrb[0].mxu0 %v3148
        %v3402 = vpop.f32.mrb[0].mxu0
        %v3403 = vadd.f32 %v3191, %v3402
        %v3404 = vpop.f32.mrb[0].mxu0
        %v3405 = vadd.f32 %v3195, %v3404
        %v3406 = vpop.f32.mrb[0].mxu0
        %v3407 = vadd.f32 %v3191, %v3406
        %v3408 = vpop.f32.mrb[0].mxu0
        %v3409 = vadd.f32 %v3195, %v3408
        %3410 = vmatprep.mubr.bf16.mxu0 %v3151
        %3411 = vmatmul.mubr.bf16.gmra.mrb[0].mxu0 %v3150
        %v3412 = vpop.f32.mrb[0].mxu0
        %v3413 = vadd.f32 %v3191, %v3412
        %v3414 = vpop.f32.mrb[0].mxu0
        %v3415 = vadd.f32 %v3195, %v3414
        %v3416 = vpop.f32.mrb[0].mxu0
        %v3417 = vpop.f32.mrb[0].mxu0
        %3418 = vdwg.mxu0
        %v3419 = vmax.f32 %v3393, 0.0
        %v3420 = vmax.f32 %v3395, 0.0
        %v3421 = vmax.f32 %v3397, 0.0
        %v3422 = vmax.f32 %v3399, 0.0
        %v3423 = vmax.f32 %v3403, 0.0
        %v3424 = vmax.f32 %v3405, 0.0
        %v3425 = vmax.f32 %v3407, 0.0
        %v3426 = vmax.f32 %v3409, 0.0
        %v3427 = vmax.f32 %v3413, 0.0
        %v3428 = vmax.f32 %v3415, 0.0
        %v3429 = vpack.c.bf16 %v3421, %v3419
        %v3430 = vpack.c.bf16 %v3422, %v3420
        %v3431 = vpack.c.bf16 %v3425, %v3423
        %v3432 = vpack.c.bf16 %v3426, %v3424
        %v3433 = vpack.c.bf16 %v3427, %v3427
        %v3434 = vpack.c.bf16 %v3428, %v3428
        %s3435 = scalar_lea.vmem [#allocation10], 768
        %v3436 = vld [vmem:[%s3435] sm:$0xff]
        %v3437 = vld [vmem:[%s3435 + $0x8] sm:$0xff]
        %v3438 = vld [vmem:[%s3435 + $0x10] sm:$0xff]
        %v3439 = vld [vmem:[%s3435 + $0x18] sm:$0xff]
        %v3440 = vld [vmem:[%s3435 + $0x20] sm:$0xff]
        %v3441 = vld [vmem:[%s3435 + $0x28] sm:$0xff]
        %v3442 = vld [vmem:[%s3435 + $0x30] sm:$0xff]
        %v3443 = vld [vmem:[%s3435 + $0x38] sm:$0xff]
        %v3444 = vld [vmem:[%s3435 + $0x40] sm:$0xff]
        %v3445 = vld [vmem:[%s3435 + $0x48] sm:$0xff]
        %v3446 = vld [vmem:[%s3435 + $0x50] sm:$0xff]
        %v3447 = vld [vmem:[%s3435 + $0x58] sm:$0xff]
        %v3448 = vld [vmem:[%s3435 + $0x60] sm:$0xff]
        %v3449 = vld [vmem:[%s3435 + $0x68] sm:$0xff]
        %v3450 = vld [vmem:[%s3435 + $0x70] sm:$0xff]
        %v3451 = vld [vmem:[%s3435 + $0x78] sm:$0xff]
        %v3452 = vld [vmem:[%s3435 + $0x80] sm:$0xff]
        %v3453 = vld [vmem:[%s3435 + $0x88] sm:$0xff]
        %v3454 = vld [vmem:[%s3435 + $0x90] sm:$0xff]
        %v3455 = vld [vmem:[%s3435 + $0x98] sm:$0xff]
        %v3456 = vld [vmem:[%s3435 + $0xa0] sm:$0xff]
        %v3457 = vld [vmem:[%s3435 + $0xa8] sm:$0xff]
        %v3458 = vld [vmem:[%s3435 + $0xb0] sm:$0xff]
        %v3459 = vld [vmem:[%s3435 + $0xb8] sm:$0xff]
        %v3460 = vld [vmem:[%s3435 + $0xc0] sm:$0xff]
        %v3461 = vld [vmem:[%s3435 + $0xc8] sm:$0xff]
        %v3462 = vld [vmem:[%s3435 + $0xd0] sm:$0xff]
        %v3463 = vld [vmem:[%s3435 + $0xd8] sm:$0xff]
        %v3464 = vld [vmem:[%s3435 + $0xe0] sm:$0xff]
        %v3465 = vld [vmem:[%s3435 + $0xe8] sm:$0xff]
        %v3466 = vld [vmem:[%s3435 + $0xf0] sm:$0xff]
        %v3467 = vld [vmem:[%s3435 + $0xf8] sm:$0xff]
        %s3468 = scalar_lea.vmem %s7, 6
        %v3469 = vld [vmem:[%s3468] sm:$0x3]
        %v3471 = vlaneseq
        %v3472 = vshrl.u32 %v3471, 7
        %v3473 = vsub.s32 0, %v3472
        %v3474 = vrot.slane %v3469, %v3473
        %v3475 = vlaneseq
        %v3476 = vshrl.u32 %v3475, 7
        %v3477 = vsub.s32 1, %v3476
        %v3478 = vrot.slane %v3469, %v3477
        %v3513 = vunpack.c.l.b16 %v3436
        %v3514 = vunpack.c.h.b16 %v3436
        %v3515 = vunpack.c.l.b16 %v3437
        %v3516 = vunpack.c.h.b16 %v3437
        %v3517 = vunpack.c.l.b16 %v3438
        %v3518 = vunpack.c.h.b16 %v3438
        %v3519 = vunpack.c.l.b16 %v3439
        %v3520 = vunpack.c.h.b16 %v3439
        %v3521 = vunpack.c.l.b16 %v3440
        %v3522 = vunpack.c.h.b16 %v3440
        %v3523 = vunpack.c.l.b16 %v3441
        %v3524 = vunpack.c.h.b16 %v3441
        %v3525 = vunpack.c.l.b16 %v3442
        %v3526 = vunpack.c.h.b16 %v3442
        %v3527 = vunpack.c.l.b16 %v3443
        %v3528 = vunpack.c.h.b16 %v3443
        %v3529 = vunpack.c.l.b16 %v3444
        %v3530 = vunpack.c.h.b16 %v3444
        %v3531 = vunpack.c.l.b16 %v3445
        %v3532 = vunpack.c.h.b16 %v3445
        %v3533 = vunpack.c.l.b16 %v3446
        %v3534 = vunpack.c.h.b16 %v3446
        %v3535 = vunpack.c.l.b16 %v3447
        %v3536 = vunpack.c.h.b16 %v3447
        %v3537 = vunpack.c.l.b16 %v3448
        %v3538 = vunpack.c.h.b16 %v3448
        %v3539 = vunpack.c.l.b16 %v3449
        %v3540 = vunpack.c.h.b16 %v3449
        %v3541 = vunpack.c.l.b16 %v3450
        %v3542 = vunpack.c.h.b16 %v3450
        %v3543 = vunpack.c.l.b16 %v3451
        %v3544 = vunpack.c.h.b16 %v3451
        %v3545 = vunpack.c.l.b16 %v3452
        %v3546 = vunpack.c.h.b16 %v3452
        %v3547 = vunpack.c.l.b16 %v3453
        %v3548 = vunpack.c.h.b16 %v3453
        %v3549 = vunpack.c.l.b16 %v3454
        %v3550 = vunpack.c.h.b16 %v3454
        %v3551 = vunpack.c.l.b16 %v3455
        %v3552 = vunpack.c.h.b16 %v3455
        %v3553 = vunpack.c.l.b16 %v3456
        %v3554 = vunpack.c.h.b16 %v3456
        %v3555 = vunpack.c.l.b16 %v3457
        %v3556 = vunpack.c.h.b16 %v3457
        %v3557 = vunpack.c.l.b16 %v3458
        %v3558 = vunpack.c.h.b16 %v3458
        %v3559 = vunpack.c.l.b16 %v3459
        %v3560 = vunpack.c.h.b16 %v3459
        %v3561 = vunpack.c.l.b16 %v3460
        %v3562 = vunpack.c.h.b16 %v3460
        %v3563 = vunpack.c.l.b16 %v3461
        %v3564 = vunpack.c.h.b16 %v3461
        %v3565 = vunpack.c.l.b16 %v3462
        %v3566 = vunpack.c.h.b16 %v3462
        %v3567 = vunpack.c.l.b16 %v3463
        %v3568 = vunpack.c.h.b16 %v3463
        %v3569 = vunpack.c.l.b16 %v3464
        %v3570 = vunpack.c.h.b16 %v3464
        %v3571 = vunpack.c.l.b16 %v3465
        %v3572 = vunpack.c.h.b16 %v3465
        %v3573 = vunpack.c.l.b16 %v3466
        %v3574 = vunpack.c.h.b16 %v3466
        %v3575 = vunpack.c.l.b16 %v3467
        %v3576 = vunpack.c.h.b16 %v3467
        %v3577 = vpack.c.b16 %v3515, %v3513
        %v3578 = vpack.c.b16 %v3516, %v3514
        %v3579 = vpack.c.b16 %v3519, %v3517
        %v3580 = vpack.c.b16 %v3520, %v3518
        %v3581 = vpack.c.b16 %v3523, %v3521
        %v3582 = vpack.c.b16 %v3524, %v3522
        %v3583 = vpack.c.b16 %v3527, %v3525
        %v3584 = vpack.c.b16 %v3528, %v3526
        %v3585 = vpack.c.b16 %v3531, %v3529
        %v3586 = vpack.c.b16 %v3532, %v3530
        %v3587 = vpack.c.b16 %v3535, %v3533
        %v3588 = vpack.c.b16 %v3536, %v3534
        %v3589 = vpack.c.b16 %v3539, %v3537
        %v3590 = vpack.c.b16 %v3540, %v3538
        %v3591 = vpack.c.b16 %v3543, %v3541
        %v3592 = vpack.c.b16 %v3544, %v3542
        %v3593 = vpack.c.b16 %v3547, %v3545
        %v3594 = vpack.c.b16 %v3548, %v3546
        %v3595 = vpack.c.b16 %v3551, %v3549
        %v3596 = vpack.c.b16 %v3552, %v3550
        %v3597 = vpack.c.b16 %v3555, %v3553
        %v3598 = vpack.c.b16 %v3556, %v3554
        %v3599 = vpack.c.b16 %v3559, %v3557
        %v3600 = vpack.c.b16 %v3560, %v3558
        %v3601 = vpack.c.b16 %v3563, %v3561
        %v3602 = vpack.c.b16 %v3564, %v3562
        %v3603 = vpack.c.b16 %v3567, %v3565
        %v3604 = vpack.c.b16 %v3568, %v3566
        %v3605 = vpack.c.b16 %v3571, %v3569
        %v3606 = vpack.c.b16 %v3572, %v3570
        %v3607 = vpack.c.b16 %v3575, %v3573
        %v3608 = vpack.c.b16 %v3576, %v3574
        %3641 = vmatprep.subr.bf16.mxu0 %v3578
        %3642 = vmatpush1.bf16.msra.mxu0 %v3577
        %3643 = vmatprep.subr.bf16.mxu0 %v3580
        %3644 = vmatpush1.bf16.msra.mxu0 %v3579
        %3645 = vmatprep.subr.bf16.mxu0 %v3582
        %3646 = vmatpush1.bf16.msra.mxu0 %v3581
        %3647 = vmatprep.subr.bf16.mxu0 %v3584
        %3648 = vmatpush1.bf16.msra.mxu0 %v3583
        %3649 = vmatprep.subr.bf16.mxu0 %v3586
        %3650 = vmatpush1.bf16.msra.mxu0 %v3585
        %3651 = vmatprep.subr.bf16.mxu0 %v3588
        %3652 = vmatpush1.bf16.msra.mxu0 %v3587
        %3653 = vmatprep.subr.bf16.mxu0 %v3590
        %3654 = vmatpush1.bf16.msra.mxu0 %v3589
        %3655 = vmatprep.subr.bf16.mxu0 %v3592
        %3656 = vmatpush1.bf16.msra.mxu0 %v3591
        %3657 = vmatprep.subr.bf16.mxu0 %v3594
        %3658 = vmatpush1.bf16.msra.mxu0 %v3593
        %3659 = vmatprep.subr.bf16.mxu0 %v3596
        %3660 = vmatpush1.bf16.msra.mxu0 %v3595
        %3661 = vmatprep.subr.bf16.mxu0 %v3598
        %3662 = vmatpush1.bf16.msra.mxu0 %v3597
        %3663 = vmatprep.subr.bf16.mxu0 %v3600
        %3664 = vmatpush1.bf16.msra.mxu0 %v3599
        %3665 = vmatprep.subr.bf16.mxu0 %v3602
        %3666 = vmatpush1.bf16.msra.mxu0 %v3601
        %3667 = vmatprep.subr.bf16.mxu0 %v3604
        %3668 = vmatpush1.bf16.msra.mxu0 %v3603
        %3669 = vmatprep.subr.bf16.mxu0 %v3606
        %3670 = vmatpush1.bf16.msra.mxu0 %v3605
        %3671 = vmatprep.subr.bf16.mxu0 %v3608
        %3672 = vmatpush1.bf16.msra.mxu0 %v3607
        %3673 = vmatprep.mubr.bf16.mxu0 %v3430
        %3674 = vmatmul.mubr.bf16.gmra.mrb[0].mxu0 %v3429
        %v3675 = vpop.f32.mrb[0].mxu0
        %v3676 = vadd.f32 %v3474, %v3675
        %v3677 = vpop.f32.mrb[0].mxu0
        %v3678 = vadd.f32 %v3478, %v3677
        %v3679 = vpop.f32.mrb[0].mxu0
        %v3680 = vadd.f32 %v3474, %v3679
        %v3681 = vpop.f32.mrb[0].mxu0
        %v3682 = vadd.f32 %v3478, %v3681
        %3683 = vmatprep.mubr.bf16.mxu0 %v3432
        %3684 = vmatmul.mubr.bf16.gmra.mrb[0].mxu0 %v3431
        %v3685 = vpop.f32.mrb[0].mxu0
        %v3686 = vadd.f32 %v3474, %v3685
        %v3687 = vpop.f32.mrb[0].mxu0
        %v3688 = vadd.f32 %v3478, %v3687
        %v3689 = vpop.f32.mrb[0].mxu0
        %v3690 = vadd.f32 %v3474, %v3689
        %v3691 = vpop.f32.mrb[0].mxu0
        %v3692 = vadd.f32 %v3478, %v3691
        %3693 = vmatprep.mubr.bf16.mxu0 %v3434
        %3694 = vmatmul.mubr.bf16.gmra.mrb[0].mxu0 %v3433
        %v3695 = vpop.f32.mrb[0].mxu0
        %v3696 = vadd.f32 %v3474, %v3695
        %v3697 = vpop.f32.mrb[0].mxu0
        %v3698 = vadd.f32 %v3478, %v3697
        %v3699 = vpop.f32.mrb[0].mxu0
        %v3700 = vpop.f32.mrb[0].mxu0
        %3701 = vdwg.mxu0
        %v3702 = vmax.f32 %v3676, 0.0
        %v3703 = vmax.f32 %v3678, 0.0
        %v3704 = vmax.f32 %v3680, 0.0
        %v3705 = vmax.f32 %v3682, 0.0
        %v3706 = vmax.f32 %v3686, 0.0
        %v3707 = vmax.f32 %v3688, 0.0
        %v3708 = vmax.f32 %v3690, 0.0
        %v3709 = vmax.f32 %v3692, 0.0
        %v3710 = vmax.f32 %v3696, 0.0
        %v3711 = vmax.f32 %v3698, 0.0
        %v3712 = vpack.c.bf16 %v3704, %v3702
        %v3713 = vpack.c.bf16 %v3705, %v3703
        %v3714 = vpack.c.bf16 %v3708, %v3706
        %v3715 = vpack.c.bf16 %v3709, %v3707
        %v3716 = vpack.c.bf16 %v3710, %v3710
        %v3717 = vpack.c.bf16 %v3711, %v3711
        %s3718 = scalar_lea.vmem [#allocation10], 1024
        %v3719 = vld [vmem:[%s3718] sm:$0xff]
        %v3720 = vld [vmem:[%s3718 + $0x8] sm:$0xff]
        %v3721 = vld [vmem:[%s3718 + $0x10] sm:$0xff]
        %v3722 = vld [vmem:[%s3718 + $0x18] sm:$0xff]
        %v3723 = vld [vmem:[%s3718 + $0x20] sm:$0xff]
        %v3724 = vld [vmem:[%s3718 + $0x28] sm:$0xff]
        %v3725 = vld [vmem:[%s3718 + $0x30] sm:$0xff]
        %v3726 = vld [vmem:[%s3718 + $0x38] sm:$0xff]
        %v3727 = vld [vmem:[%s3718 + $0x40] sm:$0xff]
        %v3728 = vld [vmem:[%s3718 + $0x48] sm:$0xff]
        %v3729 = vld [vmem:[%s3718 + $0x50] sm:$0xff]
        %v3730 = vld [vmem:[%s3718 + $0x58] sm:$0xff]
        %v3731 = vld [vmem:[%s3718 + $0x60] sm:$0xff]
        %v3732 = vld [vmem:[%s3718 + $0x68] sm:$0xff]
        %v3733 = vld [vmem:[%s3718 + $0x70] sm:$0xff]
        %v3734 = vld [vmem:[%s3718 + $0x78] sm:$0xff]
        %v3735 = vld [vmem:[%s3718 + $0x80] sm:$0xff]
        %v3736 = vld [vmem:[%s3718 + $0x88] sm:$0xff]
        %v3737 = vld [vmem:[%s3718 + $0x90] sm:$0xff]
        %v3738 = vld [vmem:[%s3718 + $0x98] sm:$0xff]
        %v3739 = vld [vmem:[%s3718 + $0xa0] sm:$0xff]
        %v3740 = vld [vmem:[%s3718 + $0xa8] sm:$0xff]
        %v3741 = vld [vmem:[%s3718 + $0xb0] sm:$0xff]
        %v3742 = vld [vmem:[%s3718 + $0xb8] sm:$0xff]
        %v3743 = vld [vmem:[%s3718 + $0xc0] sm:$0xff]
        %v3744 = vld [vmem:[%s3718 + $0xc8] sm:$0xff]
        %v3745 = vld [vmem:[%s3718 + $0xd0] sm:$0xff]
        %v3746 = vld [vmem:[%s3718 + $0xd8] sm:$0xff]
        %v3747 = vld [vmem:[%s3718 + $0xe0] sm:$0xff]
        %v3748 = vld [vmem:[%s3718 + $0xe8] sm:$0xff]
        %v3749 = vld [vmem:[%s3718 + $0xf0] sm:$0xff]
        %v3750 = vld [vmem:[%s3718 + $0xf8] sm:$0xff]
        %s3751 = scalar_lea.vmem %s7, 8
        %v3752 = vld [vmem:[%s3751] sm:$0x3]
        %v3754 = vlaneseq
        %v3755 = vshrl.u32 %v3754, 7
        %v3756 = vsub.s32 0, %v3755
        %v3757 = vrot.slane %v3752, %v3756
        %v3758 = vlaneseq
        %v3759 = vshrl.u32 %v3758, 7
        %v3760 = vsub.s32 1, %v3759
        %v3761 = vrot.slane %v3752, %v3760
        %v3796 = vunpack.c.l.b16 %v3719
        %v3797 = vunpack.c.h.b16 %v3719
        %v3798 = vunpack.c.l.b16 %v3720
        %v3799 = vunpack.c.h.b16 %v3720
        %v3800 = vunpack.c.l.b16 %v3721
        %v3801 = vunpack.c.h.b16 %v3721
        %v3802 = vunpack.c.l.b16 %v3722
        %v3803 = vunpack.c.h.b16 %v3722
        %v3804 = vunpack.c.l.b16 %v3723
        %v3805 = vunpack.c.h.b16 %v3723
        %v3806 = vunpack.c.l.b16 %v3724
        %v3807 = vunpack.c.h.b16 %v3724
        %v3808 = vunpack.c.l.b16 %v3725
        %v3809 = vunpack.c.h.b16 %v3725
        %v3810 = vunpack.c.l.b16 %v3726
        %v3811 = vunpack.c.h.b16 %v3726
        %v3812 = vunpack.c.l.b16 %v3727
        %v3813 = vunpack.c.h.b16 %v3727
        %v3814 = vunpack.c.l.b16 %v3728
        %v3815 = vunpack.c.h.b16 %v3728
        %v3816 = vunpack.c.l.b16 %v3729
        %v3817 = vunpack.c.h.b16 %v3729
        %v3818 = vunpack.c.l.b16 %v3730
        %v3819 = vunpack.c.h.b16 %v3730
        %v3820 = vunpack.c.l.b16 %v3731
        %v3821 = vunpack.c.h.b16 %v3731
        %v3822 = vunpack.c.l.b16 %v3732
        %v3823 = vunpack.c.h.b16 %v3732
        %v3824 = vunpack.c.l.b16 %v3733
        %v3825 = vunpack.c.h.b16 %v3733
        %v3826 = vunpack.c.l.b16 %v3734
        %v3827 = vunpack.c.h.b16 %v3734
        %v3828 = vunpack.c.l.b16 %v3735
        %v3829 = vunpack.c.h.b16 %v3735
        %v3830 = vunpack.c.l.b16 %v3736
        %v3831 = vunpack.c.h.b16 %v3736
        %v3832 = vunpack.c.l.b16 %v3737
        %v3833 = vunpack.c.h.b16 %v3737
        %v3834 = vunpack.c.l.b16 %v3738
        %v3835 = vunpack.c.h.b16 %v3738
        %v3836 = vunpack.c.l.b16 %v3739
        %v3837 = vunpack.c.h.b16 %v3739
        %v3838 = vunpack.c.l.b16 %v3740
        %v3839 = vunpack.c.h.b16 %v3740
        %v3840 = vunpack.c.l.b16 %v3741
        %v3841 = vunpack.c.h.b16 %v3741
        %v3842 = vunpack.c.l.b16 %v3742
        %v3843 = vunpack.c.h.b16 %v3742
        %v3844 = vunpack.c.l.b16 %v3743
        %v3845 = vunpack.c.h.b16 %v3743
        %v3846 = vunpack.c.l.b16 %v3744
        %v3847 = vunpack.c.h.b16 %v3744
        %v3848 = vunpack.c.l.b16 %v3745
        %v3849 = vunpack.c.h.b16 %v3745
        %v3850 = vunpack.c.l.b16 %v3746
        %v3851 = vunpack.c.h.b16 %v3746
        %v3852 = vunpack.c.l.b16 %v3747
        %v3853 = vunpack.c.h.b16 %v3747
        %v3854 = vunpack.c.l.b16 %v3748
        %v3855 = vunpack.c.h.b16 %v3748
        %v3856 = vunpack.c.l.b16 %v3749
        %v3857 = vunpack.c.h.b16 %v3749
        %v3858 = vunpack.c.l.b16 %v3750
        %v3859 = vunpack.c.h.b16 %v3750
        %v3860 = vpack.c.b16 %v3798, %v3796
        %v3861 = vpack.c.b16 %v3799, %v3797
        %v3862 = vpack.c.b16 %v3802, %v3800
        %v3863 = vpack.c.b16 %v3803, %v3801
        %v3864 = vpack.c.b16 %v3806, %v3804
        %v3865 = vpack.c.b16 %v3807, %v3805
        %v3866 = vpack.c.b16 %v3810, %v3808
        %v3867 = vpack.c.b16 %v3811, %v3809
        %v3868 = vpack.c.b16 %v3814, %v3812
        %v3869 = vpack.c.b16 %v3815, %v3813
        %v3870 = vpack.c.b16 %v3818, %v3816
        %v3871 = vpack.c.b16 %v3819, %v3817
        %v3872 = vpack.c.b16 %v3822, %v3820
        %v3873 = vpack.c.b16 %v3823, %v3821
        %v3874 = vpack.c.b16 %v3826, %v3824
        %v3875 = vpack.c.b16 %v3827, %v3825
        %v3876 = vpack.c.b16 %v3830, %v3828
        %v3877 = vpack.c.b16 %v3831, %v3829
        %v3878 = vpack.c.b16 %v3834, %v3832
        %v3879 = vpack.c.b16 %v3835, %v3833
        %v3880 = vpack.c.b16 %v3838, %v3836
        %v3881 = vpack.c.b16 %v3839, %v3837
        %v3882 = vpack.c.b16 %v3842, %v3840
        %v3883 = vpack.c.b16 %v3843, %v3841
        %v3884 = vpack.c.b16 %v3846, %v3844
        %v3885 = vpack.c.b16 %v3847, %v3845
        %v3886 = vpack.c.b16 %v3850, %v3848
        %v3887 = vpack.c.b16 %v3851, %v3849
        %v3888 = vpack.c.b16 %v3854, %v3852
        %v3889 = vpack.c.b16 %v3855, %v3853
        %v3890 = vpack.c.b16 %v3858, %v3856
        %v3891 = vpack.c.b16 %v3859, %v3857
        %3924 = vmatprep.subr.bf16.mxu0 %v3861
        %3925 = vmatpush1.bf16.msra.mxu0 %v3860
        %3926 = vmatprep.subr.bf16.mxu0 %v3863
        %3927 = vmatpush1.bf16.msra.mxu0 %v3862
        %3928 = vmatprep.subr.bf16.mxu0 %v3865
        %3929 = vmatpush1.bf16.msra.mxu0 %v3864
        %3930 = vmatprep.subr.bf16.mxu0 %v3867
        %3931 = vmatpush1.bf16.msra.mxu0 %v3866
        %3932 = vmatprep.subr.bf16.mxu0 %v3869
        %3933 = vmatpush1.bf16.msra.mxu0 %v3868
        %3934 = vmatprep.subr.bf16.mxu0 %v3871
        %3935 = vmatpush1.bf16.msra.mxu0 %v3870
        %3936 = vmatprep.subr.bf16.mxu0 %v3873
        %3937 = vmatpush1.bf16.msra.mxu0 %v3872
        %3938 = vmatprep.subr.bf16.mxu0 %v3875
        %3939 = vmatpush1.bf16.msra.mxu0 %v3874
        %3940 = vmatprep.subr.bf16.mxu0 %v3877
        %3941 = vmatpush1.bf16.msra.mxu0 %v3876
        %3942 = vmatprep.subr.bf16.mxu0 %v3879
        %3943 = vmatpush1.bf16.msra.mxu0 %v3878
        %3944 = vmatprep.subr.bf16.mxu0 %v3881
        %3945 = vmatpush1.bf16.msra.mxu0 %v3880
        %3946 = vmatprep.subr.bf16.mxu0 %v3883
        %3947 = vmatpush1.bf16.msra.mxu0 %v3882
        %3948 = vmatprep.subr.bf16.mxu0 %v3885
        %3949 = vmatpush1.bf16.msra.mxu0 %v3884
        %3950 = vmatprep.subr.bf16.mxu0 %v3887
        %3951 = vmatpush1.bf16.msra.mxu0 %v3886
        %3952 = vmatprep.subr.bf16.mxu0 %v3889
        %3953 = vmatpush1.bf16.msra.mxu0 %v3888
        %3954 = vmatprep.subr.bf16.mxu0 %v3891
        %3955 = vmatpush1.bf16.msra.mxu0 %v3890
        %3956 = vmatprep.mubr.bf16.mxu0 %v3713
        %3957 = vmatmul.mubr.bf16.gmra.mrb[0].mxu0 %v3712
        %v3958 = vpop.f32.mrb[0].mxu0
        %v3959 = vadd.f32 %v3757, %v3958
        %v3960 = vpop.f32.mrb[0].mxu0
        %v3961 = vadd.f32 %v3761, %v3960
        %v3962 = vpop.f32.mrb[0].mxu0
        %v3963 = vadd.f32 %v3757, %v3962
        %v3964 = vpop.f32.mrb[0].mxu0
        %v3965 = vadd.f32 %v3761, %v3964
        %3966 = vmatprep.mubr.bf16.mxu0 %v3715
        %3967 = vmatmul.mubr.bf16.gmra.mrb[0].mxu0 %v3714
        %v3968 = vpop.f32.mrb[0].mxu0
        %v3969 = vadd.f32 %v3757, %v3968
        %v3970 = vpop.f32.mrb[0].mxu0
        %v3971 = vadd.f32 %v3761, %v3970
        %v3972 = vpop.f32.mrb[0].mxu0
        %v3973 = vadd.f32 %v3757, %v3972
        %v3974 = vpop.f32.mrb[0].mxu0
        %v3975 = vadd.f32 %v3761, %v3974
        %3976 = vmatprep.mubr.bf16.mxu0 %v3717
        %3977 = vmatmul.mubr.bf16.gmra.mrb[0].mxu0 %v3716
        %v3978 = vpop.f32.mrb[0].mxu0
        %v3979 = vadd.f32 %v3757, %v3978
        %v3980 = vpop.f32.mrb[0].mxu0
        %v3981 = vadd.f32 %v3761, %v3980
        %v3982 = vpop.f32.mrb[0].mxu0
        %v3983 = vpop.f32.mrb[0].mxu0
        %3984 = vdwg.mxu0
        %3985 = vst [vmem:[%s420] sm:$0xff] %v3959
        %3986 = vst [vmem:[%s420 + $0x8] sm:$0xff] %v3961
        %3987 = vst [vmem:[%s420 + $0x10] sm:$0xff] %v3963
        %3988 = vst [vmem:[%s420 + $0x18] sm:$0xff] %v3965
        %3989 = vst [vmem:[%s420 + $0x20] sm:$0xff] %v3969
        %3990 = vst [vmem:[%s420 + $0x28] sm:$0xff] %v3971
        %3991 = vst [vmem:[%s420 + $0x30] sm:$0xff] %v3973
        %3992 = vst [vmem:[%s420 + $0x38] sm:$0xff] %v3975
        %3993 = vst [vmem:[%s420 + $0x40] sm:$0xf] %v3979
        %3994 = vst [vmem:[%s420 + $0x48] sm:$0xf] %v3981
        %p3995 = scmp.lt.s32.totalorder %s27, 1
        %s3996 = scalar_select %p3995, %s27, 1
        %s3997 = smul.addr %s3996, 10
        %s3998 = smul.addr %s3997, 8
        %s3999 = scalar_lea.vmem %s8, %s3998
        // Predicated region
        $region84: #{tpu_custom_call.1} parent=51 // pred_check
          %p4000 = pneg %p223
        $region85: #{tpu_custom_call.1} parent=51 // pred_check_branch
          %4002 = sbr.rel (%p4000) target = $region87
        $region86: #{tpu_custom_call.1} parent=51 // pred_region
          _
        $region87: #{tpu_custom_call.1} parent=51 // pred_fallthru
          _
      $region52: #{tpu_custom_call.1} parent=5 // pred_fallthru
        _
      %p4003 = scmp.le.s32.totalorder 2, %s22
      // Predicated region
      $region88: #{tpu_custom_call.1} parent=5 // pred_check
        %p4004 = pneg %p4003
      $region89: #{tpu_custom_call.1} parent=5 // pred_check_branch
        %4006 = sbr.rel (%p4004) target = $region91
      $region90: #{tpu_custom_call.1} parent=5 // pred_region
        %s4007 = ssub.s32 %s22, 2
        // Predicated region
        $region92: #{tpu_custom_call.1} parent=90 // pred_check
          %p4008 = pneg %p229
        $region93: #{tpu_custom_call.1} parent=90 // pred_check_branch
          %4010 = sbr.rel (%p4008) target = $region95
        $region94: #{tpu_custom_call.1} parent=90 // pred_region
          %p4011 = scmp.lt.s32.totalorder %s28, 1
          %s4012 = scalar_select %p4011, %s28, 1
          %s4013 = smul.addr %s4012, 10
          %s4014 = smul.addr %s4013, 8
          %s4015 = scalar_lea.vmem %s8, %s4014
        $region95: #{tpu_custom_call.1} parent=90 // pred_fallthru
          _
      $region91: #{tpu_custom_call.1} parent=5 // pred_fallthru
        _
    $region6: #{tpu_custom_call.1} parent=1 // loop_footer
      %s26 = sadd.s32 1, %s22
    $region7: #{tpu_custom_call.1} parent=1 // loop_footer_branch
      %21 = sbr.rel target = $region3
    $region8: #{tpu_custom_call.1} parent=1 // loop_exit
      _
    %4016 = vsyncpa [#allocation3], 1
    %s4017 = scalar_lea.sflag [#allocation3], 1
    %4018 = vsyncpa %s4017, 1
    %4019 = vsyncpa [#allocation5], 1
    %s4020 = scalar_lea.sflag [#allocation5], 1
    %4021 = vsyncpa %s4020, 1
    %4022 = vsyncpa [#allocation8], 1
    %4023 = vsyncpa [#allocation11], 1

</llo_original>
